<compile_context>
chip_gen: v7x
topology: tpu7x:2x2x1
jax: 0.10.0
libtpu: 0.0.40
codegen_flags: <defaults>
</compile_context>

<pallas_src>
import functools

import jax
import jax.numpy as jnp
from jax import lax
from jax.experimental import pallas as pl
from jax.experimental.pallas import tpu as pltpu


HP = 128      # padded GRU hidden size (lane-dense)
CP = 128      # padded classifier output width (lane-dense output stores)
MAX_TB = 128  # max batch tile: fills the 128-row MXU M dimension


# ----------------------------------------------------------------------------
# Fused kernel: GRU over time + attention pooling + linear classifier.
#
# Per batch tile:
#   gi   [TB, T, 3*HP] f32  pre-projected gate inputs (x @ W_ih^T + b_ih),
#                           PyTorch gate order r,z,n at lane offsets 0/HP/2HP
#   seq  [TB, 1]       i32  sequence lengths
#   num  [TB, 1]       f32  numeric datasource (identity branch)
#   whh  [HP, 3*HP]    bf16 W_hh^T ; bhh [1, 3*HP] f32
#   wa   [HP, HP] bf16 ; ba, va [1, HP] f32      (AttentionPool)
#   cwt  [HP, CP] bf16 ; cwn, cb [1, CP] f32     (classifier, split text/num)
#   out  [TB, CP]      f32  logits (real classes occupy the first C lanes)
#   h_all scratch [TB, T, HP] f32 (VMEM) — per-step hidden states
# ----------------------------------------------------------------------------
def fused_ehr_kernel(gi_ref, seq_ref, num_ref,
                     whh_ref, bhh_ref,
                     wa_ref, ba_ref, va_ref,
                     cwt_ref, cwn_ref, cb_ref,
                     out_ref, h_all_ref):
    TBk, T, _ = gi_ref.shape
    Hp = whh_ref.shape[0]

    # Validity mask over timesteps, built once per tile.
    seq = seq_ref[...]                                       # [TB, 1] int32
    t_iota = lax.broadcasted_iota(jnp.int32, (TBk, T), 1)
    valid_all = t_iota < seq                                 # [TB, T] bool

    # --- Serial GRU recurrence.  Only h @ W_hh + gate VPU/EUP math stays on
    # the critical chain; gi and weights are read from VMEM refs per step and
    # each h_t is written to the h_all VMEM scratch for the post-loop pass.
    # TODO(synk): for long sequences add a time-chunk grid axis ("arbitrary")
    #             so gi / h_all stay within VMEM on v7x (64 MiB).
    h = jnp.zeros((TBk, Hp), jnp.float32)
    for t in range(T):
        gi_t = gi_ref[:, t, :]                               # [TB, 3HP] f32
        gh = jnp.dot(h.astype(jnp.bfloat16), whh_ref[...],
                     preferred_element_type=jnp.float32) + bhh_ref[...]
        r = jax.nn.sigmoid(gi_t[:, 0:Hp] + gh[:, 0:Hp])
        z = jax.nn.sigmoid(gi_t[:, Hp:2 * Hp] + gh[:, Hp:2 * Hp])
        n = jnp.tanh(gi_t[:, 2 * Hp:3 * Hp] + r * gh[:, 2 * Hp:3 * Hp])
        h_new = (1.0 - z) * n + z * h
        valid = valid_all[:, t:t + 1]                        # [TB, 1] bool
        h = jnp.where(valid, h_new, h)                       # freeze past seq_len
        h_all_ref[:, t, :] = h

    # --- Attention pooling, vectorized over all T timesteps at once:
    # one well-shaped [TB*T, HP] x [HP, HP] MXU matmul + masked softmax.
    h_all = h_all_ref[...]                                   # [TB, T, HP] f32
    u = jnp.tanh(
        jnp.dot(h_all.reshape(TBk * T, Hp).astype(jnp.bfloat16), wa_ref[...],
                preferred_element_type=jnp.float32) + ba_ref[...])
    u = u.reshape(TBk, T, Hp)
    e = jnp.sum(u * va_ref[...].reshape(1, 1, Hp), axis=-1)  # [TB, T]
    e = jnp.where(valid_all, e, -jnp.inf)
    m = jnp.max(e, axis=-1, keepdims=True)                   # [TB, 1]
    m_safe = jnp.where(m > -jnp.inf, m, 0.0)                 # guard seq_len == 0
    p = jnp.where(valid_all, jnp.exp(e - m_safe), 0.0)       # [TB, T]
    l = jnp.sum(p, axis=-1, keepdims=True)                   # [TB, 1]
    inv_l = 1.0 / jnp.where(l > 0.0, l, 1.0)                 # exact (parity)
    pooled = jnp.sum(p[:, :, None] * h_all, axis=1) * inv_l  # [TB, HP]

    # --- Fused ExplainableNet classifier: concat([pooled, numeric]) @ W + b
    # rewritten as pooled @ W_text + numeric * w_num + b (no concat needed).
    logits = (jnp.dot(pooled.astype(jnp.bfloat16), cwt_ref[...],
                      preferred_element_type=jnp.float32)
              + num_ref[...] * cwn_ref[...]
              + cb_ref[...])
    out_ref[...] = logits.astype(out_ref.dtype)


# ----------------------------------------------------------------------------
# Forward pass (glue + single fused kernel)
# ----------------------------------------------------------------------------
def _round_up(x, m):
    return ((x + m - 1) // m) * m


def _choose_batch_tile(batch):
    """Up to 128 rows (MXU-filling), but keep >= 2 grid steps when batch allows
    so v7x's two TensorCores both get work under dimension_semantics=parallel."""
    half = -(-batch // 2)
    return max(8, min(MAX_TB, _round_up(half, 8)))


def ehr_admissions_forward(tokens, numeric, seq_lens, params, num_events):
    """tokens [B,T] i32, numeric [B,1] f32, seq_lens [B] i32 -> [B, num_events]."""
    B, T = tokens.shape

    # EmbeddingLayers + GRU input projection folded together on the wrapper
    # side: gi_table[v] = embedding[v] @ W_ih^T + b_ih (one-time XLA matmul),
    # then a row gather yields the pre-projected gate inputs.
    # TODO(synk): for very large vocab, gather gi rows inside the kernel via
    #             scalar-prefetched token ids + DMA instead of materializing
    #             the full [B, T, 3*HP] activation in HBM.
    gi_table = (jnp.dot(params["embedding"], params["wih"],
                        preferred_element_type=jnp.float32)
                + params["bih"])                              # [vocab, 3*HP]
    gi = jnp.take(gi_table, tokens, axis=0)                   # [B, T, 3*HP]

    # Pad batch to a sublane-aligned tile (padded rows have seq_len = 0).
    tb = _choose_batch_tile(B)
    B_pad = _round_up(B, tb)
    pad = B_pad - B
    gi = jnp.pad(gi, ((0, pad), (0, 0), (0, 0)))
    seq = jnp.pad(seq_lens.astype(jnp.int32), (0, pad)).reshape(B_pad, 1)
    num = jnp.pad(numeric.astype(jnp.float32), ((0, pad), (0, 0)))

    full = lambda b: (0, 0)
    out = pl.pallas_call(
        fused_ehr_kernel,
        out_shape=jax.ShapeDtypeStruct((B_pad, CP), jnp.float32),
        grid=(B_pad // tb,),
        in_specs=[
            pl.BlockSpec((tb, T, 3 * HP), lambda b: (b, 0, 0)),  # gi (batch tile)
            pl.BlockSpec((tb, 1), lambda b: (b, 0)),             # seq_lens
            pl.BlockSpec((tb, 1), lambda b: (b, 0)),             # numeric
            pl.BlockSpec((HP, 3 * HP), full),                    # W_hh^T (bf16)
            pl.BlockSpec((1, 3 * HP), full),                     # b_hh
            pl.BlockSpec((HP, HP), full),                        # attention W (bf16)
            pl.BlockSpec((1, HP), full),                         # attention b
            pl.BlockSpec((1, HP), full),                         # attention v
            pl.BlockSpec((HP, CP), full),                        # cls W text (bf16)
            pl.BlockSpec((1, CP), full),                         # cls W numeric
            pl.BlockSpec((1, CP), full),                         # cls b
        ],
        out_specs=pl.BlockSpec((tb, CP), lambda b: (b, 0)),
        scratch_shapes=[pltpu.VMEM((tb, T, HP), jnp.float32)],   # h_all
        compiler_params=pltpu.CompilerParams(
            dimension_semantics=("parallel",)),
    )(gi, seq, num,
      params["whh"], params["bhh"],
      params["wa"], params["ba"], params["va"],
      params["cls_wt"], params["cls_wn"], params["cls_b"])

    return out[:B, :num_events]


# ----------------------------------------------------------------------------
# Parameter construction (zero-padding to lane-dense shapes is math-inert).
# ----------------------------------------------------------------------------
def _pad_gates(w, H, Hp):
    """[R, 3H] gate-stacked weight -> [R, 3Hp], gate blocks at 0 / Hp / 2Hp."""
    out = jnp.zeros((w.shape[0], 3 * Hp), w.dtype)
    for g in range(3):
        out = out.at[:, g * Hp:g * Hp + H].set(w[:, g * H:(g + 1) * H])
    return out


def _pad2d(w, shape):
    out = jnp.zeros(shape, w.dtype)
    return out.at[:w.shape[0], :w.shape[1]].set(w)


def init_params(key, vocab, E, H, C):
    ks = jax.random.split(key, 10)
    s = 0.1
    nrm = lambda k, shp: s * jax.random.normal(k, shp, jnp.float32)

    wih = nrm(ks[1], (E, 3 * H))       # PyTorch GRU W_ih^T (gate order r,z,n)
    whh = nrm(ks[2], (H, 3 * H))       # W_hh^T
    bih = nrm(ks[3], (1, 3 * H))
    bhh = nrm(ks[4], (1, 3 * H))
    wa = nrm(ks[5], (H, H))            # AttentionPool W
    ba = nrm(ks[6], (1, H))            # AttentionPool b
    va = nrm(ks[7], (1, H))            # AttentionPool v (as a row)
    cls_w = nrm(ks[8], (H + 1, C))     # ExplainableNet Linear(H+1 -> C)
    cls_b = nrm(ks[9], (1, C))

    return {
        "embedding": nrm(ks[0], (vocab, E)),
        # W_ih / b_ih stay f32: folded into the embedding table on the wrapper
        # side (one-time XLA matmul); they never enter the kernel.
        "wih": _pad_gates(wih, H, HP),
        "bih": _pad_gates(bih, H, HP),
        # lane-dense, zero-padded kernel parameters; MXU operands kept bf16.
        "whh": _pad_gates(_pad2d(whh, (HP, 3 * H)), H, HP).astype(jnp.bfloat16),
        "bhh": _pad_gates(bhh, H, HP),
        "wa": _pad2d(wa, (HP, HP)).astype(jnp.bfloat16),
        "ba": _pad2d(ba, (1, HP)),
        "va": _pad2d(va, (1, HP)),
        "cls_wt": _pad2d(cls_w[:H, :], (HP, CP)).astype(jnp.bfloat16),
        "cls_wn": _pad2d(cls_w[H:, :], (1, CP)),
        "cls_b": _pad2d(cls_b, (1, CP)),
    }


if __name__ == "__main__":
    B, T, E, H, C, VOCAB = 2, 8, 16, 32, 3, 50

    key = jax.random.PRNGKey(0)
    k_tok, k_num, k_par = jax.random.split(key, 3)

    tokens = jax.random.randint(k_tok, (B, T), 0, VOCAB, dtype=jnp.int32)
    numeric = jax.random.normal(k_num, (B, 1), jnp.float32)
    seq_lens = jnp.array([T, 5], dtype=jnp.int32)

    params = init_params(k_par, VOCAB, E, H, C)

    fwd = jax.jit(functools.partial(ehr_admissions_forward, num_events=C))
    out = fwd(tokens, numeric, seq_lens, params)
    out = jax.block_until_ready(out)

    assert out.shape == (B, C) and out.dtype == jnp.float32
    assert bool(jnp.all(jnp.isfinite(out)))
    print("KERNEL_OK")
</pallas_src>

<mosaic_0001>
module attributes {stable_mosaic.version = 11 : i64} {
  func.func @fused_ehr_kernel(%arg0: i32, %arg1: memref<8x8x384xf32, #tpu.memory_space<vmem>>, %arg2: memref<8x1xi32, #tpu.memory_space<vmem>>, %arg3: memref<8x1xf32, #tpu.memory_space<vmem>>, %arg4: memref<128x384xbf16, #tpu.memory_space<vmem>>, %arg5: memref<1x384xf32, #tpu.memory_space<vmem>>, %arg6: memref<128x128xbf16, #tpu.memory_space<vmem>>, %arg7: memref<1x128xf32, #tpu.memory_space<vmem>>, %arg8: memref<1x128xf32, #tpu.memory_space<vmem>>, %arg9: memref<128x128xbf16, #tpu.memory_space<vmem>>, %arg10: memref<1x128xf32, #tpu.memory_space<vmem>>, %arg11: memref<1x128xf32, #tpu.memory_space<vmem>>, %arg12: memref<8x128xf32, #tpu.memory_space<vmem>>, %arg13: memref<8x8x128xf32, #tpu.memory_space<vmem>>) attributes {dimension_semantics = [#tpu.dimension_semantics<parallel>], iteration_bounds = array<i64: 1>, scalar_prefetch = 0 : i64, scratch_operands = 1 : i64, tpu.core_type = #tpu.core_type<tc>, window_params = [{transform_indices = @transform_0, window_bounds = array<i64: 8, 8, 384>}, {transform_indices = @transform_1, window_bounds = array<i64: 8, 1>}, {transform_indices = @transform_2, window_bounds = array<i64: 8, 1>}, {pipeline_mode = #tpu.pipeline_mode<synchronous>, transform_indices = @transform_3, window_bounds = array<i64: 128, 384>}, {pipeline_mode = #tpu.pipeline_mode<synchronous>, transform_indices = @transform_4, window_bounds = array<i64: 1, 384>}, {pipeline_mode = #tpu.pipeline_mode<synchronous>, transform_indices = @transform_5, window_bounds = array<i64: 128, 128>}, {pipeline_mode = #tpu.pipeline_mode<synchronous>, transform_indices = @transform_6, window_bounds = array<i64: 1, 128>}, {pipeline_mode = #tpu.pipeline_mode<synchronous>, transform_indices = @transform_7, window_bounds = array<i64: 1, 128>}, {pipeline_mode = #tpu.pipeline_mode<synchronous>, transform_indices = @transform_8, window_bounds = array<i64: 128, 128>}, {pipeline_mode = #tpu.pipeline_mode<synchronous>, transform_indices = @transform_9, window_bounds = array<i64: 1, 128>}, {pipeline_mode = #tpu.pipeline_mode<synchronous>, transform_indices = @transform_10, window_bounds = array<i64: 1, 128>}, {transform_indices = @transform_11, window_bounds = array<i64: 8, 128>}]} {
    %c0 = arith.constant 0 : index
    %c0_0 = arith.constant 0 : index
    %0 = vector.load %arg2[%c0, %c0_0] : memref<8x1xi32, #tpu.memory_space<vmem>>, vector<8x1xi32>
    %1 = tpu.iota {dimensions = array<i32: 1>} : vector<8x8xi32>
    %2 = vector.broadcast %0 : vector<8x1xi32> to vector<8x8xi32>
    %3 = arith.cmpi slt, %1, %2 : vector<8x8xi32>
    %cst = arith.constant 0.000000e+00 : f32
    %4 = vector.broadcast %cst : f32 to vector<8x128xf32>
    %c0_1 = arith.constant 0 : index
    %c0_2 = arith.constant 0 : index
    %c0_3 = arith.constant 0 : index
    %5 = vector.load %arg1[%c0_1, %c0_2, %c0_3] : memref<8x8x384xf32, #tpu.memory_space<vmem>>, vector<8x1x384xf32>
    %6 = vector.shape_cast %5 : vector<8x1x384xf32> to vector<8x384xf32>
    %7 = arith.truncf %4 : vector<8x128xf32> to vector<8x128xbf16>
    %c0_4 = arith.constant 0 : index
    %c0_5 = arith.constant 0 : index
    %8 = vector.load %arg4[%c0_4, %c0_5] : memref<128x384xbf16, #tpu.memory_space<vmem>>, vector<128x384xbf16>
    %cst_6 = arith.constant dense<0.000000e+00> : vector<8x384xf32>
    %9 = tpu.matmul %7, %8, %cst_6 {dimension_numbers = #tpu.dot_dimension_numbers<[1], [0], [0], [1], [0, 0, 1, 1], [], []>} : vector<8x128xbf16>, vector<128x384xbf16>, vector<8x384xf32> -> vector<8x384xf32>
    %c0_7 = arith.constant 0 : index
    %c0_8 = arith.constant 0 : index
    %10 = vector.load %arg5[%c0_7, %c0_8] : memref<1x384xf32, #tpu.memory_space<vmem>>, vector<1x384xf32>
    %11 = vector.broadcast %10 : vector<1x384xf32> to vector<8x384xf32>
    %12 = arith.addf %9, %11 : vector<8x384xf32>
    %13 = vector.extract_strided_slice %6 {offsets = [0, 0], sizes = [8, 128], strides = [1, 1]} : vector<8x384xf32> to vector<8x128xf32>
    %14 = vector.extract_strided_slice %12 {offsets = [0, 0], sizes = [8, 128], strides = [1, 1]} : vector<8x384xf32> to vector<8x128xf32>
    %15 = arith.addf %13, %14 : vector<8x128xf32>
    %16 = arith.negf %15 : vector<8x128xf32>
    %17 = math.exp %16 : vector<8x128xf32>
    %cst_9 = arith.constant 1.000000e+00 : f32
    %18 = vector.broadcast %cst_9 : f32 to vector<8x128xf32>
    %19 = arith.addf %18, %17 : vector<8x128xf32>
    %20 = arith.divf %18, %19 : vector<8x128xf32>
    %21 = vector.extract_strided_slice %6 {offsets = [0, 128], sizes = [8, 128], strides = [1, 1]} : vector<8x384xf32> to vector<8x128xf32>
    %22 = vector.extract_strided_slice %12 {offsets = [0, 128], sizes = [8, 128], strides = [1, 1]} : vector<8x384xf32> to vector<8x128xf32>
    %23 = arith.addf %21, %22 : vector<8x128xf32>
    %24 = arith.negf %23 : vector<8x128xf32>
    %25 = math.exp %24 : vector<8x128xf32>
    %cst_10 = arith.constant 1.000000e+00 : f32
    %26 = vector.broadcast %cst_10 : f32 to vector<8x128xf32>
    %27 = arith.addf %26, %25 : vector<8x128xf32>
    %28 = arith.divf %26, %27 : vector<8x128xf32>
    %29 = vector.extract_strided_slice %6 {offsets = [0, 256], sizes = [8, 128], strides = [1, 1]} : vector<8x384xf32> to vector<8x128xf32>
    %30 = vector.extract_strided_slice %12 {offsets = [0, 256], sizes = [8, 128], strides = [1, 1]} : vector<8x384xf32> to vector<8x128xf32>
    %31 = arith.mulf %20, %30 : vector<8x128xf32>
    %32 = arith.addf %29, %31 : vector<8x128xf32>
    %33 = math.tanh %32 : vector<8x128xf32>
    %cst_11 = arith.constant 1.000000e+00 : f32
    %34 = vector.broadcast %cst_11 : f32 to vector<8x128xf32>
    %35 = arith.subf %34, %28 : vector<8x128xf32>
    %36 = arith.mulf %35, %33 : vector<8x128xf32>
    %37 = arith.mulf %28, %4 : vector<8x128xf32>
    %38 = arith.addf %36, %37 : vector<8x128xf32>
    %39 = vector.extract_strided_slice %3 {offsets = [0, 0], sizes = [8, 1], strides = [1, 1]} : vector<8x8xi1> to vector<8x1xi1>
    %40 = vector.shape_cast %39 : vector<8x1xi1> to vector<8x1xi1>
    %41 = vector.broadcast %40 : vector<8x1xi1> to vector<8x128xi1>
    %42 = arith.select %41, %38, %4 : vector<8x128xi1>, vector<8x128xf32>
    %c0_12 = arith.constant 0 : index
    %c0_13 = arith.constant 0 : index
    %c0_14 = arith.constant 0 : index
    %43 = vector.load %arg13[%c0_12, %c0_13, %c0_14] : memref<8x8x128xf32, #tpu.memory_space<vmem>>, vector<8x1x128xf32>
    %44 = vector.shape_cast %43 : vector<8x1x128xf32> to vector<8x128xf32>
    %45 = vector.shape_cast %42 : vector<8x128xf32> to vector<8x1x128xf32>
    tpu.vector_store %arg13[%c0_12, %c0_13, %c0_14], %45 {strides = array<i32>} : memref<8x8x128xf32, #tpu.memory_space<vmem>>, vector<8x1x128xf32>,
    %c0_15 = arith.constant 0 : index
    %c1 = arith.constant 1 : index
    %c0_16 = arith.constant 0 : index
    %46 = vector.load %arg1[%c0_15, %c1, %c0_16] : memref<8x8x384xf32, #tpu.memory_space<vmem>>, vector<8x1x384xf32>
    %47 = vector.shape_cast %46 : vector<8x1x384xf32> to vector<8x384xf32>
    %48 = arith.truncf %42 : vector<8x128xf32> to vector<8x128xbf16>
    %c0_17 = arith.constant 0 : index
    %c0_18 = arith.constant 0 : index
    %49 = vector.load %arg4[%c0_17, %c0_18] : memref<128x384xbf16, #tpu.memory_space<vmem>>, vector<128x384xbf16>
    %cst_19 = arith.constant dense<0.000000e+00> : vector<8x384xf32>
    %50 = tpu.matmul %48, %49, %cst_19 {dimension_numbers = #tpu.dot_dimension_numbers<[1], [0], [0], [1], [0, 0, 1, 1], [], []>} : vector<8x128xbf16>, vector<128x384xbf16>, vector<8x384xf32> -> vector<8x384xf32>
    %c0_20 = arith.constant 0 : index
    %c0_21 = arith.constant 0 : index
    %51 = vector.load %arg5[%c0_20, %c0_21] : memref<1x384xf32, #tpu.memory_space<vmem>>, vector<1x384xf32>
    %52 = vector.broadcast %51 : vector<1x384xf32> to vector<8x384xf32>
    %53 = arith.addf %50, %52 : vector<8x384xf32>
    %54 = vector.extract_strided_slice %47 {offsets = [0, 0], sizes = [8, 128], strides = [1, 1]} : vector<8x384xf32> to vector<8x128xf32>
    %55 = vector.extract_strided_slice %53 {offsets = [0, 0], sizes = [8, 128], strides = [1, 1]} : vector<8x384xf32> to vector<8x128xf32>
    %56 = arith.addf %54, %55 : vector<8x128xf32>
    %57 = arith.negf %56 : vector<8x128xf32>
    %58 = math.exp %57 : vector<8x128xf32>
    %cst_22 = arith.constant 1.000000e+00 : f32
    %59 = vector.broadcast %cst_22 : f32 to vector<8x128xf32>
    %60 = arith.addf %59, %58 : vector<8x128xf32>
    %61 = arith.divf %59, %60 : vector<8x128xf32>
    %62 = vector.extract_strided_slice %47 {offsets = [0, 128], sizes = [8, 128], strides = [1, 1]} : vector<8x384xf32> to vector<8x128xf32>
    %63 = vector.extract_strided_slice %53 {offsets = [0, 128], sizes = [8, 128], strides = [1, 1]} : vector<8x384xf32> to vector<8x128xf32>
    %64 = arith.addf %62, %63 : vector<8x128xf32>
    %65 = arith.negf %64 : vector<8x128xf32>
    %66 = math.exp %65 : vector<8x128xf32>
    %cst_23 = arith.constant 1.000000e+00 : f32
    %67 = vector.broadcast %cst_23 : f32 to vector<8x128xf32>
    %68 = arith.addf %67, %66 : vector<8x128xf32>
    %69 = arith.divf %67, %68 : vector<8x128xf32>
    %70 = vector.extract_strided_slice %47 {offsets = [0, 256], sizes = [8, 128], strides = [1, 1]} : vector<8x384xf32> to vector<8x128xf32>
    %71 = vector.extract_strided_slice %53 {offsets = [0, 256], sizes = [8, 128], strides = [1, 1]} : vector<8x384xf32> to vector<8x128xf32>
    %72 = arith.mulf %61, %71 : vector<8x128xf32>
    %73 = arith.addf %70, %72 : vector<8x128xf32>
    %74 = math.tanh %73 : vector<8x128xf32>
    %cst_24 = arith.constant 1.000000e+00 : f32
    %75 = vector.broadcast %cst_24 : f32 to vector<8x128xf32>
    %76 = arith.subf %75, %69 : vector<8x128xf32>
    %77 = arith.mulf %76, %74 : vector<8x128xf32>
    %78 = arith.mulf %69, %42 : vector<8x128xf32>
    %79 = arith.addf %77, %78 : vector<8x128xf32>
    %80 = vector.extract_strided_slice %3 {offsets = [0, 1], sizes = [8, 1], strides = [1, 1]} : vector<8x8xi1> to vector<8x1xi1>
    %81 = vector.shape_cast %80 : vector<8x1xi1> to vector<8x1xi1>
    %82 = vector.broadcast %81 : vector<8x1xi1> to vector<8x128xi1>
    %83 = arith.select %82, %79, %42 : vector<8x128xi1>, vector<8x128xf32>
    %c0_25 = arith.constant 0 : index
    %c1_26 = arith.constant 1 : index
    %c0_27 = arith.constant 0 : index
    %84 = vector.load %arg13[%c0_25, %c1_26, %c0_27] : memref<8x8x128xf32, #tpu.memory_space<vmem>>, vector<8x1x128xf32>
    %85 = vector.shape_cast %84 : vector<8x1x128xf32> to vector<8x128xf32>
    %86 = vector.shape_cast %83 : vector<8x128xf32> to vector<8x1x128xf32>
    tpu.vector_store %arg13[%c0_25, %c1_26, %c0_27], %86 {strides = array<i32>} : memref<8x8x128xf32, #tpu.memory_space<vmem>>, vector<8x1x128xf32>,
    %c0_28 = arith.constant 0 : index
    %c2 = arith.constant 2 : index
    %c0_29 = arith.constant 0 : index
    %87 = vector.load %arg1[%c0_28, %c2, %c0_29] : memref<8x8x384xf32, #tpu.memory_space<vmem>>, vector<8x1x384xf32>
    %88 = vector.shape_cast %87 : vector<8x1x384xf32> to vector<8x384xf32>
    %89 = arith.truncf %83 : vector<8x128xf32> to vector<8x128xbf16>
    %c0_30 = arith.constant 0 : index
    %c0_31 = arith.constant 0 : index
    %90 = vector.load %arg4[%c0_30, %c0_31] : memref<128x384xbf16, #tpu.memory_space<vmem>>, vector<128x384xbf16>
    %cst_32 = arith.constant dense<0.000000e+00> : vector<8x384xf32>
    %91 = tpu.matmul %89, %90, %cst_32 {dimension_numbers = #tpu.dot_dimension_numbers<[1], [0], [0], [1], [0, 0, 1, 1], [], []>} : vector<8x128xbf16>, vector<128x384xbf16>, vector<8x384xf32> -> vector<8x384xf32>
    %c0_33 = arith.constant 0 : index
    %c0_34 = arith.constant 0 : index
    %92 = vector.load %arg5[%c0_33, %c0_34] : memref<1x384xf32, #tpu.memory_space<vmem>>, vector<1x384xf32>
    %93 = vector.broadcast %92 : vector<1x384xf32> to vector<8x384xf32>
    %94 = arith.addf %91, %93 : vector<8x384xf32>
    %95 = vector.extract_strided_slice %88 {offsets = [0, 0], sizes = [8, 128], strides = [1, 1]} : vector<8x384xf32> to vector<8x128xf32>
    %96 = vector.extract_strided_slice %94 {offsets = [0, 0], sizes = [8, 128], strides = [1, 1]} : vector<8x384xf32> to vector<8x128xf32>
    %97 = arith.addf %95, %96 : vector<8x128xf32>
    %98 = arith.negf %97 : vector<8x128xf32>
    %99 = math.exp %98 : vector<8x128xf32>
    %cst_35 = arith.constant 1.000000e+00 : f32
    %100 = vector.broadcast %cst_35 : f32 to vector<8x128xf32>
    %101 = arith.addf %100, %99 : vector<8x128xf32>
    %102 = arith.divf %100, %101 : vector<8x128xf32>
    %103 = vector.extract_strided_slice %88 {offsets = [0, 128], sizes = [8, 128], strides = [1, 1]} : vector<8x384xf32> to vector<8x128xf32>
    %104 = vector.extract_strided_slice %94 {offsets = [0, 128], sizes = [8, 128], strides = [1, 1]} : vector<8x384xf32> to vector<8x128xf32>
    %105 = arith.addf %103, %104 : vector<8x128xf32>
    %106 = arith.negf %105 : vector<8x128xf32>
    %107 = math.exp %106 : vector<8x128xf32>
    %cst_36 = arith.constant 1.000000e+00 : f32
    %108 = vector.broadcast %cst_36 : f32 to vector<8x128xf32>
    %109 = arith.addf %108, %107 : vector<8x128xf32>
    %110 = arith.divf %108, %109 : vector<8x128xf32>
    %111 = vector.extract_strided_slice %88 {offsets = [0, 256], sizes = [8, 128], strides = [1, 1]} : vector<8x384xf32> to vector<8x128xf32>
    %112 = vector.extract_strided_slice %94 {offsets = [0, 256], sizes = [8, 128], strides = [1, 1]} : vector<8x384xf32> to vector<8x128xf32>
    %113 = arith.mulf %102, %112 : vector<8x128xf32>
    %114 = arith.addf %111, %113 : vector<8x128xf32>
    %115 = math.tanh %114 : vector<8x128xf32>
    %cst_37 = arith.constant 1.000000e+00 : f32
    %116 = vector.broadcast %cst_37 : f32 to vector<8x128xf32>
    %117 = arith.subf %116, %110 : vector<8x128xf32>
    %118 = arith.mulf %117, %115 : vector<8x128xf32>
    %119 = arith.mulf %110, %83 : vector<8x128xf32>
    %120 = arith.addf %118, %119 : vector<8x128xf32>
    %121 = vector.extract_strided_slice %3 {offsets = [0, 2], sizes = [8, 1], strides = [1, 1]} : vector<8x8xi1> to vector<8x1xi1>
    %122 = vector.shape_cast %121 : vector<8x1xi1> to vector<8x1xi1>
    %123 = vector.broadcast %122 : vector<8x1xi1> to vector<8x128xi1>
    %124 = arith.select %123, %120, %83 : vector<8x128xi1>, vector<8x128xf32>
    %c0_38 = arith.constant 0 : index
    %c2_39 = arith.constant 2 : index
    %c0_40 = arith.constant 0 : index
    %125 = vector.load %arg13[%c0_38, %c2_39, %c0_40] : memref<8x8x128xf32, #tpu.memory_space<vmem>>, vector<8x1x128xf32>
    %126 = vector.shape_cast %125 : vector<8x1x128xf32> to vector<8x128xf32>
    %127 = vector.shape_cast %124 : vector<8x128xf32> to vector<8x1x128xf32>
    tpu.vector_store %arg13[%c0_38, %c2_39, %c0_40], %127 {strides = array<i32>} : memref<8x8x128xf32, #tpu.memory_space<vmem>>, vector<8x1x128xf32>,
    %c0_41 = arith.constant 0 : index
    %c3 = arith.constant 3 : index
    %c0_42 = arith.constant 0 : index
    %128 = vector.load %arg1[%c0_41, %c3, %c0_42] : memref<8x8x384xf32, #tpu.memory_space<vmem>>, vector<8x1x384xf32>
    %129 = vector.shape_cast %128 : vector<8x1x384xf32> to vector<8x384xf32>
    %130 = arith.truncf %124 : vector<8x128xf32> to vector<8x128xbf16>
    %c0_43 = arith.constant 0 : index
    %c0_44 = arith.constant 0 : index
    %131 = vector.load %arg4[%c0_43, %c0_44] : memref<128x384xbf16, #tpu.memory_space<vmem>>, vector<128x384xbf16>
    %cst_45 = arith.constant dense<0.000000e+00> : vector<8x384xf32>
    %132 = tpu.matmul %130, %131, %cst_45 {dimension_numbers = #tpu.dot_dimension_numbers<[1], [0], [0], [1], [0, 0, 1, 1], [], []>} : vector<8x128xbf16>, vector<128x384xbf16>, vector<8x384xf32> -> vector<8x384xf32>
    %c0_46 = arith.constant 0 : index
    %c0_47 = arith.constant 0 : index
    %133 = vector.load %arg5[%c0_46, %c0_47] : memref<1x384xf32, #tpu.memory_space<vmem>>, vector<1x384xf32>
    %134 = vector.broadcast %133 : vector<1x384xf32> to vector<8x384xf32>
    %135 = arith.addf %132, %134 : vector<8x384xf32>
    %136 = vector.extract_strided_slice %129 {offsets = [0, 0], sizes = [8, 128], strides = [1, 1]} : vector<8x384xf32> to vector<8x128xf32>
    %137 = vector.extract_strided_slice %135 {offsets = [0, 0], sizes = [8, 128], strides = [1, 1]} : vector<8x384xf32> to vector<8x128xf32>
    %138 = arith.addf %136, %137 : vector<8x128xf32>
    %139 = arith.negf %138 : vector<8x128xf32>
    %140 = math.exp %139 : vector<8x128xf32>
    %cst_48 = arith.constant 1.000000e+00 : f32
    %141 = vector.broadcast %cst_48 : f32 to vector<8x128xf32>
    %142 = arith.addf %141, %140 : vector<8x128xf32>
    %143 = arith.divf %141, %142 : vector<8x128xf32>
    %144 = vector.extract_strided_slice %129 {offsets = [0, 128], sizes = [8, 128], strides = [1, 1]} : vector<8x384xf32> to vector<8x128xf32>
    %145 = vector.extract_strided_slice %135 {offsets = [0, 128], sizes = [8, 128], strides = [1, 1]} : vector<8x384xf32> to vector<8x128xf32>
    %146 = arith.addf %144, %145 : vector<8x128xf32>
    %147 = arith.negf %146 : vector<8x128xf32>
    %148 = math.exp %147 : vector<8x128xf32>
    %cst_49 = arith.constant 1.000000e+00 : f32
    %149 = vector.broadcast %cst_49 : f32 to vector<8x128xf32>
    %150 = arith.addf %149, %148 : vector<8x128xf32>
    %151 = arith.divf %149, %150 : vector<8x128xf32>
    %152 = vector.extract_strided_slice %129 {offsets = [0, 256], sizes = [8, 128], strides = [1, 1]} : vector<8x384xf32> to vector<8x128xf32>
    %153 = vector.extract_strided_slice %135 {offsets = [0, 256], sizes = [8, 128], strides = [1, 1]} : vector<8x384xf32> to vector<8x128xf32>
    %154 = arith.mulf %143, %153 : vector<8x128xf32>
    %155 = arith.addf %152, %154 : vector<8x128xf32>
    %156 = math.tanh %155 : vector<8x128xf32>
    %cst_50 = arith.constant 1.000000e+00 : f32
    %157 = vector.broadcast %cst_50 : f32 to vector<8x128xf32>
    %158 = arith.subf %157, %151 : vector<8x128xf32>
    %159 = arith.mulf %158, %156 : vector<8x128xf32>
    %160 = arith.mulf %151, %124 : vector<8x128xf32>
    %161 = arith.addf %159, %160 : vector<8x128xf32>
    %162 = vector.extract_strided_slice %3 {offsets = [0, 3], sizes = [8, 1], strides = [1, 1]} : vector<8x8xi1> to vector<8x1xi1>
    %163 = vector.shape_cast %162 : vector<8x1xi1> to vector<8x1xi1>
    %164 = vector.broadcast %163 : vector<8x1xi1> to vector<8x128xi1>
    %165 = arith.select %164, %161, %124 : vector<8x128xi1>, vector<8x128xf32>
    %c0_51 = arith.constant 0 : index
    %c3_52 = arith.constant 3 : index
    %c0_53 = arith.constant 0 : index
    %166 = vector.load %arg13[%c0_51, %c3_52, %c0_53] : memref<8x8x128xf32, #tpu.memory_space<vmem>>, vector<8x1x128xf32>
    %167 = vector.shape_cast %166 : vector<8x1x128xf32> to vector<8x128xf32>
    %168 = vector.shape_cast %165 : vector<8x128xf32> to vector<8x1x128xf32>
    tpu.vector_store %arg13[%c0_51, %c3_52, %c0_53], %168 {strides = array<i32>} : memref<8x8x128xf32, #tpu.memory_space<vmem>>, vector<8x1x128xf32>,
    %c0_54 = arith.constant 0 : index
    %c4 = arith.constant 4 : index
    %c0_55 = arith.constant 0 : index
    %169 = vector.load %arg1[%c0_54, %c4, %c0_55] : memref<8x8x384xf32, #tpu.memory_space<vmem>>, vector<8x1x384xf32>
    %170 = vector.shape_cast %169 : vector<8x1x384xf32> to vector<8x384xf32>
    %171 = arith.truncf %165 : vector<8x128xf32> to vector<8x128xbf16>
    %c0_56 = arith.constant 0 : index
    %c0_57 = arith.constant 0 : index
    %172 = vector.load %arg4[%c0_56, %c0_57] : memref<128x384xbf16, #tpu.memory_space<vmem>>, vector<128x384xbf16>
    %cst_58 = arith.constant dense<0.000000e+00> : vector<8x384xf32>
    %173 = tpu.matmul %171, %172, %cst_58 {dimension_numbers = #tpu.dot_dimension_numbers<[1], [0], [0], [1], [0, 0, 1, 1], [], []>} : vector<8x128xbf16>, vector<128x384xbf16>, vector<8x384xf32> -> vector<8x384xf32>
    %c0_59 = arith.constant 0 : index
    %c0_60 = arith.constant 0 : index
    %174 = vector.load %arg5[%c0_59, %c0_60] : memref<1x384xf32, #tpu.memory_space<vmem>>, vector<1x384xf32>
    %175 = vector.broadcast %174 : vector<1x384xf32> to vector<8x384xf32>
    %176 = arith.addf %173, %175 : vector<8x384xf32>
    %177 = vector.extract_strided_slice %170 {offsets = [0, 0], sizes = [8, 128], strides = [1, 1]} : vector<8x384xf32> to vector<8x128xf32>
    %178 = vector.extract_strided_slice %176 {offsets = [0, 0], sizes = [8, 128], strides = [1, 1]} : vector<8x384xf32> to vector<8x128xf32>
    %179 = arith.addf %177, %178 : vector<8x128xf32>
    %180 = arith.negf %179 : vector<8x128xf32>
    %181 = math.exp %180 : vector<8x128xf32>
    %cst_61 = arith.constant 1.000000e+00 : f32
    %182 = vector.broadcast %cst_61 : f32 to vector<8x128xf32>
    %183 = arith.addf %182, %181 : vector<8x128xf32>
    %184 = arith.divf %182, %183 : vector<8x128xf32>
    %185 = vector.extract_strided_slice %170 {offsets = [0, 128], sizes = [8, 128], strides = [1, 1]} : vector<8x384xf32> to vector<8x128xf32>
    %186 = vector.extract_strided_slice %176 {offsets = [0, 128], sizes = [8, 128], strides = [1, 1]} : vector<8x384xf32> to vector<8x128xf32>
    %187 = arith.addf %185, %186 : vector<8x128xf32>
    %188 = arith.negf %187 : vector<8x128xf32>
    %189 = math.exp %188 : vector<8x128xf32>
    %cst_62 = arith.constant 1.000000e+00 : f32
    %190 = vector.broadcast %cst_62 : f32 to vector<8x128xf32>
    %191 = arith.addf %190, %189 : vector<8x128xf32>
    %192 = arith.divf %190, %191 : vector<8x128xf32>
    %193 = vector.extract_strided_slice %170 {offsets = [0, 256], sizes = [8, 128], strides = [1, 1]} : vector<8x384xf32> to vector<8x128xf32>
    %194 = vector.extract_strided_slice %176 {offsets = [0, 256], sizes = [8, 128], strides = [1, 1]} : vector<8x384xf32> to vector<8x128xf32>
    %195 = arith.mulf %184, %194 : vector<8x128xf32>
    %196 = arith.addf %193, %195 : vector<8x128xf32>
    %197 = math.tanh %196 : vector<8x128xf32>
    %cst_63 = arith.constant 1.000000e+00 : f32
    %198 = vector.broadcast %cst_63 : f32 to vector<8x128xf32>
    %199 = arith.subf %198, %192 : vector<8x128xf32>
    %200 = arith.mulf %199, %197 : vector<8x128xf32>
    %201 = arith.mulf %192, %165 : vector<8x128xf32>
    %202 = arith.addf %200, %201 : vector<8x128xf32>
    %203 = vector.extract_strided_slice %3 {offsets = [0, 4], sizes = [8, 1], strides = [1, 1]} : vector<8x8xi1> to vector<8x1xi1>
    %204 = vector.shape_cast %203 : vector<8x1xi1> to vector<8x1xi1>
    %205 = vector.broadcast %204 : vector<8x1xi1> to vector<8x128xi1>
    %206 = arith.select %205, %202, %165 : vector<8x128xi1>, vector<8x128xf32>
    %c0_64 = arith.constant 0 : index
    %c4_65 = arith.constant 4 : index
    %c0_66 = arith.constant 0 : index
    %207 = vector.load %arg13[%c0_64, %c4_65, %c0_66] : memref<8x8x128xf32, #tpu.memory_space<vmem>>, vector<8x1x128xf32>
    %208 = vector.shape_cast %207 : vector<8x1x128xf32> to vector<8x128xf32>
    %209 = vector.shape_cast %206 : vector<8x128xf32> to vector<8x1x128xf32>
    tpu.vector_store %arg13[%c0_64, %c4_65, %c0_66], %209 {strides = array<i32>} : memref<8x8x128xf32, #tpu.memory_space<vmem>>, vector<8x1x128xf32>,
    %c0_67 = arith.constant 0 : index
    %c5 = arith.constant 5 : index
    %c0_68 = arith.constant 0 : index
    %210 = vector.load %arg1[%c0_67, %c5, %c0_68] : memref<8x8x384xf32, #tpu.memory_space<vmem>>, vector<8x1x384xf32>
    %211 = vector.shape_cast %210 : vector<8x1x384xf32> to vector<8x384xf32>
    %212 = arith.truncf %206 : vector<8x128xf32> to vector<8x128xbf16>
    %c0_69 = arith.constant 0 : index
    %c0_70 = arith.constant 0 : index
    %213 = vector.load %arg4[%c0_69, %c0_70] : memref<128x384xbf16, #tpu.memory_space<vmem>>, vector<128x384xbf16>
    %cst_71 = arith.constant dense<0.000000e+00> : vector<8x384xf32>
    %214 = tpu.matmul %212, %213, %cst_71 {dimension_numbers = #tpu.dot_dimension_numbers<[1], [0], [0], [1], [0, 0, 1, 1], [], []>} : vector<8x128xbf16>, vector<128x384xbf16>, vector<8x384xf32> -> vector<8x384xf32>
    %c0_72 = arith.constant 0 : index
    %c0_73 = arith.constant 0 : index
    %215 = vector.load %arg5[%c0_72, %c0_73] : memref<1x384xf32, #tpu.memory_space<vmem>>, vector<1x384xf32>
    %216 = vector.broadcast %215 : vector<1x384xf32> to vector<8x384xf32>
    %217 = arith.addf %214, %216 : vector<8x384xf32>
    %218 = vector.extract_strided_slice %211 {offsets = [0, 0], sizes = [8, 128], strides = [1, 1]} : vector<8x384xf32> to vector<8x128xf32>
    %219 = vector.extract_strided_slice %217 {offsets = [0, 0], sizes = [8, 128], strides = [1, 1]} : vector<8x384xf32> to vector<8x128xf32>
    %220 = arith.addf %218, %219 : vector<8x128xf32>
    %221 = arith.negf %220 : vector<8x128xf32>
    %222 = math.exp %221 : vector<8x128xf32>
    %cst_74 = arith.constant 1.000000e+00 : f32
    %223 = vector.broadcast %cst_74 : f32 to vector<8x128xf32>
    %224 = arith.addf %223, %222 : vector<8x128xf32>
    %225 = arith.divf %223, %224 : vector<8x128xf32>
    %226 = vector.extract_strided_slice %211 {offsets = [0, 128], sizes = [8, 128], strides = [1, 1]} : vector<8x384xf32> to vector<8x128xf32>
    %227 = vector.extract_strided_slice %217 {offsets = [0, 128], sizes = [8, 128], strides = [1, 1]} : vector<8x384xf32> to vector<8x128xf32>
    %228 = arith.addf %226, %227 : vector<8x128xf32>
    %229 = arith.negf %228 : vector<8x128xf32>
    %230 = math.exp %229 : vector<8x128xf32>
    %cst_75 = arith.constant 1.000000e+00 : f32
    %231 = vector.broadcast %cst_75 : f32 to vector<8x128xf32>
    %232 = arith.addf %231, %230 : vector<8x128xf32>
    %233 = arith.divf %231, %232 : vector<8x128xf32>
    %234 = vector.extract_strided_slice %211 {offsets = [0, 256], sizes = [8, 128], strides = [1, 1]} : vector<8x384xf32> to vector<8x128xf32>
    %235 = vector.extract_strided_slice %217 {offsets = [0, 256], sizes = [8, 128], strides = [1, 1]} : vector<8x384xf32> to vector<8x128xf32>
    %236 = arith.mulf %225, %235 : vector<8x128xf32>
    %237 = arith.addf %234, %236 : vector<8x128xf32>
    %238 = math.tanh %237 : vector<8x128xf32>
    %cst_76 = arith.constant 1.000000e+00 : f32
    %239 = vector.broadcast %cst_76 : f32 to vector<8x128xf32>
    %240 = arith.subf %239, %233 : vector<8x128xf32>
    %241 = arith.mulf %240, %238 : vector<8x128xf32>
    %242 = arith.mulf %233, %206 : vector<8x128xf32>
    %243 = arith.addf %241, %242 : vector<8x128xf32>
    %244 = vector.extract_strided_slice %3 {offsets = [0, 5], sizes = [8, 1], strides = [1, 1]} : vector<8x8xi1> to vector<8x1xi1>
    %245 = vector.shape_cast %244 : vector<8x1xi1> to vector<8x1xi1>
    %246 = vector.broadcast %245 : vector<8x1xi1> to vector<8x128xi1>
    %247 = arith.select %246, %243, %206 : vector<8x128xi1>, vector<8x128xf32>
    %c0_77 = arith.constant 0 : index
    %c5_78 = arith.constant 5 : index
    %c0_79 = arith.constant 0 : index
    %248 = vector.load %arg13[%c0_77, %c5_78, %c0_79] : memref<8x8x128xf32, #tpu.memory_space<vmem>>, vector<8x1x128xf32>
    %249 = vector.shape_cast %248 : vector<8x1x128xf32> to vector<8x128xf32>
    %250 = vector.shape_cast %247 : vector<8x128xf32> to vector<8x1x128xf32>
    tpu.vector_store %arg13[%c0_77, %c5_78, %c0_79], %250 {strides = array<i32>} : memref<8x8x128xf32, #tpu.memory_space<vmem>>, vector<8x1x128xf32>,
    %c0_80 = arith.constant 0 : index
    %c6 = arith.constant 6 : index
    %c0_81 = arith.constant 0 : index
    %251 = vector.load %arg1[%c0_80, %c6, %c0_81] : memref<8x8x384xf32, #tpu.memory_space<vmem>>, vector<8x1x384xf32>
    %252 = vector.shape_cast %251 : vector<8x1x384xf32> to vector<8x384xf32>
    %253 = arith.truncf %247 : vector<8x128xf32> to vector<8x128xbf16>
    %c0_82 = arith.constant 0 : index
    %c0_83 = arith.constant 0 : index
    %254 = vector.load %arg4[%c0_82, %c0_83] : memref<128x384xbf16, #tpu.memory_space<vmem>>, vector<128x384xbf16>
    %cst_84 = arith.constant dense<0.000000e+00> : vector<8x384xf32>
    %255 = tpu.matmul %253, %254, %cst_84 {dimension_numbers = #tpu.dot_dimension_numbers<[1], [0], [0], [1], [0, 0, 1, 1], [], []>} : vector<8x128xbf16>, vector<128x384xbf16>, vector<8x384xf32> -> vector<8x384xf32>
    %c0_85 = arith.constant 0 : index
    %c0_86 = arith.constant 0 : index
    %256 = vector.load %arg5[%c0_85, %c0_86] : memref<1x384xf32, #tpu.memory_space<vmem>>, vector<1x384xf32>
    %257 = vector.broadcast %256 : vector<1x384xf32> to vector<8x384xf32>
    %258 = arith.addf %255, %257 : vector<8x384xf32>
    %259 = vector.extract_strided_slice %252 {offsets = [0, 0], sizes = [8, 128], strides = [1, 1]} : vector<8x384xf32> to vector<8x128xf32>
    %260 = vector.extract_strided_slice %258 {offsets = [0, 0], sizes = [8, 128], strides = [1, 1]} : vector<8x384xf32> to vector<8x128xf32>
    %261 = arith.addf %259, %260 : vector<8x128xf32>
    %262 = arith.negf %261 : vector<8x128xf32>
    %263 = math.exp %262 : vector<8x128xf32>
    %cst_87 = arith.constant 1.000000e+00 : f32
    %264 = vector.broadcast %cst_87 : f32 to vector<8x128xf32>
    %265 = arith.addf %264, %263 : vector<8x128xf32>
    %266 = arith.divf %264, %265 : vector<8x128xf32>
    %267 = vector.extract_strided_slice %252 {offsets = [0, 128], sizes = [8, 128], strides = [1, 1]} : vector<8x384xf32> to vector<8x128xf32>
    %268 = vector.extract_strided_slice %258 {offsets = [0, 128], sizes = [8, 128], strides = [1, 1]} : vector<8x384xf32> to vector<8x128xf32>
    %269 = arith.addf %267, %268 : vector<8x128xf32>
    %270 = arith.negf %269 : vector<8x128xf32>
    %271 = math.exp %270 : vector<8x128xf32>
    %cst_88 = arith.constant 1.000000e+00 : f32
    %272 = vector.broadcast %cst_88 : f32 to vector<8x128xf32>
    %273 = arith.addf %272, %271 : vector<8x128xf32>
    %274 = arith.divf %272, %273 : vector<8x128xf32>
    %275 = vector.extract_strided_slice %252 {offsets = [0, 256], sizes = [8, 128], strides = [1, 1]} : vector<8x384xf32> to vector<8x128xf32>
    %276 = vector.extract_strided_slice %258 {offsets = [0, 256], sizes = [8, 128], strides = [1, 1]} : vector<8x384xf32> to vector<8x128xf32>
    %277 = arith.mulf %266, %276 : vector<8x128xf32>
    %278 = arith.addf %275, %277 : vector<8x128xf32>
    %279 = math.tanh %278 : vector<8x128xf32>
    %cst_89 = arith.constant 1.000000e+00 : f32
    %280 = vector.broadcast %cst_89 : f32 to vector<8x128xf32>
    %281 = arith.subf %280, %274 : vector<8x128xf32>
    %282 = arith.mulf %281, %279 : vector<8x128xf32>
    %283 = arith.mulf %274, %247 : vector<8x128xf32>
    %284 = arith.addf %282, %283 : vector<8x128xf32>
    %285 = vector.extract_strided_slice %3 {offsets = [0, 6], sizes = [8, 1], strides = [1, 1]} : vector<8x8xi1> to vector<8x1xi1>
    %286 = vector.shape_cast %285 : vector<8x1xi1> to vector<8x1xi1>
    %287 = vector.broadcast %286 : vector<8x1xi1> to vector<8x128xi1>
    %288 = arith.select %287, %284, %247 : vector<8x128xi1>, vector<8x128xf32>
    %c0_90 = arith.constant 0 : index
    %c6_91 = arith.constant 6 : index
    %c0_92 = arith.constant 0 : index
    %289 = vector.load %arg13[%c0_90, %c6_91, %c0_92] : memref<8x8x128xf32, #tpu.memory_space<vmem>>, vector<8x1x128xf32>
    %290 = vector.shape_cast %289 : vector<8x1x128xf32> to vector<8x128xf32>
    %291 = vector.shape_cast %288 : vector<8x128xf32> to vector<8x1x128xf32>
    tpu.vector_store %arg13[%c0_90, %c6_91, %c0_92], %291 {strides = array<i32>} : memref<8x8x128xf32, #tpu.memory_space<vmem>>, vector<8x1x128xf32>,
    %c0_93 = arith.constant 0 : index
    %c7 = arith.constant 7 : index
    %c0_94 = arith.constant 0 : index
    %292 = vector.load %arg1[%c0_93, %c7, %c0_94] : memref<8x8x384xf32, #tpu.memory_space<vmem>>, vector<8x1x384xf32>
    %293 = vector.shape_cast %292 : vector<8x1x384xf32> to vector<8x384xf32>
    %294 = arith.truncf %288 : vector<8x128xf32> to vector<8x128xbf16>
    %c0_95 = arith.constant 0 : index
    %c0_96 = arith.constant 0 : index
    %295 = vector.load %arg4[%c0_95, %c0_96] : memref<128x384xbf16, #tpu.memory_space<vmem>>, vector<128x384xbf16>
    %cst_97 = arith.constant dense<0.000000e+00> : vector<8x384xf32>
    %296 = tpu.matmul %294, %295, %cst_97 {dimension_numbers = #tpu.dot_dimension_numbers<[1], [0], [0], [1], [0, 0, 1, 1], [], []>} : vector<8x128xbf16>, vector<128x384xbf16>, vector<8x384xf32> -> vector<8x384xf32>
    %c0_98 = arith.constant 0 : index
    %c0_99 = arith.constant 0 : index
    %297 = vector.load %arg5[%c0_98, %c0_99] : memref<1x384xf32, #tpu.memory_space<vmem>>, vector<1x384xf32>
    %298 = vector.broadcast %297 : vector<1x384xf32> to vector<8x384xf32>
    %299 = arith.addf %296, %298 : vector<8x384xf32>
    %300 = vector.extract_strided_slice %293 {offsets = [0, 0], sizes = [8, 128], strides = [1, 1]} : vector<8x384xf32> to vector<8x128xf32>
    %301 = vector.extract_strided_slice %299 {offsets = [0, 0], sizes = [8, 128], strides = [1, 1]} : vector<8x384xf32> to vector<8x128xf32>
    %302 = arith.addf %300, %301 : vector<8x128xf32>
    %303 = arith.negf %302 : vector<8x128xf32>
    %304 = math.exp %303 : vector<8x128xf32>
    %cst_100 = arith.constant 1.000000e+00 : f32
    %305 = vector.broadcast %cst_100 : f32 to vector<8x128xf32>
    %306 = arith.addf %305, %304 : vector<8x128xf32>
    %307 = arith.divf %305, %306 : vector<8x128xf32>
    %308 = vector.extract_strided_slice %293 {offsets = [0, 128], sizes = [8, 128], strides = [1, 1]} : vector<8x384xf32> to vector<8x128xf32>
    %309 = vector.extract_strided_slice %299 {offsets = [0, 128], sizes = [8, 128], strides = [1, 1]} : vector<8x384xf32> to vector<8x128xf32>
    %310 = arith.addf %308, %309 : vector<8x128xf32>
    %311 = arith.negf %310 : vector<8x128xf32>
    %312 = math.exp %311 : vector<8x128xf32>
    %cst_101 = arith.constant 1.000000e+00 : f32
    %313 = vector.broadcast %cst_101 : f32 to vector<8x128xf32>
    %314 = arith.addf %313, %312 : vector<8x128xf32>
    %315 = arith.divf %313, %314 : vector<8x128xf32>
    %316 = vector.extract_strided_slice %293 {offsets = [0, 256], sizes = [8, 128], strides = [1, 1]} : vector<8x384xf32> to vector<8x128xf32>
    %317 = vector.extract_strided_slice %299 {offsets = [0, 256], sizes = [8, 128], strides = [1, 1]} : vector<8x384xf32> to vector<8x128xf32>
    %318 = arith.mulf %307, %317 : vector<8x128xf32>
    %319 = arith.addf %316, %318 : vector<8x128xf32>
    %320 = math.tanh %319 : vector<8x128xf32>
    %cst_102 = arith.constant 1.000000e+00 : f32
    %321 = vector.broadcast %cst_102 : f32 to vector<8x128xf32>
    %322 = arith.subf %321, %315 : vector<8x128xf32>
    %323 = arith.mulf %322, %320 : vector<8x128xf32>
    %324 = arith.mulf %315, %288 : vector<8x128xf32>
    %325 = arith.addf %323, %324 : vector<8x128xf32>
    %326 = vector.extract_strided_slice %3 {offsets = [0, 7], sizes = [8, 1], strides = [1, 1]} : vector<8x8xi1> to vector<8x1xi1>
    %327 = vector.shape_cast %326 : vector<8x1xi1> to vector<8x1xi1>
    %328 = vector.broadcast %327 : vector<8x1xi1> to vector<8x128xi1>
    %329 = arith.select %328, %325, %288 : vector<8x128xi1>, vector<8x128xf32>
    %c0_103 = arith.constant 0 : index
    %c7_104 = arith.constant 7 : index
    %c0_105 = arith.constant 0 : index
    %330 = vector.load %arg13[%c0_103, %c7_104, %c0_105] : memref<8x8x128xf32, #tpu.memory_space<vmem>>, vector<8x1x128xf32>
    %331 = vector.shape_cast %330 : vector<8x1x128xf32> to vector<8x128xf32>
    %332 = vector.shape_cast %329 : vector<8x128xf32> to vector<8x1x128xf32>
    tpu.vector_store %arg13[%c0_103, %c7_104, %c0_105], %332 {strides = array<i32>} : memref<8x8x128xf32, #tpu.memory_space<vmem>>, vector<8x1x128xf32>,
    %c0_106 = arith.constant 0 : index
    %c0_107 = arith.constant 0 : index
    %c0_108 = arith.constant 0 : index
    %333 = vector.load %arg13[%c0_106, %c0_107, %c0_108] : memref<8x8x128xf32, #tpu.memory_space<vmem>>, vector<8x8x128xf32>
    %334 = vector.shape_cast %333 : vector<8x8x128xf32> to vector<64x128xf32>
    %335 = arith.truncf %334 : vector<64x128xf32> to vector<64x128xbf16>
    %c0_109 = arith.constant 0 : index
    %c0_110 = arith.constant 0 : index
    %336 = vector.load %arg6[%c0_109, %c0_110] : memref<128x128xbf16, #tpu.memory_space<vmem>>, vector<128x128xbf16>
    %cst_111 = arith.constant dense<0.000000e+00> : vector<64x128xf32>
    %337 = tpu.matmul %335, %336, %cst_111 {dimension_numbers = #tpu.dot_dimension_numbers<[1], [0], [0], [1], [0, 0, 1, 1], [], []>} : vector<64x128xbf16>, vector<128x128xbf16>, vector<64x128xf32> -> vector<64x128xf32>
    %c0_112 = arith.constant 0 : index
    %c0_113 = arith.constant 0 : index
    %338 = vector.load %arg7[%c0_112, %c0_113] : memref<1x128xf32, #tpu.memory_space<vmem>>, vector<1x128xf32>
    %339 = vector.broadcast %338 : vector<1x128xf32> to vector<64x128xf32>
    %340 = arith.addf %337, %339 : vector<64x128xf32>
    %341 = math.tanh %340 : vector<64x128xf32>
    %342 = vector.shape_cast %341 : vector<64x128xf32> to vector<8x8x128xf32>
    %c0_114 = arith.constant 0 : index
    %c0_115 = arith.constant 0 : index
    %343 = vector.load %arg8[%c0_114, %c0_115] : memref<1x128xf32, #tpu.memory_space<vmem>>, vector<1x128xf32>
    %344 = vector.shape_cast %343 : vector<1x128xf32> to vector<1x1x128xf32>
    %345 = vector.broadcast %344 : vector<1x1x128xf32> to vector<8x8x128xf32>
    %346 = arith.mulf %342, %345 : vector<8x8x128xf32>
    %cst_116 = arith.constant dense<0.000000e+00> : vector<8x8xf32>
    %347 = vector.multi_reduction <add>, %346, %cst_116 [2] : vector<8x8x128xf32> to vector<8x8xf32>
    %cst_117 = arith.constant 0xFF800000 : f32
    %348 = vector.broadcast %cst_117 : f32 to vector<8x8xf32>
    %349 = arith.select %3, %347, %348 : vector<8x8xi1>, vector<8x8xf32>
    %cst_118 = arith.constant dense<0xFF800000> : vector<8xf32>
    %350 = vector.multi_reduction <maximumf>, %349, %cst_118 [1] : vector<8x8xf32> to vector<8xf32>
    %351 = vector.shape_cast %350 : vector<8xf32> to vector<8x1xf32>
    %cst_119 = arith.constant 0xFF800000 : f32
    %352 = vector.broadcast %cst_119 : f32 to vector<8x1xf32>
    %353 = arith.cmpf ogt, %351, %352 : vector<8x1xf32>
    %cst_120 = arith.constant 0.000000e+00 : f32
    %354 = vector.broadcast %cst_120 : f32 to vector<8x1xf32>
    %355 = arith.select %353, %351, %354 : vector<8x1xi1>, vector<8x1xf32>
    %356 = vector.broadcast %355 : vector<8x1xf32> to vector<8x8xf32>
    %357 = arith.subf %349, %356 : vector<8x8xf32>
    %358 = math.exp %357 : vector<8x8xf32>
    %cst_121 = arith.constant 0.000000e+00 : f32
    %359 = vector.broadcast %cst_121 : f32 to vector<8x8xf32>
    %360 = arith.select %3, %358, %359 : vector<8x8xi1>, vector<8x8xf32>
    %cst_122 = arith.constant dense<0.000000e+00> : vector<8xf32>
    %361 = vector.multi_reduction <add>, %360, %cst_122 [1] : vector<8x8xf32> to vector<8xf32>
    %362 = vector.shape_cast %361 : vector<8xf32> to vector<8x1xf32>
    %cst_123 = arith.constant 0.000000e+00 : f32
    %363 = vector.broadcast %cst_123 : f32 to vector<8x1xf32>
    %364 = arith.cmpf ogt, %362, %363 : vector<8x1xf32>
    %cst_124 = arith.constant 1.000000e+00 : f32
    %365 = vector.broadcast %cst_124 : f32 to vector<8x1xf32>
    %366 = arith.select %364, %362, %365 : vector<8x1xi1>, vector<8x1xf32>
    %cst_125 = arith.constant 1.000000e+00 : f32
    %367 = vector.broadcast %cst_125 : f32 to vector<8x1xf32>
    %368 = arith.divf %367, %366 : vector<8x1xf32>
    %369 = vector.shape_cast %360 : vector<8x8xf32> to vector<8x8x1xf32>
    %370 = vector.broadcast %369 : vector<8x8x1xf32> to vector<8x8x128xf32>
    %371 = arith.mulf %370, %333 : vector<8x8x128xf32>
    %cst_126 = arith.constant dense<0.000000e+00> : vector<8x128xf32>
    %372 = vector.multi_reduction <add>, %371, %cst_126 [1] : vector<8x8x128xf32> to vector<8x128xf32>
    %373 = vector.broadcast %368 : vector<8x1xf32> to vector<8x128xf32>
    %374 = arith.mulf %372, %373 : vector<8x128xf32>
    %375 = arith.truncf %374 : vector<8x128xf32> to vector<8x128xbf16>
    %c0_127 = arith.constant 0 : index
    %c0_128 = arith.constant 0 : index
    %376 = vector.load %arg9[%c0_127, %c0_128] : memref<128x128xbf16, #tpu.memory_space<vmem>>, vector<128x128xbf16>
    %cst_129 = arith.constant dense<0.000000e+00> : vector<8x128xf32>
    %377 = tpu.matmul %375, %376, %cst_129 {dimension_numbers = #tpu.dot_dimension_numbers<[1], [0], [0], [1], [0, 0, 1, 1], [], []>} : vector<8x128xbf16>, vector<128x128xbf16>, vector<8x128xf32> -> vector<8x128xf32>
    %c0_130 = arith.constant 0 : index
    %c0_131 = arith.constant 0 : index
    %378 = vector.load %arg3[%c0_130, %c0_131] : memref<8x1xf32, #tpu.memory_space<vmem>>, vector<8x1xf32>
    %c0_132 = arith.constant 0 : index
    %c0_133 = arith.constant 0 : index
    %379 = vector.load %arg10[%c0_132, %c0_133] : memref<1x128xf32, #tpu.memory_space<vmem>>, vector<1x128xf32>
    %380 = vector.broadcast %378 : vector<8x1xf32> to vector<8x128xf32>
    %381 = vector.broadcast %379 : vector<1x128xf32> to vector<8x128xf32>
    %382 = arith.mulf %380, %381 : vector<8x128xf32>
    %383 = arith.addf %377, %382 : vector<8x128xf32>
    %c0_134 = arith.constant 0 : index
    %c0_135 = arith.constant 0 : index
    %384 = vector.load %arg11[%c0_134, %c0_135] : memref<1x128xf32, #tpu.memory_space<vmem>>, vector<1x128xf32>
    %385 = vector.broadcast %384 : vector<1x128xf32> to vector<8x128xf32>
    %386 = arith.addf %383, %385 : vector<8x128xf32>
    %c0_136 = arith.constant 0 : index
    %c0_137 = arith.constant 0 : index
    %387 = vector.load %arg12[%c0_136, %c0_137] : memref<8x128xf32, #tpu.memory_space<vmem>>, vector<8x128xf32>
    tpu.vector_store %arg12[%c0_136, %c0_137], %386 {strides = array<i32>} : memref<8x128xf32, #tpu.memory_space<vmem>>, vector<8x128xf32>,
    return
  }
  func.func @transform_0(%arg0: i32) -> (i32, i32, i32) {
    %c0_i32 = arith.constant 0 : i32
    %c0_i32_0 = arith.constant 0 : i32
    %c0_i32_1 = arith.constant 0 : i32
    return %arg0, %c0_i32, %c0_i32_0 : i32, i32, i32
  }
  func.func @transform_1(%arg0: i32) -> (i32, i32) {
    %c0_i32 = arith.constant 0 : i32
    %c0_i32_0 = arith.constant 0 : i32
    return %arg0, %c0_i32 : i32, i32
  }
  func.func @transform_2(%arg0: i32) -> (i32, i32) {
    %c0_i32 = arith.constant 0 : i32
    %c0_i32_0 = arith.constant 0 : i32
    return %arg0, %c0_i32 : i32, i32
  }
  func.func @transform_3(%arg0: i32) -> (i32, i32) {
    %c0_i32 = arith.constant 0 : i32
    %c0_i32_0 = arith.constant 0 : i32
    %c0_i32_1 = arith.constant 0 : i32
    return %c0_i32, %c0_i32_0 : i32, i32
  }
  func.func @transform_4(%arg0: i32) -> (i32, i32) {
    %c0_i32 = arith.constant 0 : i32
    %c0_i32_0 = arith.constant 0 : i32
    %c0_i32_1 = arith.constant 0 : i32
    return %c0_i32, %c0_i32_0 : i32, i32
  }
  func.func @transform_5(%arg0: i32) -> (i32, i32) {
    %c0_i32 = arith.constant 0 : i32
    %c0_i32_0 = arith.constant 0 : i32
    %c0_i32_1 = arith.constant 0 : i32
    return %c0_i32, %c0_i32_0 : i32, i32
  }
  func.func @transform_6(%arg0: i32) -> (i32, i32) {
    %c0_i32 = arith.constant 0 : i32
    %c0_i32_0 = arith.constant 0 : i32
    %c0_i32_1 = arith.constant 0 : i32
    return %c0_i32, %c0_i32_0 : i32, i32
  }
  func.func @transform_7(%arg0: i32) -> (i32, i32) {
    %c0_i32 = arith.constant 0 : i32
    %c0_i32_0 = arith.constant 0 : i32
    %c0_i32_1 = arith.constant 0 : i32
    return %c0_i32, %c0_i32_0 : i32, i32
  }
  func.func @transform_8(%arg0: i32) -> (i32, i32) {
    %c0_i32 = arith.constant 0 : i32
    %c0_i32_0 = arith.constant 0 : i32
    %c0_i32_1 = arith.constant 0 : i32
    return %c0_i32, %c0_i32_0 : i32, i32
  }
  func.func @transform_9(%arg0: i32) -> (i32, i32) {
    %c0_i32 = arith.constant 0 : i32
    %c0_i32_0 = arith.constant 0 : i32
    %c0_i32_1 = arith.constant 0 : i32
    return %c0_i32, %c0_i32_0 : i32, i32
  }
  func.func @transform_10(%arg0: i32) -> (i32, i32) {
    %c0_i32 = arith.constant 0 : i32
    %c0_i32_0 = arith.constant 0 : i32
    %c0_i32_1 = arith.constant 0 : i32
    return %c0_i32, %c0_i32_0 : i32, i32
  }
  func.func @transform_11(%arg0: i32) -> (i32, i32) {
    %c0_i32 = arith.constant 0 : i32
    %c0_i32_0 = arith.constant 0 : i32
    return %arg0, %c0_i32 : i32, i32
  }
}

</mosaic_0001>

<llo_original>
// kernel: ehr_admissions_forward.1
$region0: #{ehr_admissions_forward.1}
  #allocation0 [shape = 'u32[]', space=smem, size = 0x4, offset = 0x4, fixed_abs, tag = 'smem constant byte address 0x4 - core index']
  #allocation1 [shape = 'u32[144,128]{1,0:T(1,128)}', space=vmem, size = 0x12000, scoped, tag = 'internal scratch']
  #allocation2 [shape = 'f32[8,8,128]{2,1,0:T(8,128)}', space=vmem, size = 0x8000, scoped, tag = 'scratch operand']
  %s0 = inlined_call_operand.vmem [shape: f32[8,8,384], index: 0, kind: input, shape index: {}]
  %s1 = inlined_call_operand.vmem [shape: s32[8,1], index: 1, kind: input, shape index: {}]
  %s2 = inlined_call_operand.vmem [shape: f32[8,1], index: 2, kind: input, shape index: {}]
  %s3 = inlined_call_operand.vmem [shape: bf16[128,384], index: 3, kind: input, shape index: {}]
  %s4 = inlined_call_operand.vmem [shape: f32[1,384], index: 4, kind: input, shape index: {}]
  %s5 = inlined_call_operand.vmem [shape: bf16[128,128], index: 5, kind: input, shape index: {}]
  %s6 = inlined_call_operand.vmem [shape: f32[1,128], index: 6, kind: input, shape index: {}]
  %s7 = inlined_call_operand.vmem [shape: f32[1,128], index: 7, kind: input, shape index: {}]
  %s8 = inlined_call_operand.vmem [shape: bf16[128,128], index: 8, kind: input, shape index: {}]
  %s9 = inlined_call_operand.vmem [shape: f32[1,128], index: 9, kind: input, shape index: {}]
  %s10 = inlined_call_operand.vmem [shape: f32[1,128], index: 10, kind: input, shape index: {}]
  %s11 = inlined_call_operand.vmem [shape: f32[8,128], index: 11, kind: output, shape index: {}]
  %s12 = sld [smem:[#allocation0]]
  $region54: #{ehr_admissions_forward.1} parent=0
    _
  %s14 = ssub.s32 1, %s12
  %s15 = scalar_select 0, %s14, %s12
  // Predicated region
  $region2: #{ehr_admissions_forward.1} parent=0 // pred_check
    _
  $region3: #{ehr_admissions_forward.1} parent=0 // pred_check_branch
    %17 = sbr.rel (0) target = $region5
  $region4: #{ehr_admissions_forward.1} parent=0 // pred_region
    _
  $region5: #{ehr_admissions_forward.1} parent=0 // pred_fallthru
    _
  // Predicated region
  $region6: #{ehr_admissions_forward.1} parent=0 // pred_check
    _
  $region7: #{ehr_admissions_forward.1} parent=0 // pred_check_branch
    %19 = sbr.rel (0) target = $region9
  $region8: #{ehr_admissions_forward.1} parent=0 // pred_region
    _
  $region9: #{ehr_admissions_forward.1} parent=0 // pred_fallthru
    _
  // Predicated region
  $region10: #{ehr_admissions_forward.1} parent=0 // pred_check
    _
  $region11: #{ehr_admissions_forward.1} parent=0 // pred_check_branch
    %21 = sbr.rel (0) target = $region13
  $region12: #{ehr_admissions_forward.1} parent=0 // pred_region
    _
  $region13: #{ehr_admissions_forward.1} parent=0 // pred_fallthru
    _
  // Predicated region
  $region14: #{ehr_admissions_forward.1} parent=0 // pred_check
    _
  $region15: #{ehr_admissions_forward.1} parent=0 // pred_check_branch
    %23 = sbr.rel (0) target = $region17
  $region16: #{ehr_admissions_forward.1} parent=0 // pred_region
    _
  $region17: #{ehr_admissions_forward.1} parent=0 // pred_fallthru
    _
  // Predicated region
  $region18: #{ehr_admissions_forward.1} parent=0 // pred_check
    _
  $region19: #{ehr_admissions_forward.1} parent=0 // pred_check_branch
    %25 = sbr.rel (0) target = $region21
  $region20: #{ehr_admissions_forward.1} parent=0 // pred_region
    _
  $region21: #{ehr_admissions_forward.1} parent=0 // pred_fallthru
    _
  // Predicated region
  $region22: #{ehr_admissions_forward.1} parent=0 // pred_check
    _
  $region23: #{ehr_admissions_forward.1} parent=0 // pred_check_branch
    %27 = sbr.rel (0) target = $region25
  $region24: #{ehr_admissions_forward.1} parent=0 // pred_region
    _
  $region25: #{ehr_admissions_forward.1} parent=0 // pred_fallthru
    _
  // Predicated region
  $region26: #{ehr_admissions_forward.1} parent=0 // pred_check
    _
  $region27: #{ehr_admissions_forward.1} parent=0 // pred_check_branch
    %29 = sbr.rel (0) target = $region29
  $region28: #{ehr_admissions_forward.1} parent=0 // pred_region
    _
  $region29: #{ehr_admissions_forward.1} parent=0 // pred_fallthru
    _
  // Predicated region
  $region30: #{ehr_admissions_forward.1} parent=0 // pred_check
    _
  $region31: #{ehr_admissions_forward.1} parent=0 // pred_check_branch
    %31 = sbr.rel (0) target = $region33
  $region32: #{ehr_admissions_forward.1} parent=0 // pred_region
    _
  $region33: #{ehr_admissions_forward.1} parent=0 // pred_fallthru
    _
  // Predicated region
  $region34: #{ehr_admissions_forward.1} parent=0 // pred_check
    _
  $region35: #{ehr_admissions_forward.1} parent=0 // pred_check_branch
    %33 = sbr.rel (0) target = $region37
  $region36: #{ehr_admissions_forward.1} parent=0 // pred_region
    _
  $region37: #{ehr_admissions_forward.1} parent=0 // pred_fallthru
    _
  // Predicated region
  $region38: #{ehr_admissions_forward.1} parent=0 // pred_check
    _
  $region39: #{ehr_admissions_forward.1} parent=0 // pred_check_branch
    %35 = sbr.rel (0) target = $region41
  $region40: #{ehr_admissions_forward.1} parent=0 // pred_region
    _
  $region41: #{ehr_admissions_forward.1} parent=0 // pred_fallthru
    _
  // Predicated region
  $region42: #{ehr_admissions_forward.1} parent=0 // pred_check
    _
  $region43: #{ehr_admissions_forward.1} parent=0 // pred_check_branch
    %37 = sbr.rel (0) target = $region45
  $region44: #{ehr_admissions_forward.1} parent=0 // pred_region
    _
  $region45: #{ehr_admissions_forward.1} parent=0 // pred_fallthru
    _
  %v39 = vld [vmem:[%s1] sm:$0xff]
  %v40 = vlaneseq
  %v41 = vand.u32 %v40, 127
  %42 = vset.pattern.permute.xlu0 0
  %43 = vperm.xlu0 %42, %v39
  %v44 = vpop.permute.xlu0 %43
  %vm45 = vcmp.lt.s32.totalorder %v41, %v44
  %v46 = vld [vmem:[%s0] ss:$8 sm:$0x7]
  %s47 = scalar_lea.vmem %s0, 24
  %v48 = vld [vmem:[%s47] ss:$8 sm:$0x7]
  %s49 = scalar_lea.vmem %s0, 48
  %v50 = vld [vmem:[%s49] ss:$8 sm:$0x7]
  %s51 = scalar_lea.vmem %s0, 72
  %v52 = vld [vmem:[%s51] ss:$8 sm:$0x7]
  %s53 = scalar_lea.vmem %s0, 96
  %v54 = vld [vmem:[%s53] ss:$8 sm:$0x7]
  %s55 = scalar_lea.vmem %s0, 120
  %v56 = vld [vmem:[%s55] ss:$8 sm:$0x7]
  %s57 = scalar_lea.vmem %s0, 144
  %v58 = vld [vmem:[%s57] ss:$8 sm:$0x7]
  %s59 = scalar_lea.vmem %s0, 168
  %v60 = vld [vmem:[%s59] ss:$8 sm:$0x7]
  %v61 = vld [vmem:[%s3] sm:$0xff]
  %v62 = vld [vmem:[%s3 + $0x8] sm:$0xf]
  %v63 = vld [vmem:[%s3 + $0xc] sm:$0xff]
  %v64 = vld [vmem:[%s3 + $0x14] sm:$0xf]
  %v65 = vld [vmem:[%s3 + $0x18] sm:$0xff]
  %v66 = vld [vmem:[%s3 + $0x20] sm:$0xf]
  %v67 = vld [vmem:[%s3 + $0x24] sm:$0xff]
  %v68 = vld [vmem:[%s3 + $0x2c] sm:$0xf]
  %v69 = vld [vmem:[%s3 + $0x30] sm:$0xff]
  %v70 = vld [vmem:[%s3 + $0x38] sm:$0xf]
  %v71 = vld [vmem:[%s3 + $0x3c] sm:$0xff]
  %v72 = vld [vmem:[%s3 + $0x44] sm:$0xf]
  %v73 = vld [vmem:[%s3 + $0x48] sm:$0xff]
  %v74 = vld [vmem:[%s3 + $0x50] sm:$0xf]
  %v75 = vld [vmem:[%s3 + $0x54] sm:$0xff]
  %v76 = vld [vmem:[%s3 + $0x5c] sm:$0xf]
  %v77 = vld [vmem:[%s3 + $0x60] sm:$0xff]
  %v78 = vld [vmem:[%s3 + $0x68] sm:$0xf]
  %v79 = vld [vmem:[%s3 + $0x6c] sm:$0xff]
  %v80 = vld [vmem:[%s3 + $0x74] sm:$0xf]
  %v81 = vld [vmem:[%s3 + $0x78] sm:$0xff]
  %v82 = vld [vmem:[%s3 + $0x80] sm:$0xf]
  %v83 = vld [vmem:[%s3 + $0x84] sm:$0xff]
  %v84 = vld [vmem:[%s3 + $0x8c] sm:$0xf]
  %v85 = vld [vmem:[%s3 + $0x90] sm:$0xff]
  %v86 = vld [vmem:[%s3 + $0x98] sm:$0xf]
  %v87 = vld [vmem:[%s3 + $0x9c] sm:$0xff]
  %v88 = vld [vmem:[%s3 + $0xa4] sm:$0xf]
  %v89 = vld [vmem:[%s3 + $0xa8] sm:$0xff]
  %v90 = vld [vmem:[%s3 + $0xb0] sm:$0xf]
  %v91 = vld [vmem:[%s3 + $0xb4] sm:$0xff]
  %v92 = vld [vmem:[%s3 + $0xbc] sm:$0xf]
  %v93 = vld [vmem:[%s4] sm:$0x7]
  %v95 = vlaneseq
  %v96 = vshrl.u32 %v95, 7
  %v97 = vsub.s32 0, %v96
  %v98 = vrot.slane %v93, %v97
  %v99 = vlaneseq
  %v100 = vshrl.u32 %v99, 7
  %v101 = vsub.s32 1, %v100
  %v102 = vrot.slane %v93, %v101
  %v103 = vlaneseq
  %v104 = vshrl.u32 %v103, 7
  %v105 = vsub.s32 2, %v104
  %v106 = vrot.slane %v93, %v105
  %v142 = vunpack.c.l.b16 %v61
  %v143 = vunpack.c.h.b16 %v61
  %v144 = vunpack.c.l.b16 %v62
  %v145 = vunpack.c.l.b16 %v63
  %v146 = vunpack.c.h.b16 %v63
  %v147 = vunpack.c.l.b16 %v64
  %v148 = vunpack.c.l.b16 %v65
  %v149 = vunpack.c.h.b16 %v65
  %v150 = vunpack.c.l.b16 %v66
  %v151 = vunpack.c.l.b16 %v67
  %v152 = vunpack.c.h.b16 %v67
  %v153 = vunpack.c.l.b16 %v68
  %v154 = vunpack.c.l.b16 %v69
  %v155 = vunpack.c.h.b16 %v69
  %v156 = vunpack.c.l.b16 %v70
  %v157 = vunpack.c.l.b16 %v71
  %v158 = vunpack.c.h.b16 %v71
  %v159 = vunpack.c.l.b16 %v72
  %v160 = vunpack.c.l.b16 %v73
  %v161 = vunpack.c.h.b16 %v73
  %v162 = vunpack.c.l.b16 %v74
  %v163 = vunpack.c.l.b16 %v75
  %v164 = vunpack.c.h.b16 %v75
  %v165 = vunpack.c.l.b16 %v76
  %v166 = vunpack.c.l.b16 %v77
  %v167 = vunpack.c.h.b16 %v77
  %v168 = vunpack.c.l.b16 %v78
  %v169 = vunpack.c.l.b16 %v79
  %v170 = vunpack.c.h.b16 %v79
  %v171 = vunpack.c.l.b16 %v80
  %v172 = vunpack.c.l.b16 %v81
  %v173 = vunpack.c.h.b16 %v81
  %v174 = vunpack.c.l.b16 %v82
  %v175 = vunpack.c.l.b16 %v83
  %v176 = vunpack.c.h.b16 %v83
  %v177 = vunpack.c.l.b16 %v84
  %v178 = vunpack.c.l.b16 %v85
  %v179 = vunpack.c.h.b16 %v85
  %v180 = vunpack.c.l.b16 %v86
  %v181 = vunpack.c.l.b16 %v87
  %v182 = vunpack.c.h.b16 %v87
  %v183 = vunpack.c.l.b16 %v88
  %v184 = vunpack.c.l.b16 %v89
  %v185 = vunpack.c.h.b16 %v89
  %v186 = vunpack.c.l.b16 %v90
  %v187 = vunpack.c.l.b16 %v91
  %v188 = vunpack.c.h.b16 %v91
  %v189 = vunpack.c.l.b16 %v92
  %v190 = vpack.c.b16 %v145, %v142
  %v191 = vpack.c.b16 %v146, %v143
  %v192 = vpack.c.b16 %v147, %v144
  %v193 = vpack.c.b16 %v151, %v148
  %v194 = vpack.c.b16 %v152, %v149
  %v195 = vpack.c.b16 %v153, %v150
  %v196 = vpack.c.b16 %v157, %v154
  %v197 = vpack.c.b16 %v158, %v155
  %v198 = vpack.c.b16 %v159, %v156
  %v199 = vpack.c.b16 %v163, %v160
  %v200 = vpack.c.b16 %v164, %v161
  %v201 = vpack.c.b16 %v165, %v162
  %v202 = vpack.c.b16 %v169, %v166
  %v203 = vpack.c.b16 %v170, %v167
  %v204 = vpack.c.b16 %v171, %v168
  %v205 = vpack.c.b16 %v175, %v172
  %v206 = vpack.c.b16 %v176, %v173
  %v207 = vpack.c.b16 %v177, %v174
  %v208 = vpack.c.b16 %v181, %v178
  %v209 = vpack.c.b16 %v182, %v179
  %v210 = vpack.c.b16 %v183, %v180
  %v211 = vpack.c.b16 %v187, %v184
  %v212 = vpack.c.b16 %v188, %v185
  %v213 = vpack.c.b16 %v189, %v186
  %238 = vmatprep.subr.bf16.mxu0 %v191
  %239 = vmatpush1.bf16.msra.mxu0 %v190
  %240 = vmatprep.subr.bf16.mxu0 %v194
  %241 = vmatpush1.bf16.msra.mxu0 %v193
  %242 = vmatprep.subr.bf16.mxu0 %v197
  %243 = vmatpush1.bf16.msra.mxu0 %v196
  %244 = vmatprep.subr.bf16.mxu0 %v200
  %245 = vmatpush1.bf16.msra.mxu0 %v199
  %246 = vmatprep.subr.bf16.mxu0 %v203
  %247 = vmatpush1.bf16.msra.mxu0 %v202
  %248 = vmatprep.subr.bf16.mxu0 %v206
  %249 = vmatpush1.bf16.msra.mxu0 %v205
  %250 = vmatprep.subr.bf16.mxu0 %v209
  %251 = vmatpush1.bf16.msra.mxu0 %v208
  %252 = vmatprep.subr.bf16.mxu0 %v212
  %253 = vmatpush1.bf16.msra.mxu0 %v211
  %254 = vmatprep.subr.bf16.mxu0 0
  %255 = vmatpush1.bf16.msra.mxu0 0
  %256 = vmatprep.subr.bf16.mxu0 0
  %257 = vmatpush1.bf16.msra.mxu0 0
  %258 = vmatprep.subr.bf16.mxu0 0
  %259 = vmatpush1.bf16.msra.mxu0 0
  %260 = vmatprep.subr.bf16.mxu0 0
  %261 = vmatpush1.bf16.msra.mxu0 0
  %262 = vmatprep.subr.bf16.mxu0 0
  %263 = vmatpush1.bf16.msra.mxu0 0
  %264 = vmatprep.subr.bf16.mxu0 0
  %265 = vmatpush1.bf16.msra.mxu0 0
  %266 = vmatprep.subr.bf16.mxu0 0
  %267 = vmatpush1.bf16.msra.mxu0 0
  %268 = vmatprep.subr.bf16.mxu0 0
  %269 = vmatpush1.bf16.msra.mxu0 0
  %270 = vmatprep.mubr.bf16.mxu0 0
  %271 = vmatmul.mubr.bf16.gmra.mrb[0].mxu0 0
  %v272 = vpop.f32.mrb[0].mxu0
  %v273 = vadd.f32 %v98, %v272
  %v274 = vpop.f32.mrb[0].mxu0
  %v275 = vadd.f32 %v102, %v274
  %v276 = vpop.f32.mrb[0].mxu0
  %v277 = vpop.f32.mrb[0].mxu0
  %278 = vdwg.mxu0
  %279 = vmatprep.subr.bf16.mxu0 0
  %280 = vmatpush1.bf16.msra.mxu0 %v192
  %281 = vmatprep.subr.bf16.mxu0 0
  %282 = vmatpush1.bf16.msra.mxu0 %v195
  %283 = vmatprep.subr.bf16.mxu0 0
  %284 = vmatpush1.bf16.msra.mxu0 %v198
  %285 = vmatprep.subr.bf16.mxu0 0
  %286 = vmatpush1.bf16.msra.mxu0 %v201
  %287 = vmatprep.subr.bf16.mxu0 0
  %288 = vmatpush1.bf16.msra.mxu0 %v204
  %289 = vmatprep.subr.bf16.mxu0 0
  %290 = vmatpush1.bf16.msra.mxu0 %v207
  %291 = vmatprep.subr.bf16.mxu0 0
  %292 = vmatpush1.bf16.msra.mxu0 %v210
  %293 = vmatprep.subr.bf16.mxu0 0
  %294 = vmatpush1.bf16.msra.mxu0 %v213
  %295 = vmatprep.subr.bf16.mxu0 0
  %296 = vmatpush1.bf16.msra.mxu0 0
  %297 = vmatprep.subr.bf16.mxu0 0
  %298 = vmatpush1.bf16.msra.mxu0 0
  %299 = vmatprep.subr.bf16.mxu0 0
  %300 = vmatpush1.bf16.msra.mxu0 0
  %301 = vmatprep.subr.bf16.mxu0 0
  %302 = vmatpush1.bf16.msra.mxu0 0
  %303 = vmatprep.subr.bf16.mxu0 0
  %304 = vmatpush1.bf16.msra.mxu0 0
  %305 = vmatprep.subr.bf16.mxu0 0
  %306 = vmatpush1.bf16.msra.mxu0 0
  %307 = vmatprep.subr.bf16.mxu0 0
  %308 = vmatpush1.bf16.msra.mxu0 0
  %309 = vmatprep.subr.bf16.mxu0 0
  %310 = vmatpush1.bf16.msra.mxu0 0
  %311 = vmatprep.mubr.bf16.mxu0 0
  %312 = vmatmul.mubr.bf16.gmra.mrb[0].mxu0 0
  %v313 = vpop.f32.mrb[0].mxu0
  %v314 = vadd.f32 %v106, %v313
  %v315 = vpop.f32.mrb[0].mxu0
  %v316 = vpop.f32.mrb[0].mxu0
  %v317 = vpop.f32.mrb[0].mxu0
  %318 = vdwg.mxu0
  %v320 = vcombine.high %v273, %v273
  %v322 = vunpack.c.l.s4 1966171168
  %v323 = vunpack.c.0.s8 %v322
  %v324 = vlaneseq
  %v325 = vshrl.u32 %v324, 7
  %v326 = vsub.s32 %v323, %v325
  %v327 = vrot.slane %v273, %v326
  %v329 = vunpack.c.l.s4 1966171168
  %v330 = vunpack.c.0.s8 %v329
  %v331 = vlaneseq
  %v332 = vshrl.u32 %v331, 7
  %v333 = vsub.s32 %v330, %v332
  %v334 = vrot.slane %v320, %v333
  %v335 = vcombine.high %v327, %v327
  %v336 = vcombine.high %v334, %v334
  %v338 = vunpack.c.l.s4 1966171168
  %v339 = vunpack.c.0.s8 %v338
  %v340 = vlaneseq
  %v341 = vshrl.u32 %v340, 7
  %v342 = vsub.s32 %v339, %v341
  %v343 = vrot.slane %v327, %v342
  %v345 = vunpack.c.l.s4 1966171168
  %v346 = vunpack.c.0.s8 %v345
  %v347 = vlaneseq
  %v348 = vshrl.u32 %v347, 7
  %v349 = vsub.s32 %v346, %v348
  %v350 = vrot.slane %v334, %v349
  %v352 = vunpack.c.l.s4 1966171168
  %v353 = vunpack.c.0.s8 %v352
  %v354 = vlaneseq
  %v355 = vshrl.u32 %v354, 7
  %v356 = vsub.s32 %v353, %v355
  %v357 = vrot.slane %v335, %v356
  %v359 = vunpack.c.l.s4 1966171168
  %v360 = vunpack.c.0.s8 %v359
  %v361 = vlaneseq
  %v362 = vshrl.u32 %v361, 7
  %v363 = vsub.s32 %v360, %v362
  %v364 = vrot.slane %v336, %v363
  %v365 = vcombine.high %v343, %v343
  %v366 = vcombine.high %v350, %v350
  %v367 = vcombine.high %v357, %v357
  %v368 = vcombine.high %v364, %v364
  %v377 = vadd.f32 %v46, %v343
  %v378 = vadd.f32 %v48, %v357
  %v379 = vadd.f32 %v50, %v365
  %v380 = vadd.f32 %v52, %v367
  %v381 = vadd.f32 %v54, %v350
  %v382 = vadd.f32 %v56, %v364
  %v383 = vadd.f32 %v58, %v366
  %v384 = vadd.f32 %v60, %v368
  %v385 = vxor.u32 %v377, 2147483648
  %v386 = vxor.u32 %v378, 2147483648
  %v387 = vxor.u32 %v379, 2147483648
  %v388 = vxor.u32 %v380, 2147483648
  %v389 = vxor.u32 %v381, 2147483648
  %v390 = vxor.u32 %v382, 2147483648
  %v391 = vxor.u32 %v383, 2147483648
  %v392 = vxor.u32 %v384, 2147483648
  %v393 = vmul.f32 %v385, 1.442695
  %v394 = vpow.pop %v393
  %v395 = vmul.f32 %v386, 1.442695
  %v396 = vpow.pop %v395
  %v397 = vmul.f32 %v387, 1.442695
  %v398 = vpow.pop %v397
  %v399 = vmul.f32 %v388, 1.442695
  %v400 = vpow.pop %v399
  %v401 = vmul.f32 %v389, 1.442695
  %v402 = vpow.pop %v401
  %v403 = vmul.f32 %v390, 1.442695
  %v404 = vpow.pop %v403
  %v405 = vmul.f32 %v391, 1.442695
  %v406 = vpow.pop %v405
  %v407 = vmul.f32 %v392, 1.442695
  %v408 = vpow.pop %v407
  %v409 = vadd.f32 %v394, 1.0
  %v410 = vadd.f32 %v396, 1.0
  %v411 = vadd.f32 %v398, 1.0
  %v412 = vadd.f32 %v400, 1.0
  %v413 = vadd.f32 %v402, 1.0
  %v414 = vadd.f32 %v404, 1.0
  %v415 = vadd.f32 %v406, 1.0
  %v416 = vadd.f32 %v408, 1.0
  %v417 = vrcp.pop %v409
  %v418 = vmul.f32 1.0, %v417
  %v419 = vrcp.pop %v410
  %v420 = vmul.f32 1.0, %v419
  %v421 = vrcp.pop %v411
  %v422 = vmul.f32 1.0, %v421
  %v423 = vrcp.pop %v412
  %v424 = vmul.f32 1.0, %v423
  %v425 = vrcp.pop %v413
  %v426 = vmul.f32 1.0, %v425
  %v427 = vrcp.pop %v414
  %v428 = vmul.f32 1.0, %v427
  %v429 = vrcp.pop %v415
  %v430 = vmul.f32 1.0, %v429
  %v431 = vrcp.pop %v416
  %v432 = vmul.f32 1.0, %v431
  %v441 = vrot.slane %v46, 1
  %v442 = vrot.slane %v48, 1
  %v443 = vrot.slane %v50, 1
  %v444 = vrot.slane %v52, 1
  %v445 = vrot.slane %v54, 1
  %v446 = vrot.slane %v56, 1
  %v447 = vrot.slane %v58, 1
  %v448 = vrot.slane %v60, 1
  %v458 = vcombine.high %v275, %v275
  %v460 = vunpack.c.l.s4 1966171168
  %v461 = vunpack.c.0.s8 %v460
  %v462 = vlaneseq
  %v463 = vshrl.u32 %v462, 7
  %v464 = vsub.s32 %v461, %v463
  %v465 = vrot.slane %v275, %v464
  %v467 = vunpack.c.l.s4 1966171168
  %v468 = vunpack.c.0.s8 %v467
  %v469 = vlaneseq
  %v470 = vshrl.u32 %v469, 7
  %v471 = vsub.s32 %v468, %v470
  %v472 = vrot.slane %v458, %v471
  %v473 = vcombine.high %v465, %v465
  %v474 = vcombine.high %v472, %v472
  %v476 = vunpack.c.l.s4 1966171168
  %v477 = vunpack.c.0.s8 %v476
  %v478 = vlaneseq
  %v479 = vshrl.u32 %v478, 7
  %v480 = vsub.s32 %v477, %v479
  %v481 = vrot.slane %v465, %v480
  %v483 = vunpack.c.l.s4 1966171168
  %v484 = vunpack.c.0.s8 %v483
  %v485 = vlaneseq
  %v486 = vshrl.u32 %v485, 7
  %v487 = vsub.s32 %v484, %v486
  %v488 = vrot.slane %v472, %v487
  %v490 = vunpack.c.l.s4 1966171168
  %v491 = vunpack.c.0.s8 %v490
  %v492 = vlaneseq
  %v493 = vshrl.u32 %v492, 7
  %v494 = vsub.s32 %v491, %v493
  %v495 = vrot.slane %v473, %v494
  %v497 = vunpack.c.l.s4 1966171168
  %v498 = vunpack.c.0.s8 %v497
  %v499 = vlaneseq
  %v500 = vshrl.u32 %v499, 7
  %v501 = vsub.s32 %v498, %v500
  %v502 = vrot.slane %v474, %v501
  %v503 = vcombine.high %v481, %v481
  %v504 = vcombine.high %v488, %v488
  %v505 = vcombine.high %v495, %v495
  %v506 = vcombine.high %v502, %v502
  %v515 = vadd.f32 %v441, %v481
  %v516 = vadd.f32 %v442, %v495
  %v517 = vadd.f32 %v443, %v503
  %v518 = vadd.f32 %v444, %v505
  %v519 = vadd.f32 %v445, %v488
  %v520 = vadd.f32 %v446, %v502
  %v521 = vadd.f32 %v447, %v504
  %v522 = vadd.f32 %v448, %v506
  %v523 = vxor.u32 %v515, 2147483648
  %v524 = vxor.u32 %v516, 2147483648
  %v525 = vxor.u32 %v517, 2147483648
  %v526 = vxor.u32 %v518, 2147483648
  %v527 = vxor.u32 %v519, 2147483648
  %v528 = vxor.u32 %v520, 2147483648
  %v529 = vxor.u32 %v521, 2147483648
  %v530 = vxor.u32 %v522, 2147483648
  %v531 = vmul.f32 %v523, 1.442695
  %v532 = vpow.pop %v531
  %v533 = vmul.f32 %v524, 1.442695
  %v534 = vpow.pop %v533
  %v535 = vmul.f32 %v525, 1.442695
  %v536 = vpow.pop %v535
  %v537 = vmul.f32 %v526, 1.442695
  %v538 = vpow.pop %v537
  %v539 = vmul.f32 %v527, 1.442695
  %v540 = vpow.pop %v539
  %v541 = vmul.f32 %v528, 1.442695
  %v542 = vpow.pop %v541
  %v543 = vmul.f32 %v529, 1.442695
  %v544 = vpow.pop %v543
  %v545 = vmul.f32 %v530, 1.442695
  %v546 = vpow.pop %v545
  %v547 = vadd.f32 %v532, 1.0
  %v548 = vadd.f32 %v534, 1.0
  %v549 = vadd.f32 %v536, 1.0
  %v550 = vadd.f32 %v538, 1.0
  %v551 = vadd.f32 %v540, 1.0
  %v552 = vadd.f32 %v542, 1.0
  %v553 = vadd.f32 %v544, 1.0
  %v554 = vadd.f32 %v546, 1.0
  %v555 = vrcp.pop %v547
  %v556 = vmul.f32 1.0, %v555
  %v557 = vrcp.pop %v548
  %v558 = vmul.f32 1.0, %v557
  %v559 = vrcp.pop %v549
  %v560 = vmul.f32 1.0, %v559
  %v561 = vrcp.pop %v550
  %v562 = vmul.f32 1.0, %v561
  %v563 = vrcp.pop %v551
  %v564 = vmul.f32 1.0, %v563
  %v565 = vrcp.pop %v552
  %v566 = vmul.f32 1.0, %v565
  %v567 = vrcp.pop %v553
  %v568 = vmul.f32 1.0, %v567
  %v569 = vrcp.pop %v554
  %v570 = vmul.f32 1.0, %v569
  %v572 = vcombine.high %v314, %v314
  %v574 = vunpack.c.l.s4 1966171168
  %v575 = vunpack.c.0.s8 %v574
  %v576 = vlaneseq
  %v577 = vshrl.u32 %v576, 7
  %v578 = vsub.s32 %v575, %v577
  %v579 = vrot.slane %v314, %v578
  %v581 = vunpack.c.l.s4 1966171168
  %v582 = vunpack.c.0.s8 %v581
  %v583 = vlaneseq
  %v584 = vshrl.u32 %v583, 7
  %v585 = vsub.s32 %v582, %v584
  %v586 = vrot.slane %v572, %v585
  %v587 = vcombine.high %v579, %v579
  %v588 = vcombine.high %v586, %v586
  %v590 = vunpack.c.l.s4 1966171168
  %v591 = vunpack.c.0.s8 %v590
  %v592 = vlaneseq
  %v593 = vshrl.u32 %v592, 7
  %v594 = vsub.s32 %v591, %v593
  %v595 = vrot.slane %v579, %v594
  %v597 = vunpack.c.l.s4 1966171168
  %v598 = vunpack.c.0.s8 %v597
  %v599 = vlaneseq
  %v600 = vshrl.u32 %v599, 7
  %v601 = vsub.s32 %v598, %v600
  %v602 = vrot.slane %v586, %v601
  %v604 = vunpack.c.l.s4 1966171168
  %v605 = vunpack.c.0.s8 %v604
  %v606 = vlaneseq
  %v607 = vshrl.u32 %v606, 7
  %v608 = vsub.s32 %v605, %v607
  %v609 = vrot.slane %v587, %v608
  %v611 = vunpack.c.l.s4 1966171168
  %v612 = vunpack.c.0.s8 %v611
  %v613 = vlaneseq
  %v614 = vshrl.u32 %v613, 7
  %v615 = vsub.s32 %v612, %v614
  %v616 = vrot.slane %v588, %v615
  %v617 = vcombine.high %v595, %v595
  %v618 = vcombine.high %v602, %v602
  %v619 = vcombine.high %v609, %v609
  %v620 = vcombine.high %v616, %v616
  %v629 = vmul.f32 %v418, %v595
  %v630 = vmul.f32 %v420, %v609
  %v631 = vmul.f32 %v422, %v617
  %v632 = vmul.f32 %v424, %v619
  %v633 = vmul.f32 %v426, %v602
  %v634 = vmul.f32 %v428, %v616
  %v635 = vmul.f32 %v430, %v618
  %v636 = vmul.f32 %v432, %v620
  %v637 = vrot.slane %v46, 2
  %v638 = vrot.slane %v48, 2
  %v639 = vrot.slane %v50, 2
  %v640 = vrot.slane %v52, 2
  %v641 = vrot.slane %v54, 2
  %v642 = vrot.slane %v56, 2
  %v643 = vrot.slane %v58, 2
  %v644 = vrot.slane %v60, 2
  %v653 = vadd.f32 %v637, %v629
  %v654 = vadd.f32 %v638, %v630
  %v655 = vadd.f32 %v639, %v631
  %v656 = vadd.f32 %v640, %v632
  %v657 = vadd.f32 %v641, %v633
  %v658 = vadd.f32 %v642, %v634
  %v659 = vadd.f32 %v643, %v635
  %v660 = vadd.f32 %v644, %v636
  %v661 = vtanh.pop %v653
  %v662 = vtanh.pop %v654
  %v663 = vtanh.pop %v655
  %v664 = vtanh.pop %v656
  %v665 = vtanh.pop %v657
  %v666 = vtanh.pop %v658
  %v667 = vtanh.pop %v659
  %v668 = vtanh.pop %v660
  %v669 = vsub.f32 1.0, %v556
  %v670 = vsub.f32 1.0, %v558
  %v671 = vsub.f32 1.0, %v560
  %v672 = vsub.f32 1.0, %v562
  %v673 = vsub.f32 1.0, %v564
  %v674 = vsub.f32 1.0, %v566
  %v675 = vsub.f32 1.0, %v568
  %v676 = vsub.f32 1.0, %v570
  %v677 = vmul.f32 %v669, %v661
  %v678 = vmul.f32 %v670, %v662
  %v679 = vmul.f32 %v671, %v663
  %v680 = vmul.f32 %v672, %v664
  %v681 = vmul.f32 %v673, %v665
  %v682 = vmul.f32 %v674, %v666
  %v683 = vmul.f32 %v675, %v667
  %v684 = vmul.f32 %v676, %v668
  %v685 = vmul.f32 %v556, 0.0
  %v686 = vmul.f32 %v558, 0.0
  %v687 = vmul.f32 %v560, 0.0
  %v688 = vmul.f32 %v562, 0.0
  %v689 = vmul.f32 %v564, 0.0
  %v690 = vmul.f32 %v566, 0.0
  %v691 = vmul.f32 %v568, 0.0
  %v692 = vmul.f32 %v570, 0.0
  %v693 = vadd.f32 %v677, %v685
  %v694 = vadd.f32 %v678, %v686
  %v695 = vadd.f32 %v679, %v687
  %v696 = vadd.f32 %v680, %v688
  %v697 = vadd.f32 %v681, %v689
  %v698 = vadd.f32 %v682, %v690
  %v699 = vadd.f32 %v683, %v691
  %v700 = vadd.f32 %v684, %v692
  %v701 = vsel %vm45, 1, 0
  %702 = vset.pattern.permute.xlu0 0
  %703 = vperm.xlu0 %702, %v701
  %v704 = vpop.permute.xlu0 %703
  %vm705 = vcmp.eq.s32.totalorder %v704, 1
  %v714 = vcombine.low %v693, %v694
  %v715 = vcombine.low %v695, %v696
  %v716 = vcombine.low %v697, %v698
  %v717 = vcombine.low %v699, %v700
  %v719 = vunpack.c.l.s4 1966171168
  %v720 = vunpack.c.0.s8 %v719
  %v721 = vlaneseq
  %v722 = vshrl.u32 %v721, 7
  %v723 = vsub.s32 %v720, %v722
  %v724 = vrot.slane %v714, %v723
  %v726 = vunpack.c.l.s4 1966171168
  %v727 = vunpack.c.0.s8 %v726
  %v728 = vlaneseq
  %v729 = vshrl.u32 %v728, 7
  %v730 = vsub.s32 %v727, %v729
  %v731 = vrot.slane %v715, %v730
  %v733 = vunpack.c.l.s4 1966171168
  %v734 = vunpack.c.0.s8 %v733
  %v735 = vlaneseq
  %v736 = vshrl.u32 %v735, 7
  %v737 = vsub.s32 %v734, %v736
  %v738 = vrot.slane %v716, %v737
  %v740 = vunpack.c.l.s4 1966171168
  %v741 = vunpack.c.0.s8 %v740
  %v742 = vlaneseq
  %v743 = vshrl.u32 %v742, 7
  %v744 = vsub.s32 %v741, %v743
  %v745 = vrot.slane %v717, %v744
  %v746 = vcombine.low %v724, %v731
  %v747 = vcombine.low %v738, %v745
  %v749 = vunpack.c.l.s4 1966171168
  %v750 = vunpack.c.0.s8 %v749
  %v751 = vlaneseq
  %v752 = vshrl.u32 %v751, 7
  %v753 = vsub.s32 %v750, %v752
  %v754 = vrot.slane %v746, %v753
  %v756 = vunpack.c.l.s4 1966171168
  %v757 = vunpack.c.0.s8 %v756
  %v758 = vlaneseq
  %v759 = vshrl.u32 %v758, 7
  %v760 = vsub.s32 %v757, %v759
  %v761 = vrot.slane %v747, %v760
  %v762 = vcombine.low %v754, %v761
  %v764 = vsel %vm705, %v762, 0.0
  %v766 = vcombine.high %v764, %v764
  %v768 = vunpack.c.l.s4 1966171168
  %v769 = vunpack.c.0.s8 %v768
  %v770 = vlaneseq
  %v771 = vshrl.u32 %v770, 7
  %v772 = vsub.s32 %v769, %v771
  %v773 = vrot.slane %v764, %v772
  %v775 = vunpack.c.l.s4 1966171168
  %v776 = vunpack.c.0.s8 %v775
  %v777 = vlaneseq
  %v778 = vshrl.u32 %v777, 7
  %v779 = vsub.s32 %v776, %v778
  %v780 = vrot.slane %v766, %v779
  %v781 = vcombine.high %v773, %v773
  %v782 = vcombine.high %v780, %v780
  %v784 = vunpack.c.l.s4 1966171168
  %v785 = vunpack.c.0.s8 %v784
  %v786 = vlaneseq
  %v787 = vshrl.u32 %v786, 7
  %v788 = vsub.s32 %v785, %v787
  %v789 = vrot.slane %v773, %v788
  %v791 = vunpack.c.l.s4 1966171168
  %v792 = vunpack.c.0.s8 %v791
  %v793 = vlaneseq
  %v794 = vshrl.u32 %v793, 7
  %v795 = vsub.s32 %v792, %v794
  %v796 = vrot.slane %v780, %v795
  %v798 = vunpack.c.l.s4 1966171168
  %v799 = vunpack.c.0.s8 %v798
  %v800 = vlaneseq
  %v801 = vshrl.u32 %v800, 7
  %v802 = vsub.s32 %v799, %v801
  %v803 = vrot.slane %v781, %v802
  %v805 = vunpack.c.l.s4 1966171168
  %v806 = vunpack.c.0.s8 %v805
  %v807 = vlaneseq
  %v808 = vshrl.u32 %v807, 7
  %v809 = vsub.s32 %v806, %v808
  %v810 = vrot.slane %v782, %v809
  %v811 = vcombine.high %v789, %v789
  %v812 = vcombine.high %v796, %v796
  %v813 = vcombine.high %v803, %v803
  %v814 = vcombine.high %v810, %v810
  %823 = vst [vmem:[#allocation2] sm:$0x1] %v789
  %824 = vst [vmem:[#allocation2 + $0x8] sm:$0x1] %v803
  %825 = vst [vmem:[#allocation2 + $0x10] sm:$0x1] %v811
  %826 = vst [vmem:[#allocation2 + $0x18] sm:$0x1] %v813
  %827 = vst [vmem:[#allocation2 + $0x20] sm:$0x1] %v796
  %828 = vst [vmem:[#allocation2 + $0x28] sm:$0x1] %v810
  %829 = vst [vmem:[#allocation2 + $0x30] sm:$0x1] %v812
  %830 = vst [vmem:[#allocation2 + $0x38] sm:$0x1] %v814
  %s831 = scalar_lea.vmem %s0, 1
  %v832 = vld [vmem:[%s831] ss:$8 sm:$0x7]
  %s833 = scalar_lea.vmem %s0, 25
  %v834 = vld [vmem:[%s833] ss:$8 sm:$0x7]
  %s835 = scalar_lea.vmem %s0, 49
  %v836 = vld [vmem:[%s835] ss:$8 sm:$0x7]
  %s837 = scalar_lea.vmem %s0, 73
  %v838 = vld [vmem:[%s837] ss:$8 sm:$0x7]
  %s839 = scalar_lea.vmem %s0, 97
  %v840 = vld [vmem:[%s839] ss:$8 sm:$0x7]
  %s841 = scalar_lea.vmem %s0, 121
  %v842 = vld [vmem:[%s841] ss:$8 sm:$0x7]
  %s843 = scalar_lea.vmem %s0, 145
  %v844 = vld [vmem:[%s843] ss:$8 sm:$0x7]
  %s845 = scalar_lea.vmem %s0, 169
  %v846 = vld [vmem:[%s845] ss:$8 sm:$0x7]
  %v847 = vpack.c.bf16 %v764, %v764
  %v848 = vld [vmem:[%s3] sm:$0xff]
  %v849 = vld [vmem:[%s3 + $0x8] sm:$0xf]
  %v850 = vld [vmem:[%s3 + $0xc] sm:$0xff]
  %v851 = vld [vmem:[%s3 + $0x14] sm:$0xf]
  %v852 = vld [vmem:[%s3 + $0x18] sm:$0xff]
  %v853 = vld [vmem:[%s3 + $0x20] sm:$0xf]
  %v854 = vld [vmem:[%s3 + $0x24] sm:$0xff]
  %v855 = vld [vmem:[%s3 + $0x2c] sm:$0xf]
  %v856 = vld [vmem:[%s3 + $0x30] sm:$0xff]
  %v857 = vld [vmem:[%s3 + $0x38] sm:$0xf]
  %v858 = vld [vmem:[%s3 + $0x3c] sm:$0xff]
  %v859 = vld [vmem:[%s3 + $0x44] sm:$0xf]
  %v860 = vld [vmem:[%s3 + $0x48] sm:$0xff]
  %v861 = vld [vmem:[%s3 + $0x50] sm:$0xf]
  %v862 = vld [vmem:[%s3 + $0x54] sm:$0xff]
  %v863 = vld [vmem:[%s3 + $0x5c] sm:$0xf]
  %v864 = vld [vmem:[%s3 + $0x60] sm:$0xff]
  %v865 = vld [vmem:[%s3 + $0x68] sm:$0xf]
  %v866 = vld [vmem:[%s3 + $0x6c] sm:$0xff]
  %v867 = vld [vmem:[%s3 + $0x74] sm:$0xf]
  %v868 = vld [vmem:[%s3 + $0x78] sm:$0xff]
  %v869 = vld [vmem:[%s3 + $0x80] sm:$0xf]
  %v870 = vld [vmem:[%s3 + $0x84] sm:$0xff]
  %v871 = vld [vmem:[%s3 + $0x8c] sm:$0xf]
  %v872 = vld [vmem:[%s3 + $0x90] sm:$0xff]
  %v873 = vld [vmem:[%s3 + $0x98] sm:$0xf]
  %v874 = vld [vmem:[%s3 + $0x9c] sm:$0xff]
  %v875 = vld [vmem:[%s3 + $0xa4] sm:$0xf]
  %v876 = vld [vmem:[%s3 + $0xa8] sm:$0xff]
  %v877 = vld [vmem:[%s3 + $0xb0] sm:$0xf]
  %v878 = vld [vmem:[%s3 + $0xb4] sm:$0xff]
  %v879 = vld [vmem:[%s3 + $0xbc] sm:$0xf]
  %v880 = vld [vmem:[%s4] sm:$0x7]
  %v882 = vlaneseq
  %v883 = vshrl.u32 %v882, 7
  %v884 = vsub.s32 0, %v883
  %v885 = vrot.slane %v880, %v884
  %v886 = vlaneseq
  %v887 = vshrl.u32 %v886, 7
  %v888 = vsub.s32 1, %v887
  %v889 = vrot.slane %v880, %v888
  %v890 = vlaneseq
  %v891 = vshrl.u32 %v890, 7
  %v892 = vsub.s32 2, %v891
  %v893 = vrot.slane %v880, %v892
  %v929 = vunpack.c.l.b16 %v848
  %v930 = vunpack.c.h.b16 %v848
  %v931 = vunpack.c.l.b16 %v849
  %v932 = vunpack.c.l.b16 %v850
  %v933 = vunpack.c.h.b16 %v850
  %v934 = vunpack.c.l.b16 %v851
  %v935 = vunpack.c.l.b16 %v852
  %v936 = vunpack.c.h.b16 %v852
  %v937 = vunpack.c.l.b16 %v853
  %v938 = vunpack.c.l.b16 %v854
  %v939 = vunpack.c.h.b16 %v854
  %v940 = vunpack.c.l.b16 %v855
  %v941 = vunpack.c.l.b16 %v856
  %v942 = vunpack.c.h.b16 %v856
  %v943 = vunpack.c.l.b16 %v857
  %v944 = vunpack.c.l.b16 %v858
  %v945 = vunpack.c.h.b16 %v858
  %v946 = vunpack.c.l.b16 %v859
  %v947 = vunpack.c.l.b16 %v860
  %v948 = vunpack.c.h.b16 %v860
  %v949 = vunpack.c.l.b16 %v861
  %v950 = vunpack.c.l.b16 %v862
  %v951 = vunpack.c.h.b16 %v862
  %v952 = vunpack.c.l.b16 %v863
  %v953 = vunpack.c.l.b16 %v864
  %v954 = vunpack.c.h.b16 %v864
  %v955 = vunpack.c.l.b16 %v865
  %v956 = vunpack.c.l.b16 %v866
  %v957 = vunpack.c.h.b16 %v866
  %v958 = vunpack.c.l.b16 %v867
  %v959 = vunpack.c.l.b16 %v868
  %v960 = vunpack.c.h.b16 %v868
  %v961 = vunpack.c.l.b16 %v869
  %v962 = vunpack.c.l.b16 %v870
  %v963 = vunpack.c.h.b16 %v870
  %v964 = vunpack.c.l.b16 %v871
  %v965 = vunpack.c.l.b16 %v872
  %v966 = vunpack.c.h.b16 %v872
  %v967 = vunpack.c.l.b16 %v873
  %v968 = vunpack.c.l.b16 %v874
  %v969 = vunpack.c.h.b16 %v874
  %v970 = vunpack.c.l.b16 %v875
  %v971 = vunpack.c.l.b16 %v876
  %v972 = vunpack.c.h.b16 %v876
  %v973 = vunpack.c.l.b16 %v877
  %v974 = vunpack.c.l.b16 %v878
  %v975 = vunpack.c.h.b16 %v878
  %v976 = vunpack.c.l.b16 %v879
  %v977 = vpack.c.b16 %v932, %v929
  %v978 = vpack.c.b16 %v933, %v930
  %v979 = vpack.c.b16 %v934, %v931
  %v980 = vpack.c.b16 %v938, %v935
  %v981 = vpack.c.b16 %v939, %v936
  %v982 = vpack.c.b16 %v940, %v937
  %v983 = vpack.c.b16 %v944, %v941
  %v984 = vpack.c.b16 %v945, %v942
  %v985 = vpack.c.b16 %v946, %v943
  %v986 = vpack.c.b16 %v950, %v947
  %v987 = vpack.c.b16 %v951, %v948
  %v988 = vpack.c.b16 %v952, %v949
  %v989 = vpack.c.b16 %v956, %v953
  %v990 = vpack.c.b16 %v957, %v954
  %v991 = vpack.c.b16 %v958, %v955
  %v992 = vpack.c.b16 %v962, %v959
  %v993 = vpack.c.b16 %v963, %v960
  %v994 = vpack.c.b16 %v964, %v961
  %v995 = vpack.c.b16 %v968, %v965
  %v996 = vpack.c.b16 %v969, %v966
  %v997 = vpack.c.b16 %v970, %v967
  %v998 = vpack.c.b16 %v974, %v971
  %v999 = vpack.c.b16 %v975, %v972
  %v1000 = vpack.c.b16 %v976, %v973
  %1025 = vmatprep.subr.bf16.mxu0 %v978
  %1026 = vmatpush1.bf16.msra.mxu0 %v977
  %1027 = vmatprep.subr.bf16.mxu0 %v981
  %1028 = vmatpush1.bf16.msra.mxu0 %v980
  %1029 = vmatprep.subr.bf16.mxu0 %v984
  %1030 = vmatpush1.bf16.msra.mxu0 %v983
  %1031 = vmatprep.subr.bf16.mxu0 %v987
  %1032 = vmatpush1.bf16.msra.mxu0 %v986
  %1033 = vmatprep.subr.bf16.mxu0 %v990
  %1034 = vmatpush1.bf16.msra.mxu0 %v989
  %1035 = vmatprep.subr.bf16.mxu0 %v993
  %1036 = vmatpush1.bf16.msra.mxu0 %v992
  %1037 = vmatprep.subr.bf16.mxu0 %v996
  %1038 = vmatpush1.bf16.msra.mxu0 %v995
  %1039 = vmatprep.subr.bf16.mxu0 %v999
  %1040 = vmatpush1.bf16.msra.mxu0 %v998
  %1041 = vmatprep.subr.bf16.mxu0 0
  %1042 = vmatpush1.bf16.msra.mxu0 0
  %1043 = vmatprep.subr.bf16.mxu0 0
  %1044 = vmatpush1.bf16.msra.mxu0 0
  %1045 = vmatprep.subr.bf16.mxu0 0
  %1046 = vmatpush1.bf16.msra.mxu0 0
  %1047 = vmatprep.subr.bf16.mxu0 0
  %1048 = vmatpush1.bf16.msra.mxu0 0
  %1049 = vmatprep.subr.bf16.mxu0 0
  %1050 = vmatpush1.bf16.msra.mxu0 0
  %1051 = vmatprep.subr.bf16.mxu0 0
  %1052 = vmatpush1.bf16.msra.mxu0 0
  %1053 = vmatprep.subr.bf16.mxu0 0
  %1054 = vmatpush1.bf16.msra.mxu0 0
  %1055 = vmatprep.subr.bf16.mxu0 0
  %1056 = vmatpush1.bf16.msra.mxu0 0
  %1057 = vmatprep.mubr.bf16.mxu0 0
  %1058 = vmatmul.mubr.bf16.gmra.mrb[0].mxu0 %v847
  %v1059 = vpop.f32.mrb[0].mxu0
  %v1060 = vadd.f32 %v885, %v1059
  %v1061 = vpop.f32.mrb[0].mxu0
  %v1062 = vadd.f32 %v889, %v1061
  %v1063 = vpop.f32.mrb[0].mxu0
  %v1064 = vpop.f32.mrb[0].mxu0
  %1065 = vdwg.mxu0
  %1066 = vmatprep.subr.bf16.mxu0 0
  %1067 = vmatpush1.bf16.msra.mxu0 %v979
  %1068 = vmatprep.subr.bf16.mxu0 0
  %1069 = vmatpush1.bf16.msra.mxu0 %v982
  %1070 = vmatprep.subr.bf16.mxu0 0
  %1071 = vmatpush1.bf16.msra.mxu0 %v985
  %1072 = vmatprep.subr.bf16.mxu0 0
  %1073 = vmatpush1.bf16.msra.mxu0 %v988
  %1074 = vmatprep.subr.bf16.mxu0 0
  %1075 = vmatpush1.bf16.msra.mxu0 %v991
  %1076 = vmatprep.subr.bf16.mxu0 0
  %1077 = vmatpush1.bf16.msra.mxu0 %v994
  %1078 = vmatprep.subr.bf16.mxu0 0
  %1079 = vmatpush1.bf16.msra.mxu0 %v997
  %1080 = vmatprep.subr.bf16.mxu0 0
  %1081 = vmatpush1.bf16.msra.mxu0 %v1000
  %1082 = vmatprep.subr.bf16.mxu0 0
  %1083 = vmatpush1.bf16.msra.mxu0 0
  %1084 = vmatprep.subr.bf16.mxu0 0
  %1085 = vmatpush1.bf16.msra.mxu0 0
  %1086 = vmatprep.subr.bf16.mxu0 0
  %1087 = vmatpush1.bf16.msra.mxu0 0
  %1088 = vmatprep.subr.bf16.mxu0 0
  %1089 = vmatpush1.bf16.msra.mxu0 0
  %1090 = vmatprep.subr.bf16.mxu0 0
  %1091 = vmatpush1.bf16.msra.mxu0 0
  %1092 = vmatprep.subr.bf16.mxu0 0
  %1093 = vmatpush1.bf16.msra.mxu0 0
  %1094 = vmatprep.subr.bf16.mxu0 0
  %1095 = vmatpush1.bf16.msra.mxu0 0
  %1096 = vmatprep.subr.bf16.mxu0 0
  %1097 = vmatpush1.bf16.msra.mxu0 0
  %1098 = vmatprep.mubr.bf16.mxu0 0
  %1099 = vmatmul.mubr.bf16.gmra.mrb[0].mxu0 %v847
  %v1100 = vpop.f32.mrb[0].mxu0
  %v1101 = vadd.f32 %v893, %v1100
  %v1102 = vpop.f32.mrb[0].mxu0
  %v1103 = vpop.f32.mrb[0].mxu0
  %v1104 = vpop.f32.mrb[0].mxu0
  %1105 = vdwg.mxu0
  %v1107 = vcombine.high %v1060, %v1060
  %v1109 = vunpack.c.l.s4 1966171168
  %v1110 = vunpack.c.0.s8 %v1109
  %v1111 = vlaneseq
  %v1112 = vshrl.u32 %v1111, 7
  %v1113 = vsub.s32 %v1110, %v1112
  %v1114 = vrot.slane %v1060, %v1113
  %v1116 = vunpack.c.l.s4 1966171168
  %v1117 = vunpack.c.0.s8 %v1116
  %v1118 = vlaneseq
  %v1119 = vshrl.u32 %v1118, 7
  %v1120 = vsub.s32 %v1117, %v1119
  %v1121 = vrot.slane %v1107, %v1120
  %v1122 = vcombine.high %v1114, %v1114
  %v1123 = vcombine.high %v1121, %v1121
  %v1125 = vunpack.c.l.s4 1966171168
  %v1126 = vunpack.c.0.s8 %v1125
  %v1127 = vlaneseq
  %v1128 = vshrl.u32 %v1127, 7
  %v1129 = vsub.s32 %v1126, %v1128
  %v1130 = vrot.slane %v1114, %v1129
  %v1132 = vunpack.c.l.s4 1966171168
  %v1133 = vunpack.c.0.s8 %v1132
  %v1134 = vlaneseq
  %v1135 = vshrl.u32 %v1134, 7
  %v1136 = vsub.s32 %v1133, %v1135
  %v1137 = vrot.slane %v1121, %v1136
  %v1139 = vunpack.c.l.s4 1966171168
  %v1140 = vunpack.c.0.s8 %v1139
  %v1141 = vlaneseq
  %v1142 = vshrl.u32 %v1141, 7
  %v1143 = vsub.s32 %v1140, %v1142
  %v1144 = vrot.slane %v1122, %v1143
  %v1146 = vunpack.c.l.s4 1966171168
  %v1147 = vunpack.c.0.s8 %v1146
  %v1148 = vlaneseq
  %v1149 = vshrl.u32 %v1148, 7
  %v1150 = vsub.s32 %v1147, %v1149
  %v1151 = vrot.slane %v1123, %v1150
  %v1152 = vcombine.high %v1130, %v1130
  %v1153 = vcombine.high %v1137, %v1137
  %v1154 = vcombine.high %v1144, %v1144
  %v1155 = vcombine.high %v1151, %v1151
  %v1164 = vadd.f32 %v832, %v1130
  %v1165 = vadd.f32 %v834, %v1144
  %v1166 = vadd.f32 %v836, %v1152
  %v1167 = vadd.f32 %v838, %v1154
  %v1168 = vadd.f32 %v840, %v1137
  %v1169 = vadd.f32 %v842, %v1151
  %v1170 = vadd.f32 %v844, %v1153
  %v1171 = vadd.f32 %v846, %v1155
  %v1172 = vxor.u32 %v1164, 2147483648
  %v1173 = vxor.u32 %v1165, 2147483648
  %v1174 = vxor.u32 %v1166, 2147483648
  %v1175 = vxor.u32 %v1167, 2147483648
  %v1176 = vxor.u32 %v1168, 2147483648
  %v1177 = vxor.u32 %v1169, 2147483648
  %v1178 = vxor.u32 %v1170, 2147483648
  %v1179 = vxor.u32 %v1171, 2147483648
  %v1180 = vmul.f32 %v1172, 1.442695
  %v1181 = vpow.pop %v1180
  %v1182 = vmul.f32 %v1173, 1.442695
  %v1183 = vpow.pop %v1182
  %v1184 = vmul.f32 %v1174, 1.442695
  %v1185 = vpow.pop %v1184
  %v1186 = vmul.f32 %v1175, 1.442695
  %v1187 = vpow.pop %v1186
  %v1188 = vmul.f32 %v1176, 1.442695
  %v1189 = vpow.pop %v1188
  %v1190 = vmul.f32 %v1177, 1.442695
  %v1191 = vpow.pop %v1190
  %v1192 = vmul.f32 %v1178, 1.442695
  %v1193 = vpow.pop %v1192
  %v1194 = vmul.f32 %v1179, 1.442695
  %v1195 = vpow.pop %v1194
  %v1196 = vadd.f32 %v1181, 1.0
  %v1197 = vadd.f32 %v1183, 1.0
  %v1198 = vadd.f32 %v1185, 1.0
  %v1199 = vadd.f32 %v1187, 1.0
  %v1200 = vadd.f32 %v1189, 1.0
  %v1201 = vadd.f32 %v1191, 1.0
  %v1202 = vadd.f32 %v1193, 1.0
  %v1203 = vadd.f32 %v1195, 1.0
  %v1204 = vrcp.pop %v1196
  %v1205 = vmul.f32 1.0, %v1204
  %v1206 = vrcp.pop %v1197
  %v1207 = vmul.f32 1.0, %v1206
  %v1208 = vrcp.pop %v1198
  %v1209 = vmul.f32 1.0, %v1208
  %v1210 = vrcp.pop %v1199
  %v1211 = vmul.f32 1.0, %v1210
  %v1212 = vrcp.pop %v1200
  %v1213 = vmul.f32 1.0, %v1212
  %v1214 = vrcp.pop %v1201
  %v1215 = vmul.f32 1.0, %v1214
  %v1216 = vrcp.pop %v1202
  %v1217 = vmul.f32 1.0, %v1216
  %v1218 = vrcp.pop %v1203
  %v1219 = vmul.f32 1.0, %v1218
  %v1228 = vrot.slane %v832, 1
  %v1229 = vrot.slane %v834, 1
  %v1230 = vrot.slane %v836, 1
  %v1231 = vrot.slane %v838, 1
  %v1232 = vrot.slane %v840, 1
  %v1233 = vrot.slane %v842, 1
  %v1234 = vrot.slane %v844, 1
  %v1235 = vrot.slane %v846, 1
  %v1245 = vcombine.high %v1062, %v1062
  %v1247 = vunpack.c.l.s4 1966171168
  %v1248 = vunpack.c.0.s8 %v1247
  %v1249 = vlaneseq
  %v1250 = vshrl.u32 %v1249, 7
  %v1251 = vsub.s32 %v1248, %v1250
  %v1252 = vrot.slane %v1062, %v1251
  %v1254 = vunpack.c.l.s4 1966171168
  %v1255 = vunpack.c.0.s8 %v1254
  %v1256 = vlaneseq
  %v1257 = vshrl.u32 %v1256, 7
  %v1258 = vsub.s32 %v1255, %v1257
  %v1259 = vrot.slane %v1245, %v1258
  %v1260 = vcombine.high %v1252, %v1252
  %v1261 = vcombine.high %v1259, %v1259
  %v1263 = vunpack.c.l.s4 1966171168
  %v1264 = vunpack.c.0.s8 %v1263
  %v1265 = vlaneseq
  %v1266 = vshrl.u32 %v1265, 7
  %v1267 = vsub.s32 %v1264, %v1266
  %v1268 = vrot.slane %v1252, %v1267
  %v1270 = vunpack.c.l.s4 1966171168
  %v1271 = vunpack.c.0.s8 %v1270
  %v1272 = vlaneseq
  %v1273 = vshrl.u32 %v1272, 7
  %v1274 = vsub.s32 %v1271, %v1273
  %v1275 = vrot.slane %v1259, %v1274
  %v1277 = vunpack.c.l.s4 1966171168
  %v1278 = vunpack.c.0.s8 %v1277
  %v1279 = vlaneseq
  %v1280 = vshrl.u32 %v1279, 7
  %v1281 = vsub.s32 %v1278, %v1280
  %v1282 = vrot.slane %v1260, %v1281
  %v1284 = vunpack.c.l.s4 1966171168
  %v1285 = vunpack.c.0.s8 %v1284
  %v1286 = vlaneseq
  %v1287 = vshrl.u32 %v1286, 7
  %v1288 = vsub.s32 %v1285, %v1287
  %v1289 = vrot.slane %v1261, %v1288
  %v1290 = vcombine.high %v1268, %v1268
  %v1291 = vcombine.high %v1275, %v1275
  %v1292 = vcombine.high %v1282, %v1282
  %v1293 = vcombine.high %v1289, %v1289
  %v1302 = vadd.f32 %v1228, %v1268
  %v1303 = vadd.f32 %v1229, %v1282
  %v1304 = vadd.f32 %v1230, %v1290
  %v1305 = vadd.f32 %v1231, %v1292
  %v1306 = vadd.f32 %v1232, %v1275
  %v1307 = vadd.f32 %v1233, %v1289
  %v1308 = vadd.f32 %v1234, %v1291
  %v1309 = vadd.f32 %v1235, %v1293
  %v1310 = vxor.u32 %v1302, 2147483648
  %v1311 = vxor.u32 %v1303, 2147483648
  %v1312 = vxor.u32 %v1304, 2147483648
  %v1313 = vxor.u32 %v1305, 2147483648
  %v1314 = vxor.u32 %v1306, 2147483648
  %v1315 = vxor.u32 %v1307, 2147483648
  %v1316 = vxor.u32 %v1308, 2147483648
  %v1317 = vxor.u32 %v1309, 2147483648
  %v1318 = vmul.f32 %v1310, 1.442695
  %v1319 = vpow.pop %v1318
  %v1320 = vmul.f32 %v1311, 1.442695
  %v1321 = vpow.pop %v1320
  %v1322 = vmul.f32 %v1312, 1.442695
  %v1323 = vpow.pop %v1322
  %v1324 = vmul.f32 %v1313, 1.442695
  %v1325 = vpow.pop %v1324
  %v1326 = vmul.f32 %v1314, 1.442695
  %v1327 = vpow.pop %v1326
  %v1328 = vmul.f32 %v1315, 1.442695
  %v1329 = vpow.pop %v1328
  %v1330 = vmul.f32 %v1316, 1.442695
  %v1331 = vpow.pop %v1330
  %v1332 = vmul.f32 %v1317, 1.442695
  %v1333 = vpow.pop %v1332
  %v1334 = vadd.f32 %v1319, 1.0
  %v1335 = vadd.f32 %v1321, 1.0
  %v1336 = vadd.f32 %v1323, 1.0
  %v1337 = vadd.f32 %v1325, 1.0
  %v1338 = vadd.f32 %v1327, 1.0
  %v1339 = vadd.f32 %v1329, 1.0
  %v1340 = vadd.f32 %v1331, 1.0
  %v1341 = vadd.f32 %v1333, 1.0
  %v1342 = vrcp.pop %v1334
  %v1343 = vmul.f32 1.0, %v1342
  %v1344 = vrcp.pop %v1335
  %v1345 = vmul.f32 1.0, %v1344
  %v1346 = vrcp.pop %v1336
  %v1347 = vmul.f32 1.0, %v1346
  %v1348 = vrcp.pop %v1337
  %v1349 = vmul.f32 1.0, %v1348
  %v1350 = vrcp.pop %v1338
  %v1351 = vmul.f32 1.0, %v1350
  %v1352 = vrcp.pop %v1339
  %v1353 = vmul.f32 1.0, %v1352
  %v1354 = vrcp.pop %v1340
  %v1355 = vmul.f32 1.0, %v1354
  %v1356 = vrcp.pop %v1341
  %v1357 = vmul.f32 1.0, %v1356
  %v1359 = vcombine.high %v1101, %v1101
  %v1361 = vunpack.c.l.s4 1966171168
  %v1362 = vunpack.c.0.s8 %v1361
  %v1363 = vlaneseq
  %v1364 = vshrl.u32 %v1363, 7
  %v1365 = vsub.s32 %v1362, %v1364
  %v1366 = vrot.slane %v1101, %v1365
  %v1368 = vunpack.c.l.s4 1966171168
  %v1369 = vunpack.c.0.s8 %v1368
  %v1370 = vlaneseq
  %v1371 = vshrl.u32 %v1370, 7
  %v1372 = vsub.s32 %v1369, %v1371
  %v1373 = vrot.slane %v1359, %v1372
  %v1374 = vcombine.high %v1366, %v1366
  %v1375 = vcombine.high %v1373, %v1373
  %v1377 = vunpack.c.l.s4 1966171168
  %v1378 = vunpack.c.0.s8 %v1377
  %v1379 = vlaneseq
  %v1380 = vshrl.u32 %v1379, 7
  %v1381 = vsub.s32 %v1378, %v1380
  %v1382 = vrot.slane %v1366, %v1381
  %v1384 = vunpack.c.l.s4 1966171168
  %v1385 = vunpack.c.0.s8 %v1384
  %v1386 = vlaneseq
  %v1387 = vshrl.u32 %v1386, 7
  %v1388 = vsub.s32 %v1385, %v1387
  %v1389 = vrot.slane %v1373, %v1388
  %v1391 = vunpack.c.l.s4 1966171168
  %v1392 = vunpack.c.0.s8 %v1391
  %v1393 = vlaneseq
  %v1394 = vshrl.u32 %v1393, 7
  %v1395 = vsub.s32 %v1392, %v1394
  %v1396 = vrot.slane %v1374, %v1395
  %v1398 = vunpack.c.l.s4 1966171168
  %v1399 = vunpack.c.0.s8 %v1398
  %v1400 = vlaneseq
  %v1401 = vshrl.u32 %v1400, 7
  %v1402 = vsub.s32 %v1399, %v1401
  %v1403 = vrot.slane %v1375, %v1402
  %v1404 = vcombine.high %v1382, %v1382
  %v1405 = vcombine.high %v1389, %v1389
  %v1406 = vcombine.high %v1396, %v1396
  %v1407 = vcombine.high %v1403, %v1403
  %v1416 = vmul.f32 %v1205, %v1382
  %v1417 = vmul.f32 %v1207, %v1396
  %v1418 = vmul.f32 %v1209, %v1404
  %v1419 = vmul.f32 %v1211, %v1406
  %v1420 = vmul.f32 %v1213, %v1389
  %v1421 = vmul.f32 %v1215, %v1403
  %v1422 = vmul.f32 %v1217, %v1405
  %v1423 = vmul.f32 %v1219, %v1407
  %v1424 = vrot.slane %v832, 2
  %v1425 = vrot.slane %v834, 2
  %v1426 = vrot.slane %v836, 2
  %v1427 = vrot.slane %v838, 2
  %v1428 = vrot.slane %v840, 2
  %v1429 = vrot.slane %v842, 2
  %v1430 = vrot.slane %v844, 2
  %v1431 = vrot.slane %v846, 2
  %v1440 = vadd.f32 %v1424, %v1416
  %v1441 = vadd.f32 %v1425, %v1417
  %v1442 = vadd.f32 %v1426, %v1418
  %v1443 = vadd.f32 %v1427, %v1419
  %v1444 = vadd.f32 %v1428, %v1420
  %v1445 = vadd.f32 %v1429, %v1421
  %v1446 = vadd.f32 %v1430, %v1422
  %v1447 = vadd.f32 %v1431, %v1423
  %v1448 = vtanh.pop %v1440
  %v1449 = vtanh.pop %v1441
  %v1450 = vtanh.pop %v1442
  %v1451 = vtanh.pop %v1443
  %v1452 = vtanh.pop %v1444
  %v1453 = vtanh.pop %v1445
  %v1454 = vtanh.pop %v1446
  %v1455 = vtanh.pop %v1447
  %v1456 = vsub.f32 1.0, %v1343
  %v1457 = vsub.f32 1.0, %v1345
  %v1458 = vsub.f32 1.0, %v1347
  %v1459 = vsub.f32 1.0, %v1349
  %v1460 = vsub.f32 1.0, %v1351
  %v1461 = vsub.f32 1.0, %v1353
  %v1462 = vsub.f32 1.0, %v1355
  %v1463 = vsub.f32 1.0, %v1357
  %v1464 = vmul.f32 %v1456, %v1448
  %v1465 = vmul.f32 %v1457, %v1449
  %v1466 = vmul.f32 %v1458, %v1450
  %v1467 = vmul.f32 %v1459, %v1451
  %v1468 = vmul.f32 %v1460, %v1452
  %v1469 = vmul.f32 %v1461, %v1453
  %v1470 = vmul.f32 %v1462, %v1454
  %v1471 = vmul.f32 %v1463, %v1455
  %v1472 = vmul.f32 %v1343, %v789
  %v1473 = vmul.f32 %v1345, %v803
  %v1474 = vmul.f32 %v1347, %v811
  %v1475 = vmul.f32 %v1349, %v813
  %v1476 = vmul.f32 %v1351, %v796
  %v1477 = vmul.f32 %v1353, %v810
  %v1478 = vmul.f32 %v1355, %v812
  %v1479 = vmul.f32 %v1357, %v814
  %v1480 = vadd.f32 %v1464, %v1472
  %v1481 = vadd.f32 %v1465, %v1473
  %v1482 = vadd.f32 %v1466, %v1474
  %v1483 = vadd.f32 %v1467, %v1475
  %v1484 = vadd.f32 %v1468, %v1476
  %v1485 = vadd.f32 %v1469, %v1477
  %v1486 = vadd.f32 %v1470, %v1478
  %v1487 = vadd.f32 %v1471, %v1479
  %1488 = vset.pattern.permute.xlu0 1
  %1489 = vperm.xlu0 %1488, %v701
  %v1490 = vpop.permute.xlu0 %1489
  %vm1491 = vcmp.eq.s32.totalorder %v1490, 1
  %v1500 = vcombine.low %v1480, %v1481
  %v1501 = vcombine.low %v1482, %v1483
  %v1502 = vcombine.low %v1484, %v1485
  %v1503 = vcombine.low %v1486, %v1487
  %v1505 = vunpack.c.l.s4 1966171168
  %v1506 = vunpack.c.0.s8 %v1505
  %v1507 = vlaneseq
  %v1508 = vshrl.u32 %v1507, 7
  %v1509 = vsub.s32 %v1506, %v1508
  %v1510 = vrot.slane %v1500, %v1509
  %v1512 = vunpack.c.l.s4 1966171168
  %v1513 = vunpack.c.0.s8 %v1512
  %v1514 = vlaneseq
  %v1515 = vshrl.u32 %v1514, 7
  %v1516 = vsub.s32 %v1513, %v1515
  %v1517 = vrot.slane %v1501, %v1516
  %v1519 = vunpack.c.l.s4 1966171168
  %v1520 = vunpack.c.0.s8 %v1519
  %v1521 = vlaneseq
  %v1522 = vshrl.u32 %v1521, 7
  %v1523 = vsub.s32 %v1520, %v1522
  %v1524 = vrot.slane %v1502, %v1523
  %v1526 = vunpack.c.l.s4 1966171168
  %v1527 = vunpack.c.0.s8 %v1526
  %v1528 = vlaneseq
  %v1529 = vshrl.u32 %v1528, 7
  %v1530 = vsub.s32 %v1527, %v1529
  %v1531 = vrot.slane %v1503, %v1530
  %v1532 = vcombine.low %v1510, %v1517
  %v1533 = vcombine.low %v1524, %v1531
  %v1535 = vunpack.c.l.s4 1966171168
  %v1536 = vunpack.c.0.s8 %v1535
  %v1537 = vlaneseq
  %v1538 = vshrl.u32 %v1537, 7
  %v1539 = vsub.s32 %v1536, %v1538
  %v1540 = vrot.slane %v1532, %v1539
  %v1542 = vunpack.c.l.s4 1966171168
  %v1543 = vunpack.c.0.s8 %v1542
  %v1544 = vlaneseq
  %v1545 = vshrl.u32 %v1544, 7
  %v1546 = vsub.s32 %v1543, %v1545
  %v1547 = vrot.slane %v1533, %v1546
  %v1548 = vcombine.low %v1540, %v1547
  %v1550 = vsel %vm1491, %v1548, %v764
  %v1552 = vcombine.high %v1550, %v1550
  %v1554 = vunpack.c.l.s4 1966171168
  %v1555 = vunpack.c.0.s8 %v1554
  %v1556 = vlaneseq
  %v1557 = vshrl.u32 %v1556, 7
  %v1558 = vsub.s32 %v1555, %v1557
  %v1559 = vrot.slane %v1550, %v1558
  %v1561 = vunpack.c.l.s4 1966171168
  %v1562 = vunpack.c.0.s8 %v1561
  %v1563 = vlaneseq
  %v1564 = vshrl.u32 %v1563, 7
  %v1565 = vsub.s32 %v1562, %v1564
  %v1566 = vrot.slane %v1552, %v1565
  %v1567 = vcombine.high %v1559, %v1559
  %v1568 = vcombine.high %v1566, %v1566
  %v1570 = vunpack.c.l.s4 1966171168
  %v1571 = vunpack.c.0.s8 %v1570
  %v1572 = vlaneseq
  %v1573 = vshrl.u32 %v1572, 7
  %v1574 = vsub.s32 %v1571, %v1573
  %v1575 = vrot.slane %v1559, %v1574
  %v1577 = vunpack.c.l.s4 1966171168
  %v1578 = vunpack.c.0.s8 %v1577
  %v1579 = vlaneseq
  %v1580 = vshrl.u32 %v1579, 7
  %v1581 = vsub.s32 %v1578, %v1580
  %v1582 = vrot.slane %v1566, %v1581
  %v1584 = vunpack.c.l.s4 1966171168
  %v1585 = vunpack.c.0.s8 %v1584
  %v1586 = vlaneseq
  %v1587 = vshrl.u32 %v1586, 7
  %v1588 = vsub.s32 %v1585, %v1587
  %v1589 = vrot.slane %v1567, %v1588
  %v1591 = vunpack.c.l.s4 1966171168
  %v1592 = vunpack.c.0.s8 %v1591
  %v1593 = vlaneseq
  %v1594 = vshrl.u32 %v1593, 7
  %v1595 = vsub.s32 %v1592, %v1594
  %v1596 = vrot.slane %v1568, %v1595
  %v1597 = vcombine.high %v1575, %v1575
  %v1598 = vcombine.high %v1582, %v1582
  %v1599 = vcombine.high %v1589, %v1589
  %v1600 = vcombine.high %v1596, %v1596
  %1609 = vst [vmem:[#allocation2 + $0x1] sm:$0x1] %v1575
  %1610 = vst [vmem:[#allocation2 + $0x9] sm:$0x1] %v1589
  %1611 = vst [vmem:[#allocation2 + $0x11] sm:$0x1] %v1597
  %1612 = vst [vmem:[#allocation2 + $0x19] sm:$0x1] %v1599
  %1613 = vst [vmem:[#allocation2 + $0x21] sm:$0x1] %v1582
  %1614 = vst [vmem:[#allocation2 + $0x29] sm:$0x1] %v1596
  %1615 = vst [vmem:[#allocation2 + $0x31] sm:$0x1] %v1598
  %1616 = vst [vmem:[#allocation2 + $0x39] sm:$0x1] %v1600
  %s1617 = scalar_lea.vmem %s0, 2
  %v1618 = vld [vmem:[%s1617] ss:$8 sm:$0x7]
  %s1619 = scalar_lea.vmem %s0, 26
  %v1620 = vld [vmem:[%s1619] ss:$8 sm:$0x7]
  %s1621 = scalar_lea.vmem %s0, 50
  %v1622 = vld [vmem:[%s1621] ss:$8 sm:$0x7]
  %s1623 = scalar_lea.vmem %s0, 74
  %v1624 = vld [vmem:[%s1623] ss:$8 sm:$0x7]
  %s1625 = scalar_lea.vmem %s0, 98
  %v1626 = vld [vmem:[%s1625] ss:$8 sm:$0x7]
  %s1627 = scalar_lea.vmem %s0, 122
  %v1628 = vld [vmem:[%s1627] ss:$8 sm:$0x7]
  %s1629 = scalar_lea.vmem %s0, 146
  %v1630 = vld [vmem:[%s1629] ss:$8 sm:$0x7]
  %s1631 = scalar_lea.vmem %s0, 170
  %v1632 = vld [vmem:[%s1631] ss:$8 sm:$0x7]
  %v1633 = vpack.c.bf16 %v1550, %v1550
  %v1634 = vld [vmem:[%s3] sm:$0xff]
  %v1635 = vld [vmem:[%s3 + $0x8] sm:$0xf]
  %v1636 = vld [vmem:[%s3 + $0xc] sm:$0xff]
  %v1637 = vld [vmem:[%s3 + $0x14] sm:$0xf]
  %v1638 = vld [vmem:[%s3 + $0x18] sm:$0xff]
  %v1639 = vld [vmem:[%s3 + $0x20] sm:$0xf]
  %v1640 = vld [vmem:[%s3 + $0x24] sm:$0xff]
  %v1641 = vld [vmem:[%s3 + $0x2c] sm:$0xf]
  %v1642 = vld [vmem:[%s3 + $0x30] sm:$0xff]
  %v1643 = vld [vmem:[%s3 + $0x38] sm:$0xf]
  %v1644 = vld [vmem:[%s3 + $0x3c] sm:$0xff]
  %v1645 = vld [vmem:[%s3 + $0x44] sm:$0xf]
  %v1646 = vld [vmem:[%s3 + $0x48] sm:$0xff]
  %v1647 = vld [vmem:[%s3 + $0x50] sm:$0xf]
  %v1648 = vld [vmem:[%s3 + $0x54] sm:$0xff]
  %v1649 = vld [vmem:[%s3 + $0x5c] sm:$0xf]
  %v1650 = vld [vmem:[%s3 + $0x60] sm:$0xff]
  %v1651 = vld [vmem:[%s3 + $0x68] sm:$0xf]
  %v1652 = vld [vmem:[%s3 + $0x6c] sm:$0xff]
  %v1653 = vld [vmem:[%s3 + $0x74] sm:$0xf]
  %v1654 = vld [vmem:[%s3 + $0x78] sm:$0xff]
  %v1655 = vld [vmem:[%s3 + $0x80] sm:$0xf]
  %v1656 = vld [vmem:[%s3 + $0x84] sm:$0xff]
  %v1657 = vld [vmem:[%s3 + $0x8c] sm:$0xf]
  %v1658 = vld [vmem:[%s3 + $0x90] sm:$0xff]
  %v1659 = vld [vmem:[%s3 + $0x98] sm:$0xf]
  %v1660 = vld [vmem:[%s3 + $0x9c] sm:$0xff]
  %v1661 = vld [vmem:[%s3 + $0xa4] sm:$0xf]
  %v1662 = vld [vmem:[%s3 + $0xa8] sm:$0xff]
  %v1663 = vld [vmem:[%s3 + $0xb0] sm:$0xf]
  %v1664 = vld [vmem:[%s3 + $0xb4] sm:$0xff]
  %v1665 = vld [vmem:[%s3 + $0xbc] sm:$0xf]
  %v1666 = vld [vmem:[%s4] sm:$0x7]
  %v1668 = vlaneseq
  %v1669 = vshrl.u32 %v1668, 7
  %v1670 = vsub.s32 0, %v1669
  %v1671 = vrot.slane %v1666, %v1670
  %v1672 = vlaneseq
  %v1673 = vshrl.u32 %v1672, 7
  %v1674 = vsub.s32 1, %v1673
  %v1675 = vrot.slane %v1666, %v1674
  %v1676 = vlaneseq
  %v1677 = vshrl.u32 %v1676, 7
  %v1678 = vsub.s32 2, %v1677
  %v1679 = vrot.slane %v1666, %v1678
  %v1715 = vunpack.c.l.b16 %v1634
  %v1716 = vunpack.c.h.b16 %v1634
  %v1717 = vunpack.c.l.b16 %v1635
  %v1718 = vunpack.c.l.b16 %v1636
  %v1719 = vunpack.c.h.b16 %v1636
  %v1720 = vunpack.c.l.b16 %v1637
  %v1721 = vunpack.c.l.b16 %v1638
  %v1722 = vunpack.c.h.b16 %v1638
  %v1723 = vunpack.c.l.b16 %v1639
  %v1724 = vunpack.c.l.b16 %v1640
  %v1725 = vunpack.c.h.b16 %v1640
  %v1726 = vunpack.c.l.b16 %v1641
  %v1727 = vunpack.c.l.b16 %v1642
  %v1728 = vunpack.c.h.b16 %v1642
  %v1729 = vunpack.c.l.b16 %v1643
  %v1730 = vunpack.c.l.b16 %v1644
  %v1731 = vunpack.c.h.b16 %v1644
  %v1732 = vunpack.c.l.b16 %v1645
  %v1733 = vunpack.c.l.b16 %v1646
  %v1734 = vunpack.c.h.b16 %v1646
  %v1735 = vunpack.c.l.b16 %v1647
  %v1736 = vunpack.c.l.b16 %v1648
  %v1737 = vunpack.c.h.b16 %v1648
  %v1738 = vunpack.c.l.b16 %v1649
  %v1739 = vunpack.c.l.b16 %v1650
  %v1740 = vunpack.c.h.b16 %v1650
  %v1741 = vunpack.c.l.b16 %v1651
  %v1742 = vunpack.c.l.b16 %v1652
  %v1743 = vunpack.c.h.b16 %v1652
  %v1744 = vunpack.c.l.b16 %v1653
  %v1745 = vunpack.c.l.b16 %v1654
  %v1746 = vunpack.c.h.b16 %v1654
  %v1747 = vunpack.c.l.b16 %v1655
  %v1748 = vunpack.c.l.b16 %v1656
  %v1749 = vunpack.c.h.b16 %v1656
  %v1750 = vunpack.c.l.b16 %v1657
  %v1751 = vunpack.c.l.b16 %v1658
  %v1752 = vunpack.c.h.b16 %v1658
  %v1753 = vunpack.c.l.b16 %v1659
  %v1754 = vunpack.c.l.b16 %v1660
  %v1755 = vunpack.c.h.b16 %v1660
  %v1756 = vunpack.c.l.b16 %v1661
  %v1757 = vunpack.c.l.b16 %v1662
  %v1758 = vunpack.c.h.b16 %v1662
  %v1759 = vunpack.c.l.b16 %v1663
  %v1760 = vunpack.c.l.b16 %v1664
  %v1761 = vunpack.c.h.b16 %v1664
  %v1762 = vunpack.c.l.b16 %v1665
  %v1763 = vpack.c.b16 %v1718, %v1715
  %v1764 = vpack.c.b16 %v1719, %v1716
  %v1765 = vpack.c.b16 %v1720, %v1717
  %v1766 = vpack.c.b16 %v1724, %v1721
  %v1767 = vpack.c.b16 %v1725, %v1722
  %v1768 = vpack.c.b16 %v1726, %v1723
  %v1769 = vpack.c.b16 %v1730, %v1727
  %v1770 = vpack.c.b16 %v1731, %v1728
  %v1771 = vpack.c.b16 %v1732, %v1729
  %v1772 = vpack.c.b16 %v1736, %v1733
  %v1773 = vpack.c.b16 %v1737, %v1734
  %v1774 = vpack.c.b16 %v1738, %v1735
  %v1775 = vpack.c.b16 %v1742, %v1739
  %v1776 = vpack.c.b16 %v1743, %v1740
  %v1777 = vpack.c.b16 %v1744, %v1741
  %v1778 = vpack.c.b16 %v1748, %v1745
  %v1779 = vpack.c.b16 %v1749, %v1746
  %v1780 = vpack.c.b16 %v1750, %v1747
  %v1781 = vpack.c.b16 %v1754, %v1751
  %v1782 = vpack.c.b16 %v1755, %v1752
  %v1783 = vpack.c.b16 %v1756, %v1753
  %v1784 = vpack.c.b16 %v1760, %v1757
  %v1785 = vpack.c.b16 %v1761, %v1758
  %v1786 = vpack.c.b16 %v1762, %v1759
  %1811 = vmatprep.subr.bf16.mxu0 %v1764
  %1812 = vmatpush1.bf16.msra.mxu0 %v1763
  %1813 = vmatprep.subr.bf16.mxu0 %v1767
  %1814 = vmatpush1.bf16.msra.mxu0 %v1766
  %1815 = vmatprep.subr.bf16.mxu0 %v1770
  %1816 = vmatpush1.bf16.msra.mxu0 %v1769
  %1817 = vmatprep.subr.bf16.mxu0 %v1773
  %1818 = vmatpush1.bf16.msra.mxu0 %v1772
  %1819 = vmatprep.subr.bf16.mxu0 %v1776
  %1820 = vmatpush1.bf16.msra.mxu0 %v1775
  %1821 = vmatprep.subr.bf16.mxu0 %v1779
  %1822 = vmatpush1.bf16.msra.mxu0 %v1778
  %1823 = vmatprep.subr.bf16.mxu0 %v1782
  %1824 = vmatpush1.bf16.msra.mxu0 %v1781
  %1825 = vmatprep.subr.bf16.mxu0 %v1785
  %1826 = vmatpush1.bf16.msra.mxu0 %v1784
  %1827 = vmatprep.subr.bf16.mxu0 0
  %1828 = vmatpush1.bf16.msra.mxu0 0
  %1829 = vmatprep.subr.bf16.mxu0 0
  %1830 = vmatpush1.bf16.msra.mxu0 0
  %1831 = vmatprep.subr.bf16.mxu0 0
  %1832 = vmatpush1.bf16.msra.mxu0 0
  %1833 = vmatprep.subr.bf16.mxu0 0
  %1834 = vmatpush1.bf16.msra.mxu0 0
  %1835 = vmatprep.subr.bf16.mxu0 0
  %1836 = vmatpush1.bf16.msra.mxu0 0
  %1837 = vmatprep.subr.bf16.mxu0 0
  %1838 = vmatpush1.bf16.msra.mxu0 0
  %1839 = vmatprep.subr.bf16.mxu0 0
  %1840 = vmatpush1.bf16.msra.mxu0 0
  %1841 = vmatprep.subr.bf16.mxu0 0
  %1842 = vmatpush1.bf16.msra.mxu0 0
  %1843 = vmatprep.mubr.bf16.mxu0 0
  %1844 = vmatmul.mubr.bf16.gmra.mrb[0].mxu0 %v1633
  %v1845 = vpop.f32.mrb[0].mxu0
  %v1846 = vadd.f32 %v1671, %v1845
  %v1847 = vpop.f32.mrb[0].mxu0
  %v1848 = vadd.f32 %v1675, %v1847
  %v1849 = vpop.f32.mrb[0].mxu0
  %v1850 = vpop.f32.mrb[0].mxu0
  %1851 = vdwg.mxu0
  %1852 = vmatprep.subr.bf16.mxu0 0
  %1853 = vmatpush1.bf16.msra.mxu0 %v1765
  %1854 = vmatprep.subr.bf16.mxu0 0
  %1855 = vmatpush1.bf16.msra.mxu0 %v1768
  %1856 = vmatprep.subr.bf16.mxu0 0
  %1857 = vmatpush1.bf16.msra.mxu0 %v1771
  %1858 = vmatprep.subr.bf16.mxu0 0
  %1859 = vmatpush1.bf16.msra.mxu0 %v1774
  %1860 = vmatprep.subr.bf16.mxu0 0
  %1861 = vmatpush1.bf16.msra.mxu0 %v1777
  %1862 = vmatprep.subr.bf16.mxu0 0
  %1863 = vmatpush1.bf16.msra.mxu0 %v1780
  %1864 = vmatprep.subr.bf16.mxu0 0
  %1865 = vmatpush1.bf16.msra.mxu0 %v1783
  %1866 = vmatprep.subr.bf16.mxu0 0
  %1867 = vmatpush1.bf16.msra.mxu0 %v1786
  %1868 = vmatprep.subr.bf16.mxu0 0
  %1869 = vmatpush1.bf16.msra.mxu0 0
  %1870 = vmatprep.subr.bf16.mxu0 0
  %1871 = vmatpush1.bf16.msra.mxu0 0
  %1872 = vmatprep.subr.bf16.mxu0 0
  %1873 = vmatpush1.bf16.msra.mxu0 0
  %1874 = vmatprep.subr.bf16.mxu0 0
  %1875 = vmatpush1.bf16.msra.mxu0 0
  %1876 = vmatprep.subr.bf16.mxu0 0
  %1877 = vmatpush1.bf16.msra.mxu0 0
  %1878 = vmatprep.subr.bf16.mxu0 0
  %1879 = vmatpush1.bf16.msra.mxu0 0
  %1880 = vmatprep.subr.bf16.mxu0 0
  %1881 = vmatpush1.bf16.msra.mxu0 0
  %1882 = vmatprep.subr.bf16.mxu0 0
  %1883 = vmatpush1.bf16.msra.mxu0 0
  %1884 = vmatprep.mubr.bf16.mxu0 0
  %1885 = vmatmul.mubr.bf16.gmra.mrb[0].mxu0 %v1633
  %v1886 = vpop.f32.mrb[0].mxu0
  %v1887 = vadd.f32 %v1679, %v1886
  %v1888 = vpop.f32.mrb[0].mxu0
  %v1889 = vpop.f32.mrb[0].mxu0
  %v1890 = vpop.f32.mrb[0].mxu0
  %1891 = vdwg.mxu0
  %v1893 = vcombine.high %v1846, %v1846
  %v1895 = vunpack.c.l.s4 1966171168
  %v1896 = vunpack.c.0.s8 %v1895
  %v1897 = vlaneseq
  %v1898 = vshrl.u32 %v1897, 7
  %v1899 = vsub.s32 %v1896, %v1898
  %v1900 = vrot.slane %v1846, %v1899
  %v1902 = vunpack.c.l.s4 1966171168
  %v1903 = vunpack.c.0.s8 %v1902
  %v1904 = vlaneseq
  %v1905 = vshrl.u32 %v1904, 7
  %v1906 = vsub.s32 %v1903, %v1905
  %v1907 = vrot.slane %v1893, %v1906
  %v1908 = vcombine.high %v1900, %v1900
  %v1909 = vcombine.high %v1907, %v1907
  %v1911 = vunpack.c.l.s4 1966171168
  %v1912 = vunpack.c.0.s8 %v1911
  %v1913 = vlaneseq
  %v1914 = vshrl.u32 %v1913, 7
  %v1915 = vsub.s32 %v1912, %v1914
  %v1916 = vrot.slane %v1900, %v1915
  %v1918 = vunpack.c.l.s4 1966171168
  %v1919 = vunpack.c.0.s8 %v1918
  %v1920 = vlaneseq
  %v1921 = vshrl.u32 %v1920, 7
  %v1922 = vsub.s32 %v1919, %v1921
  %v1923 = vrot.slane %v1907, %v1922
  %v1925 = vunpack.c.l.s4 1966171168
  %v1926 = vunpack.c.0.s8 %v1925
  %v1927 = vlaneseq
  %v1928 = vshrl.u32 %v1927, 7
  %v1929 = vsub.s32 %v1926, %v1928
  %v1930 = vrot.slane %v1908, %v1929
  %v1932 = vunpack.c.l.s4 1966171168
  %v1933 = vunpack.c.0.s8 %v1932
  %v1934 = vlaneseq
  %v1935 = vshrl.u32 %v1934, 7
  %v1936 = vsub.s32 %v1933, %v1935
  %v1937 = vrot.slane %v1909, %v1936
  %v1938 = vcombine.high %v1916, %v1916
  %v1939 = vcombine.high %v1923, %v1923
  %v1940 = vcombine.high %v1930, %v1930
  %v1941 = vcombine.high %v1937, %v1937
  %v1950 = vadd.f32 %v1618, %v1916
  %v1951 = vadd.f32 %v1620, %v1930
  %v1952 = vadd.f32 %v1622, %v1938
  %v1953 = vadd.f32 %v1624, %v1940
  %v1954 = vadd.f32 %v1626, %v1923
  %v1955 = vadd.f32 %v1628, %v1937
  %v1956 = vadd.f32 %v1630, %v1939
  %v1957 = vadd.f32 %v1632, %v1941
  %v1958 = vxor.u32 %v1950, 2147483648
  %v1959 = vxor.u32 %v1951, 2147483648
  %v1960 = vxor.u32 %v1952, 2147483648
  %v1961 = vxor.u32 %v1953, 2147483648
  %v1962 = vxor.u32 %v1954, 2147483648
  %v1963 = vxor.u32 %v1955, 2147483648
  %v1964 = vxor.u32 %v1956, 2147483648
  %v1965 = vxor.u32 %v1957, 2147483648
  %v1966 = vmul.f32 %v1958, 1.442695
  %v1967 = vpow.pop %v1966
  %v1968 = vmul.f32 %v1959, 1.442695
  %v1969 = vpow.pop %v1968
  %v1970 = vmul.f32 %v1960, 1.442695
  %v1971 = vpow.pop %v1970
  %v1972 = vmul.f32 %v1961, 1.442695
  %v1973 = vpow.pop %v1972
  %v1974 = vmul.f32 %v1962, 1.442695
  %v1975 = vpow.pop %v1974
  %v1976 = vmul.f32 %v1963, 1.442695
  %v1977 = vpow.pop %v1976
  %v1978 = vmul.f32 %v1964, 1.442695
  %v1979 = vpow.pop %v1978
  %v1980 = vmul.f32 %v1965, 1.442695
  %v1981 = vpow.pop %v1980
  %v1982 = vadd.f32 %v1967, 1.0
  %v1983 = vadd.f32 %v1969, 1.0
  %v1984 = vadd.f32 %v1971, 1.0
  %v1985 = vadd.f32 %v1973, 1.0
  %v1986 = vadd.f32 %v1975, 1.0
  %v1987 = vadd.f32 %v1977, 1.0
  %v1988 = vadd.f32 %v1979, 1.0
  %v1989 = vadd.f32 %v1981, 1.0
  %v1990 = vrcp.pop %v1982
  %v1991 = vmul.f32 1.0, %v1990
  %v1992 = vrcp.pop %v1983
  %v1993 = vmul.f32 1.0, %v1992
  %v1994 = vrcp.pop %v1984
  %v1995 = vmul.f32 1.0, %v1994
  %v1996 = vrcp.pop %v1985
  %v1997 = vmul.f32 1.0, %v1996
  %v1998 = vrcp.pop %v1986
  %v1999 = vmul.f32 1.0, %v1998
  %v2000 = vrcp.pop %v1987
  %v2001 = vmul.f32 1.0, %v2000
  %v2002 = vrcp.pop %v1988
  %v2003 = vmul.f32 1.0, %v2002
  %v2004 = vrcp.pop %v1989
  %v2005 = vmul.f32 1.0, %v2004
  %v2014 = vrot.slane %v1618, 1
  %v2015 = vrot.slane %v1620, 1
  %v2016 = vrot.slane %v1622, 1
  %v2017 = vrot.slane %v1624, 1
  %v2018 = vrot.slane %v1626, 1
  %v2019 = vrot.slane %v1628, 1
  %v2020 = vrot.slane %v1630, 1
  %v2021 = vrot.slane %v1632, 1
  %v2031 = vcombine.high %v1848, %v1848
  %v2033 = vunpack.c.l.s4 1966171168
  %v2034 = vunpack.c.0.s8 %v2033
  %v2035 = vlaneseq
  %v2036 = vshrl.u32 %v2035, 7
  %v2037 = vsub.s32 %v2034, %v2036
  %v2038 = vrot.slane %v1848, %v2037
  %v2040 = vunpack.c.l.s4 1966171168
  %v2041 = vunpack.c.0.s8 %v2040
  %v2042 = vlaneseq
  %v2043 = vshrl.u32 %v2042, 7
  %v2044 = vsub.s32 %v2041, %v2043
  %v2045 = vrot.slane %v2031, %v2044
  %v2046 = vcombine.high %v2038, %v2038
  %v2047 = vcombine.high %v2045, %v2045
  %v2049 = vunpack.c.l.s4 1966171168
  %v2050 = vunpack.c.0.s8 %v2049
  %v2051 = vlaneseq
  %v2052 = vshrl.u32 %v2051, 7
  %v2053 = vsub.s32 %v2050, %v2052
  %v2054 = vrot.slane %v2038, %v2053
  %v2056 = vunpack.c.l.s4 1966171168
  %v2057 = vunpack.c.0.s8 %v2056
  %v2058 = vlaneseq
  %v2059 = vshrl.u32 %v2058, 7
  %v2060 = vsub.s32 %v2057, %v2059
  %v2061 = vrot.slane %v2045, %v2060
  %v2063 = vunpack.c.l.s4 1966171168
  %v2064 = vunpack.c.0.s8 %v2063
  %v2065 = vlaneseq
  %v2066 = vshrl.u32 %v2065, 7
  %v2067 = vsub.s32 %v2064, %v2066
  %v2068 = vrot.slane %v2046, %v2067
  %v2070 = vunpack.c.l.s4 1966171168
  %v2071 = vunpack.c.0.s8 %v2070
  %v2072 = vlaneseq
  %v2073 = vshrl.u32 %v2072, 7
  %v2074 = vsub.s32 %v2071, %v2073
  %v2075 = vrot.slane %v2047, %v2074
  %v2076 = vcombine.high %v2054, %v2054
  %v2077 = vcombine.high %v2061, %v2061
  %v2078 = vcombine.high %v2068, %v2068
  %v2079 = vcombine.high %v2075, %v2075
  %v2088 = vadd.f32 %v2014, %v2054
  %v2089 = vadd.f32 %v2015, %v2068
  %v2090 = vadd.f32 %v2016, %v2076
  %v2091 = vadd.f32 %v2017, %v2078
  %v2092 = vadd.f32 %v2018, %v2061
  %v2093 = vadd.f32 %v2019, %v2075
  %v2094 = vadd.f32 %v2020, %v2077
  %v2095 = vadd.f32 %v2021, %v2079
  %v2096 = vxor.u32 %v2088, 2147483648
  %v2097 = vxor.u32 %v2089, 2147483648
  %v2098 = vxor.u32 %v2090, 2147483648
  %v2099 = vxor.u32 %v2091, 2147483648
  %v2100 = vxor.u32 %v2092, 2147483648
  %v2101 = vxor.u32 %v2093, 2147483648
  %v2102 = vxor.u32 %v2094, 2147483648
  %v2103 = vxor.u32 %v2095, 2147483648
  %v2104 = vmul.f32 %v2096, 1.442695
  %v2105 = vpow.pop %v2104
  %v2106 = vmul.f32 %v2097, 1.442695
  %v2107 = vpow.pop %v2106
  %v2108 = vmul.f32 %v2098, 1.442695
  %v2109 = vpow.pop %v2108
  %v2110 = vmul.f32 %v2099, 1.442695
  %v2111 = vpow.pop %v2110
  %v2112 = vmul.f32 %v2100, 1.442695
  %v2113 = vpow.pop %v2112
  %v2114 = vmul.f32 %v2101, 1.442695
  %v2115 = vpow.pop %v2114
  %v2116 = vmul.f32 %v2102, 1.442695
  %v2117 = vpow.pop %v2116
  %v2118 = vmul.f32 %v2103, 1.442695
  %v2119 = vpow.pop %v2118
  %v2120 = vadd.f32 %v2105, 1.0
  %v2121 = vadd.f32 %v2107, 1.0
  %v2122 = vadd.f32 %v2109, 1.0
  %v2123 = vadd.f32 %v2111, 1.0
  %v2124 = vadd.f32 %v2113, 1.0
  %v2125 = vadd.f32 %v2115, 1.0
  %v2126 = vadd.f32 %v2117, 1.0
  %v2127 = vadd.f32 %v2119, 1.0
  %v2128 = vrcp.pop %v2120
  %v2129 = vmul.f32 1.0, %v2128
  %v2130 = vrcp.pop %v2121
  %v2131 = vmul.f32 1.0, %v2130
  %v2132 = vrcp.pop %v2122
  %v2133 = vmul.f32 1.0, %v2132
  %v2134 = vrcp.pop %v2123
  %v2135 = vmul.f32 1.0, %v2134
  %v2136 = vrcp.pop %v2124
  %v2137 = vmul.f32 1.0, %v2136
  %v2138 = vrcp.pop %v2125
  %v2139 = vmul.f32 1.0, %v2138
  %v2140 = vrcp.pop %v2126
  %v2141 = vmul.f32 1.0, %v2140
  %v2142 = vrcp.pop %v2127
  %v2143 = vmul.f32 1.0, %v2142
  %v2145 = vcombine.high %v1887, %v1887
  %v2147 = vunpack.c.l.s4 1966171168
  %v2148 = vunpack.c.0.s8 %v2147
  %v2149 = vlaneseq
  %v2150 = vshrl.u32 %v2149, 7
  %v2151 = vsub.s32 %v2148, %v2150
  %v2152 = vrot.slane %v1887, %v2151
  %v2154 = vunpack.c.l.s4 1966171168
  %v2155 = vunpack.c.0.s8 %v2154
  %v2156 = vlaneseq
  %v2157 = vshrl.u32 %v2156, 7
  %v2158 = vsub.s32 %v2155, %v2157
  %v2159 = vrot.slane %v2145, %v2158
  %v2160 = vcombine.high %v2152, %v2152
  %v2161 = vcombine.high %v2159, %v2159
  %v2163 = vunpack.c.l.s4 1966171168
  %v2164 = vunpack.c.0.s8 %v2163
  %v2165 = vlaneseq
  %v2166 = vshrl.u32 %v2165, 7
  %v2167 = vsub.s32 %v2164, %v2166
  %v2168 = vrot.slane %v2152, %v2167
  %v2170 = vunpack.c.l.s4 1966171168
  %v2171 = vunpack.c.0.s8 %v2170
  %v2172 = vlaneseq
  %v2173 = vshrl.u32 %v2172, 7
  %v2174 = vsub.s32 %v2171, %v2173
  %v2175 = vrot.slane %v2159, %v2174
  %v2177 = vunpack.c.l.s4 1966171168
  %v2178 = vunpack.c.0.s8 %v2177
  %v2179 = vlaneseq
  %v2180 = vshrl.u32 %v2179, 7
  %v2181 = vsub.s32 %v2178, %v2180
  %v2182 = vrot.slane %v2160, %v2181
  %v2184 = vunpack.c.l.s4 1966171168
  %v2185 = vunpack.c.0.s8 %v2184
  %v2186 = vlaneseq
  %v2187 = vshrl.u32 %v2186, 7
  %v2188 = vsub.s32 %v2185, %v2187
  %v2189 = vrot.slane %v2161, %v2188
  %v2190 = vcombine.high %v2168, %v2168
  %v2191 = vcombine.high %v2175, %v2175
  %v2192 = vcombine.high %v2182, %v2182
  %v2193 = vcombine.high %v2189, %v2189
  %v2202 = vmul.f32 %v1991, %v2168
  %v2203 = vmul.f32 %v1993, %v2182
  %v2204 = vmul.f32 %v1995, %v2190
  %v2205 = vmul.f32 %v1997, %v2192
  %v2206 = vmul.f32 %v1999, %v2175
  %v2207 = vmul.f32 %v2001, %v2189
  %v2208 = vmul.f32 %v2003, %v2191
  %v2209 = vmul.f32 %v2005, %v2193
  %v2210 = vrot.slane %v1618, 2
  %v2211 = vrot.slane %v1620, 2
  %v2212 = vrot.slane %v1622, 2
  %v2213 = vrot.slane %v1624, 2
  %v2214 = vrot.slane %v1626, 2
  %v2215 = vrot.slane %v1628, 2
  %v2216 = vrot.slane %v1630, 2
  %v2217 = vrot.slane %v1632, 2
  %v2226 = vadd.f32 %v2210, %v2202
  %v2227 = vadd.f32 %v2211, %v2203
  %v2228 = vadd.f32 %v2212, %v2204
  %v2229 = vadd.f32 %v2213, %v2205
  %v2230 = vadd.f32 %v2214, %v2206
  %v2231 = vadd.f32 %v2215, %v2207
  %v2232 = vadd.f32 %v2216, %v2208
  %v2233 = vadd.f32 %v2217, %v2209
  %v2234 = vtanh.pop %v2226
  %v2235 = vtanh.pop %v2227
  %v2236 = vtanh.pop %v2228
  %v2237 = vtanh.pop %v2229
  %v2238 = vtanh.pop %v2230
  %v2239 = vtanh.pop %v2231
  %v2240 = vtanh.pop %v2232
  %v2241 = vtanh.pop %v2233
  %v2242 = vsub.f32 1.0, %v2129
  %v2243 = vsub.f32 1.0, %v2131
  %v2244 = vsub.f32 1.0, %v2133
  %v2245 = vsub.f32 1.0, %v2135
  %v2246 = vsub.f32 1.0, %v2137
  %v2247 = vsub.f32 1.0, %v2139
  %v2248 = vsub.f32 1.0, %v2141
  %v2249 = vsub.f32 1.0, %v2143
  %v2250 = vmul.f32 %v2242, %v2234
  %v2251 = vmul.f32 %v2243, %v2235
  %v2252 = vmul.f32 %v2244, %v2236
  %v2253 = vmul.f32 %v2245, %v2237
  %v2254 = vmul.f32 %v2246, %v2238
  %v2255 = vmul.f32 %v2247, %v2239
  %v2256 = vmul.f32 %v2248, %v2240
  %v2257 = vmul.f32 %v2249, %v2241
  %v2258 = vmul.f32 %v2129, %v1575
  %v2259 = vmul.f32 %v2131, %v1589
  %v2260 = vmul.f32 %v2133, %v1597
  %v2261 = vmul.f32 %v2135, %v1599
  %v2262 = vmul.f32 %v2137, %v1582
  %v2263 = vmul.f32 %v2139, %v1596
  %v2264 = vmul.f32 %v2141, %v1598
  %v2265 = vmul.f32 %v2143, %v1600
  %v2266 = vadd.f32 %v2250, %v2258
  %v2267 = vadd.f32 %v2251, %v2259
  %v2268 = vadd.f32 %v2252, %v2260
  %v2269 = vadd.f32 %v2253, %v2261
  %v2270 = vadd.f32 %v2254, %v2262
  %v2271 = vadd.f32 %v2255, %v2263
  %v2272 = vadd.f32 %v2256, %v2264
  %v2273 = vadd.f32 %v2257, %v2265
  %2274 = vset.pattern.permute.xlu0 2
  %2275 = vperm.xlu0 %2274, %v701
  %v2276 = vpop.permute.xlu0 %2275
  %vm2277 = vcmp.eq.s32.totalorder %v2276, 1
  %v2286 = vcombine.low %v2266, %v2267
  %v2287 = vcombine.low %v2268, %v2269
  %v2288 = vcombine.low %v2270, %v2271
  %v2289 = vcombine.low %v2272, %v2273
  %v2291 = vunpack.c.l.s4 1966171168
  %v2292 = vunpack.c.0.s8 %v2291
  %v2293 = vlaneseq
  %v2294 = vshrl.u32 %v2293, 7
  %v2295 = vsub.s32 %v2292, %v2294
  %v2296 = vrot.slane %v2286, %v2295
  %v2298 = vunpack.c.l.s4 1966171168
  %v2299 = vunpack.c.0.s8 %v2298
  %v2300 = vlaneseq
  %v2301 = vshrl.u32 %v2300, 7
  %v2302 = vsub.s32 %v2299, %v2301
  %v2303 = vrot.slane %v2287, %v2302
  %v2305 = vunpack.c.l.s4 1966171168
  %v2306 = vunpack.c.0.s8 %v2305
  %v2307 = vlaneseq
  %v2308 = vshrl.u32 %v2307, 7
  %v2309 = vsub.s32 %v2306, %v2308
  %v2310 = vrot.slane %v2288, %v2309
  %v2312 = vunpack.c.l.s4 1966171168
  %v2313 = vunpack.c.0.s8 %v2312
  %v2314 = vlaneseq
  %v2315 = vshrl.u32 %v2314, 7
  %v2316 = vsub.s32 %v2313, %v2315
  %v2317 = vrot.slane %v2289, %v2316
  %v2318 = vcombine.low %v2296, %v2303
  %v2319 = vcombine.low %v2310, %v2317
  %v2321 = vunpack.c.l.s4 1966171168
  %v2322 = vunpack.c.0.s8 %v2321
  %v2323 = vlaneseq
  %v2324 = vshrl.u32 %v2323, 7
  %v2325 = vsub.s32 %v2322, %v2324
  %v2326 = vrot.slane %v2318, %v2325
  %v2328 = vunpack.c.l.s4 1966171168
  %v2329 = vunpack.c.0.s8 %v2328
  %v2330 = vlaneseq
  %v2331 = vshrl.u32 %v2330, 7
  %v2332 = vsub.s32 %v2329, %v2331
  %v2333 = vrot.slane %v2319, %v2332
  %v2334 = vcombine.low %v2326, %v2333
  %v2336 = vsel %vm2277, %v2334, %v1550
  %v2338 = vcombine.high %v2336, %v2336
  %v2340 = vunpack.c.l.s4 1966171168
  %v2341 = vunpack.c.0.s8 %v2340
  %v2342 = vlaneseq
  %v2343 = vshrl.u32 %v2342, 7
  %v2344 = vsub.s32 %v2341, %v2343
  %v2345 = vrot.slane %v2336, %v2344
  %v2347 = vunpack.c.l.s4 1966171168
  %v2348 = vunpack.c.0.s8 %v2347
  %v2349 = vlaneseq
  %v2350 = vshrl.u32 %v2349, 7
  %v2351 = vsub.s32 %v2348, %v2350
  %v2352 = vrot.slane %v2338, %v2351
  %v2353 = vcombine.high %v2345, %v2345
  %v2354 = vcombine.high %v2352, %v2352
  %v2356 = vunpack.c.l.s4 1966171168
  %v2357 = vunpack.c.0.s8 %v2356
  %v2358 = vlaneseq
  %v2359 = vshrl.u32 %v2358, 7
  %v2360 = vsub.s32 %v2357, %v2359
  %v2361 = vrot.slane %v2345, %v2360
  %v2363 = vunpack.c.l.s4 1966171168
  %v2364 = vunpack.c.0.s8 %v2363
  %v2365 = vlaneseq
  %v2366 = vshrl.u32 %v2365, 7
  %v2367 = vsub.s32 %v2364, %v2366
  %v2368 = vrot.slane %v2352, %v2367
  %v2370 = vunpack.c.l.s4 1966171168
  %v2371 = vunpack.c.0.s8 %v2370
  %v2372 = vlaneseq
  %v2373 = vshrl.u32 %v2372, 7
  %v2374 = vsub.s32 %v2371, %v2373
  %v2375 = vrot.slane %v2353, %v2374
  %v2377 = vunpack.c.l.s4 1966171168
  %v2378 = vunpack.c.0.s8 %v2377
  %v2379 = vlaneseq
  %v2380 = vshrl.u32 %v2379, 7
  %v2381 = vsub.s32 %v2378, %v2380
  %v2382 = vrot.slane %v2354, %v2381
  %v2383 = vcombine.high %v2361, %v2361
  %v2384 = vcombine.high %v2368, %v2368
  %v2385 = vcombine.high %v2375, %v2375
  %v2386 = vcombine.high %v2382, %v2382
  %2395 = vst [vmem:[#allocation2 + $0x2] sm:$0x1] %v2361
  %2396 = vst [vmem:[#allocation2 + $0xa] sm:$0x1] %v2375
  %2397 = vst [vmem:[#allocation2 + $0x12] sm:$0x1] %v2383
  %2398 = vst [vmem:[#allocation2 + $0x1a] sm:$0x1] %v2385
  %2399 = vst [vmem:[#allocation2 + $0x22] sm:$0x1] %v2368
  %2400 = vst [vmem:[#allocation2 + $0x2a] sm:$0x1] %v2382
  %2401 = vst [vmem:[#allocation2 + $0x32] sm:$0x1] %v2384
  %2402 = vst [vmem:[#allocation2 + $0x3a] sm:$0x1] %v2386
  %s2403 = scalar_lea.vmem %s0, 3
  %v2404 = vld [vmem:[%s2403] ss:$8 sm:$0x7]
  %s2405 = scalar_lea.vmem %s0, 27
  %v2406 = vld [vmem:[%s2405] ss:$8 sm:$0x7]
  %s2407 = scalar_lea.vmem %s0, 51
  %v2408 = vld [vmem:[%s2407] ss:$8 sm:$0x7]
  %s2409 = scalar_lea.vmem %s0, 75
  %v2410 = vld [vmem:[%s2409] ss:$8 sm:$0x7]
  %s2411 = scalar_lea.vmem %s0, 99
  %v2412 = vld [vmem:[%s2411] ss:$8 sm:$0x7]
  %s2413 = scalar_lea.vmem %s0, 123
  %v2414 = vld [vmem:[%s2413] ss:$8 sm:$0x7]
  %s2415 = scalar_lea.vmem %s0, 147
  %v2416 = vld [vmem:[%s2415] ss:$8 sm:$0x7]
  %s2417 = scalar_lea.vmem %s0, 171
  %v2418 = vld [vmem:[%s2417] ss:$8 sm:$0x7]
  %v2419 = vpack.c.bf16 %v2336, %v2336
  %v2420 = vld [vmem:[%s3] sm:$0xff]
  %v2421 = vld [vmem:[%s3 + $0x8] sm:$0xf]
  %v2422 = vld [vmem:[%s3 + $0xc] sm:$0xff]
  %v2423 = vld [vmem:[%s3 + $0x14] sm:$0xf]
  %v2424 = vld [vmem:[%s3 + $0x18] sm:$0xff]
  %v2425 = vld [vmem:[%s3 + $0x20] sm:$0xf]
  %v2426 = vld [vmem:[%s3 + $0x24] sm:$0xff]
  %v2427 = vld [vmem:[%s3 + $0x2c] sm:$0xf]
  %v2428 = vld [vmem:[%s3 + $0x30] sm:$0xff]
  %v2429 = vld [vmem:[%s3 + $0x38] sm:$0xf]
  %v2430 = vld [vmem:[%s3 + $0x3c] sm:$0xff]
  %v2431 = vld [vmem:[%s3 + $0x44] sm:$0xf]
  %v2432 = vld [vmem:[%s3 + $0x48] sm:$0xff]
  %v2433 = vld [vmem:[%s3 + $0x50] sm:$0xf]
  %v2434 = vld [vmem:[%s3 + $0x54] sm:$0xff]
  %v2435 = vld [vmem:[%s3 + $0x5c] sm:$0xf]
  %v2436 = vld [vmem:[%s3 + $0x60] sm:$0xff]
  %v2437 = vld [vmem:[%s3 + $0x68] sm:$0xf]
  %v2438 = vld [vmem:[%s3 + $0x6c] sm:$0xff]
  %v2439 = vld [vmem:[%s3 + $0x74] sm:$0xf]
  %v2440 = vld [vmem:[%s3 + $0x78] sm:$0xff]
  %v2441 = vld [vmem:[%s3 + $0x80] sm:$0xf]
  %v2442 = vld [vmem:[%s3 + $0x84] sm:$0xff]
  %v2443 = vld [vmem:[%s3 + $0x8c] sm:$0xf]
  %v2444 = vld [vmem:[%s3 + $0x90] sm:$0xff]
  %v2445 = vld [vmem:[%s3 + $0x98] sm:$0xf]
  %v2446 = vld [vmem:[%s3 + $0x9c] sm:$0xff]
  %v2447 = vld [vmem:[%s3 + $0xa4] sm:$0xf]
  %v2448 = vld [vmem:[%s3 + $0xa8] sm:$0xff]
  %v2449 = vld [vmem:[%s3 + $0xb0] sm:$0xf]
  %v2450 = vld [vmem:[%s3 + $0xb4] sm:$0xff]
  %v2451 = vld [vmem:[%s3 + $0xbc] sm:$0xf]
  %v2452 = vld [vmem:[%s4] sm:$0x7]
  %v2454 = vlaneseq
  %v2455 = vshrl.u32 %v2454, 7
  %v2456 = vsub.s32 0, %v2455
  %v2457 = vrot.slane %v2452, %v2456
  %v2458 = vlaneseq
  %v2459 = vshrl.u32 %v2458, 7
  %v2460 = vsub.s32 1, %v2459
  %v2461 = vrot.slane %v2452, %v2460
  %v2462 = vlaneseq
  %v2463 = vshrl.u32 %v2462, 7
  %v2464 = vsub.s32 2, %v2463
  %v2465 = vrot.slane %v2452, %v2464
  %v2501 = vunpack.c.l.b16 %v2420
  %v2502 = vunpack.c.h.b16 %v2420
  %v2503 = vunpack.c.l.b16 %v2421
  %v2504 = vunpack.c.l.b16 %v2422
  %v2505 = vunpack.c.h.b16 %v2422
  %v2506 = vunpack.c.l.b16 %v2423
  %v2507 = vunpack.c.l.b16 %v2424
  %v2508 = vunpack.c.h.b16 %v2424
  %v2509 = vunpack.c.l.b16 %v2425
  %v2510 = vunpack.c.l.b16 %v2426
  %v2511 = vunpack.c.h.b16 %v2426
  %v2512 = vunpack.c.l.b16 %v2427
  %v2513 = vunpack.c.l.b16 %v2428
  %v2514 = vunpack.c.h.b16 %v2428
  %v2515 = vunpack.c.l.b16 %v2429
  %v2516 = vunpack.c.l.b16 %v2430
  %v2517 = vunpack.c.h.b16 %v2430
  %v2518 = vunpack.c.l.b16 %v2431
  %v2519 = vunpack.c.l.b16 %v2432
  %v2520 = vunpack.c.h.b16 %v2432
  %v2521 = vunpack.c.l.b16 %v2433
  %v2522 = vunpack.c.l.b16 %v2434
  %v2523 = vunpack.c.h.b16 %v2434
  %v2524 = vunpack.c.l.b16 %v2435
  %v2525 = vunpack.c.l.b16 %v2436
  %v2526 = vunpack.c.h.b16 %v2436
  %v2527 = vunpack.c.l.b16 %v2437
  %v2528 = vunpack.c.l.b16 %v2438
  %v2529 = vunpack.c.h.b16 %v2438
  %v2530 = vunpack.c.l.b16 %v2439
  %v2531 = vunpack.c.l.b16 %v2440
  %v2532 = vunpack.c.h.b16 %v2440
  %v2533 = vunpack.c.l.b16 %v2441
  %v2534 = vunpack.c.l.b16 %v2442
  %v2535 = vunpack.c.h.b16 %v2442
  %v2536 = vunpack.c.l.b16 %v2443
  %v2537 = vunpack.c.l.b16 %v2444
  %v2538 = vunpack.c.h.b16 %v2444
  %v2539 = vunpack.c.l.b16 %v2445
  %v2540 = vunpack.c.l.b16 %v2446
  %v2541 = vunpack.c.h.b16 %v2446
  %v2542 = vunpack.c.l.b16 %v2447
  %v2543 = vunpack.c.l.b16 %v2448
  %v2544 = vunpack.c.h.b16 %v2448
  %v2545 = vunpack.c.l.b16 %v2449
  %v2546 = vunpack.c.l.b16 %v2450
  %v2547 = vunpack.c.h.b16 %v2450
  %v2548 = vunpack.c.l.b16 %v2451
  %v2549 = vpack.c.b16 %v2504, %v2501
  %v2550 = vpack.c.b16 %v2505, %v2502
  %v2551 = vpack.c.b16 %v2506, %v2503
  %v2552 = vpack.c.b16 %v2510, %v2507
  %v2553 = vpack.c.b16 %v2511, %v2508
  %v2554 = vpack.c.b16 %v2512, %v2509
  %v2555 = vpack.c.b16 %v2516, %v2513
  %v2556 = vpack.c.b16 %v2517, %v2514
  %v2557 = vpack.c.b16 %v2518, %v2515
  %v2558 = vpack.c.b16 %v2522, %v2519
  %v2559 = vpack.c.b16 %v2523, %v2520
  %v2560 = vpack.c.b16 %v2524, %v2521
  %v2561 = vpack.c.b16 %v2528, %v2525
  %v2562 = vpack.c.b16 %v2529, %v2526
  %v2563 = vpack.c.b16 %v2530, %v2527
  %v2564 = vpack.c.b16 %v2534, %v2531
  %v2565 = vpack.c.b16 %v2535, %v2532
  %v2566 = vpack.c.b16 %v2536, %v2533
  %v2567 = vpack.c.b16 %v2540, %v2537
  %v2568 = vpack.c.b16 %v2541, %v2538
  %v2569 = vpack.c.b16 %v2542, %v2539
  %v2570 = vpack.c.b16 %v2546, %v2543
  %v2571 = vpack.c.b16 %v2547, %v2544
  %v2572 = vpack.c.b16 %v2548, %v2545
  %2597 = vmatprep.subr.bf16.mxu0 %v2550
  %2598 = vmatpush1.bf16.msra.mxu0 %v2549
  %2599 = vmatprep.subr.bf16.mxu0 %v2553
  %2600 = vmatpush1.bf16.msra.mxu0 %v2552
  %2601 = vmatprep.subr.bf16.mxu0 %v2556
  %2602 = vmatpush1.bf16.msra.mxu0 %v2555
  %2603 = vmatprep.subr.bf16.mxu0 %v2559
  %2604 = vmatpush1.bf16.msra.mxu0 %v2558
  %2605 = vmatprep.subr.bf16.mxu0 %v2562
  %2606 = vmatpush1.bf16.msra.mxu0 %v2561
  %2607 = vmatprep.subr.bf16.mxu0 %v2565
  %2608 = vmatpush1.bf16.msra.mxu0 %v2564
  %2609 = vmatprep.subr.bf16.mxu0 %v2568
  %2610 = vmatpush1.bf16.msra.mxu0 %v2567
  %2611 = vmatprep.subr.bf16.mxu0 %v2571
  %2612 = vmatpush1.bf16.msra.mxu0 %v2570
  %2613 = vmatprep.subr.bf16.mxu0 0
  %2614 = vmatpush1.bf16.msra.mxu0 0
  %2615 = vmatprep.subr.bf16.mxu0 0
  %2616 = vmatpush1.bf16.msra.mxu0 0
  %2617 = vmatprep.subr.bf16.mxu0 0
  %2618 = vmatpush1.bf16.msra.mxu0 0
  %2619 = vmatprep.subr.bf16.mxu0 0
  %2620 = vmatpush1.bf16.msra.mxu0 0
  %2621 = vmatprep.subr.bf16.mxu0 0
  %2622 = vmatpush1.bf16.msra.mxu0 0
  %2623 = vmatprep.subr.bf16.mxu0 0
  %2624 = vmatpush1.bf16.msra.mxu0 0
  %2625 = vmatprep.subr.bf16.mxu0 0
  %2626 = vmatpush1.bf16.msra.mxu0 0
  %2627 = vmatprep.subr.bf16.mxu0 0
  %2628 = vmatpush1.bf16.msra.mxu0 0
  %2629 = vmatprep.mubr.bf16.mxu0 0
  %2630 = vmatmul.mubr.bf16.gmra.mrb[0].mxu0 %v2419
  %v2631 = vpop.f32.mrb[0].mxu0
  %v2632 = vadd.f32 %v2457, %v2631
  %v2633 = vpop.f32.mrb[0].mxu0
  %v2634 = vadd.f32 %v2461, %v2633
  %v2635 = vpop.f32.mrb[0].mxu0
  %v2636 = vpop.f32.mrb[0].mxu0
  %2637 = vdwg.mxu0
  %2638 = vmatprep.subr.bf16.mxu0 0
  %2639 = vmatpush1.bf16.msra.mxu0 %v2551
  %2640 = vmatprep.subr.bf16.mxu0 0
  %2641 = vmatpush1.bf16.msra.mxu0 %v2554
  %2642 = vmatprep.subr.bf16.mxu0 0
  %2643 = vmatpush1.bf16.msra.mxu0 %v2557
  %2644 = vmatprep.subr.bf16.mxu0 0
  %2645 = vmatpush1.bf16.msra.mxu0 %v2560
  %2646 = vmatprep.subr.bf16.mxu0 0
  %2647 = vmatpush1.bf16.msra.mxu0 %v2563
  %2648 = vmatprep.subr.bf16.mxu0 0
  %2649 = vmatpush1.bf16.msra.mxu0 %v2566
  %2650 = vmatprep.subr.bf16.mxu0 0
  %2651 = vmatpush1.bf16.msra.mxu0 %v2569
  %2652 = vmatprep.subr.bf16.mxu0 0
  %2653 = vmatpush1.bf16.msra.mxu0 %v2572
  %2654 = vmatprep.subr.bf16.mxu0 0
  %2655 = vmatpush1.bf16.msra.mxu0 0
  %2656 = vmatprep.subr.bf16.mxu0 0
  %2657 = vmatpush1.bf16.msra.mxu0 0
  %2658 = vmatprep.subr.bf16.mxu0 0
  %2659 = vmatpush1.bf16.msra.mxu0 0
  %2660 = vmatprep.subr.bf16.mxu0 0
  %2661 = vmatpush1.bf16.msra.mxu0 0
  %2662 = vmatprep.subr.bf16.mxu0 0
  %2663 = vmatpush1.bf16.msra.mxu0 0
  %2664 = vmatprep.subr.bf16.mxu0 0
  %2665 = vmatpush1.bf16.msra.mxu0 0
  %2666 = vmatprep.subr.bf16.mxu0 0
  %2667 = vmatpush1.bf16.msra.mxu0 0
  %2668 = vmatprep.subr.bf16.mxu0 0
  %2669 = vmatpush1.bf16.msra.mxu0 0
  %2670 = vmatprep.mubr.bf16.mxu0 0
  %2671 = vmatmul.mubr.bf16.gmra.mrb[0].mxu0 %v2419
  %v2672 = vpop.f32.mrb[0].mxu0
  %v2673 = vadd.f32 %v2465, %v2672
  %v2674 = vpop.f32.mrb[0].mxu0
  %v2675 = vpop.f32.mrb[0].mxu0
  %v2676 = vpop.f32.mrb[0].mxu0
  %2677 = vdwg.mxu0
  %v2679 = vcombine.high %v2632, %v2632
  %v2681 = vunpack.c.l.s4 1966171168
  %v2682 = vunpack.c.0.s8 %v2681
  %v2683 = vlaneseq
  %v2684 = vshrl.u32 %v2683, 7
  %v2685 = vsub.s32 %v2682, %v2684
  %v2686 = vrot.slane %v2632, %v2685
  %v2688 = vunpack.c.l.s4 1966171168
  %v2689 = vunpack.c.0.s8 %v2688
  %v2690 = vlaneseq
  %v2691 = vshrl.u32 %v2690, 7
  %v2692 = vsub.s32 %v2689, %v2691
  %v2693 = vrot.slane %v2679, %v2692
  %v2694 = vcombine.high %v2686, %v2686
  %v2695 = vcombine.high %v2693, %v2693
  %v2697 = vunpack.c.l.s4 1966171168
  %v2698 = vunpack.c.0.s8 %v2697
  %v2699 = vlaneseq
  %v2700 = vshrl.u32 %v2699, 7
  %v2701 = vsub.s32 %v2698, %v2700
  %v2702 = vrot.slane %v2686, %v2701
  %v2704 = vunpack.c.l.s4 1966171168
  %v2705 = vunpack.c.0.s8 %v2704
  %v2706 = vlaneseq
  %v2707 = vshrl.u32 %v2706, 7
  %v2708 = vsub.s32 %v2705, %v2707
  %v2709 = vrot.slane %v2693, %v2708
  %v2711 = vunpack.c.l.s4 1966171168
  %v2712 = vunpack.c.0.s8 %v2711
  %v2713 = vlaneseq
  %v2714 = vshrl.u32 %v2713, 7
  %v2715 = vsub.s32 %v2712, %v2714
  %v2716 = vrot.slane %v2694, %v2715
  %v2718 = vunpack.c.l.s4 1966171168
  %v2719 = vunpack.c.0.s8 %v2718
  %v2720 = vlaneseq
  %v2721 = vshrl.u32 %v2720, 7
  %v2722 = vsub.s32 %v2719, %v2721
  %v2723 = vrot.slane %v2695, %v2722
  %v2724 = vcombine.high %v2702, %v2702
  %v2725 = vcombine.high %v2709, %v2709
  %v2726 = vcombine.high %v2716, %v2716
  %v2727 = vcombine.high %v2723, %v2723
  %v2736 = vadd.f32 %v2404, %v2702
  %v2737 = vadd.f32 %v2406, %v2716
  %v2738 = vadd.f32 %v2408, %v2724
  %v2739 = vadd.f32 %v2410, %v2726
  %v2740 = vadd.f32 %v2412, %v2709
  %v2741 = vadd.f32 %v2414, %v2723
  %v2742 = vadd.f32 %v2416, %v2725
  %v2743 = vadd.f32 %v2418, %v2727
  %v2744 = vxor.u32 %v2736, 2147483648
  %v2745 = vxor.u32 %v2737, 2147483648
  %v2746 = vxor.u32 %v2738, 2147483648
  %v2747 = vxor.u32 %v2739, 2147483648
  %v2748 = vxor.u32 %v2740, 2147483648
  %v2749 = vxor.u32 %v2741, 2147483648
  %v2750 = vxor.u32 %v2742, 2147483648
  %v2751 = vxor.u32 %v2743, 2147483648
  %v2752 = vmul.f32 %v2744, 1.442695
  %v2753 = vpow.pop %v2752
  %v2754 = vmul.f32 %v2745, 1.442695
  %v2755 = vpow.pop %v2754
  %v2756 = vmul.f32 %v2746, 1.442695
  %v2757 = vpow.pop %v2756
  %v2758 = vmul.f32 %v2747, 1.442695
  %v2759 = vpow.pop %v2758
  %v2760 = vmul.f32 %v2748, 1.442695
  %v2761 = vpow.pop %v2760
  %v2762 = vmul.f32 %v2749, 1.442695
  %v2763 = vpow.pop %v2762
  %v2764 = vmul.f32 %v2750, 1.442695
  %v2765 = vpow.pop %v2764
  %v2766 = vmul.f32 %v2751, 1.442695
  %v2767 = vpow.pop %v2766
  %v2768 = vadd.f32 %v2753, 1.0
  %v2769 = vadd.f32 %v2755, 1.0
  %v2770 = vadd.f32 %v2757, 1.0
  %v2771 = vadd.f32 %v2759, 1.0
  %v2772 = vadd.f32 %v2761, 1.0
  %v2773 = vadd.f32 %v2763, 1.0
  %v2774 = vadd.f32 %v2765, 1.0
  %v2775 = vadd.f32 %v2767, 1.0
  %v2776 = vrcp.pop %v2768
  %v2777 = vmul.f32 1.0, %v2776
  %v2778 = vrcp.pop %v2769
  %v2779 = vmul.f32 1.0, %v2778
  %v2780 = vrcp.pop %v2770
  %v2781 = vmul.f32 1.0, %v2780
  %v2782 = vrcp.pop %v2771
  %v2783 = vmul.f32 1.0, %v2782
  %v2784 = vrcp.pop %v2772
  %v2785 = vmul.f32 1.0, %v2784
  %v2786 = vrcp.pop %v2773
  %v2787 = vmul.f32 1.0, %v2786
  %v2788 = vrcp.pop %v2774
  %v2789 = vmul.f32 1.0, %v2788
  %v2790 = vrcp.pop %v2775
  %v2791 = vmul.f32 1.0, %v2790
  %v2800 = vrot.slane %v2404, 1
  %v2801 = vrot.slane %v2406, 1
  %v2802 = vrot.slane %v2408, 1
  %v2803 = vrot.slane %v2410, 1
  %v2804 = vrot.slane %v2412, 1
  %v2805 = vrot.slane %v2414, 1
  %v2806 = vrot.slane %v2416, 1
  %v2807 = vrot.slane %v2418, 1
  %v2817 = vcombine.high %v2634, %v2634
  %v2819 = vunpack.c.l.s4 1966171168
  %v2820 = vunpack.c.0.s8 %v2819
  %v2821 = vlaneseq
  %v2822 = vshrl.u32 %v2821, 7
  %v2823 = vsub.s32 %v2820, %v2822
  %v2824 = vrot.slane %v2634, %v2823
  %v2826 = vunpack.c.l.s4 1966171168
  %v2827 = vunpack.c.0.s8 %v2826
  %v2828 = vlaneseq
  %v2829 = vshrl.u32 %v2828, 7
  %v2830 = vsub.s32 %v2827, %v2829
  %v2831 = vrot.slane %v2817, %v2830
  %v2832 = vcombine.high %v2824, %v2824
  %v2833 = vcombine.high %v2831, %v2831
  %v2835 = vunpack.c.l.s4 1966171168
  %v2836 = vunpack.c.0.s8 %v2835
  %v2837 = vlaneseq
  %v2838 = vshrl.u32 %v2837, 7
  %v2839 = vsub.s32 %v2836, %v2838
  %v2840 = vrot.slane %v2824, %v2839
  %v2842 = vunpack.c.l.s4 1966171168
  %v2843 = vunpack.c.0.s8 %v2842
  %v2844 = vlaneseq
  %v2845 = vshrl.u32 %v2844, 7
  %v2846 = vsub.s32 %v2843, %v2845
  %v2847 = vrot.slane %v2831, %v2846
  %v2849 = vunpack.c.l.s4 1966171168
  %v2850 = vunpack.c.0.s8 %v2849
  %v2851 = vlaneseq
  %v2852 = vshrl.u32 %v2851, 7
  %v2853 = vsub.s32 %v2850, %v2852
  %v2854 = vrot.slane %v2832, %v2853
  %v2856 = vunpack.c.l.s4 1966171168
  %v2857 = vunpack.c.0.s8 %v2856
  %v2858 = vlaneseq
  %v2859 = vshrl.u32 %v2858, 7
  %v2860 = vsub.s32 %v2857, %v2859
  %v2861 = vrot.slane %v2833, %v2860
  %v2862 = vcombine.high %v2840, %v2840
  %v2863 = vcombine.high %v2847, %v2847
  %v2864 = vcombine.high %v2854, %v2854
  %v2865 = vcombine.high %v2861, %v2861
  %v2874 = vadd.f32 %v2800, %v2840
  %v2875 = vadd.f32 %v2801, %v2854
  %v2876 = vadd.f32 %v2802, %v2862
  %v2877 = vadd.f32 %v2803, %v2864
  %v2878 = vadd.f32 %v2804, %v2847
  %v2879 = vadd.f32 %v2805, %v2861
  %v2880 = vadd.f32 %v2806, %v2863
  %v2881 = vadd.f32 %v2807, %v2865
  %v2882 = vxor.u32 %v2874, 2147483648
  %v2883 = vxor.u32 %v2875, 2147483648
  %v2884 = vxor.u32 %v2876, 2147483648
  %v2885 = vxor.u32 %v2877, 2147483648
  %v2886 = vxor.u32 %v2878, 2147483648
  %v2887 = vxor.u32 %v2879, 2147483648
  %v2888 = vxor.u32 %v2880, 2147483648
  %v2889 = vxor.u32 %v2881, 2147483648
  %v2890 = vmul.f32 %v2882, 1.442695
  %v2891 = vpow.pop %v2890
  %v2892 = vmul.f32 %v2883, 1.442695
  %v2893 = vpow.pop %v2892
  %v2894 = vmul.f32 %v2884, 1.442695
  %v2895 = vpow.pop %v2894
  %v2896 = vmul.f32 %v2885, 1.442695
  %v2897 = vpow.pop %v2896
  %v2898 = vmul.f32 %v2886, 1.442695
  %v2899 = vpow.pop %v2898
  %v2900 = vmul.f32 %v2887, 1.442695
  %v2901 = vpow.pop %v2900
  %v2902 = vmul.f32 %v2888, 1.442695
  %v2903 = vpow.pop %v2902
  %v2904 = vmul.f32 %v2889, 1.442695
  %v2905 = vpow.pop %v2904
  %v2906 = vadd.f32 %v2891, 1.0
  %v2907 = vadd.f32 %v2893, 1.0
  %v2908 = vadd.f32 %v2895, 1.0
  %v2909 = vadd.f32 %v2897, 1.0
  %v2910 = vadd.f32 %v2899, 1.0
  %v2911 = vadd.f32 %v2901, 1.0
  %v2912 = vadd.f32 %v2903, 1.0
  %v2913 = vadd.f32 %v2905, 1.0
  %v2914 = vrcp.pop %v2906
  %v2915 = vmul.f32 1.0, %v2914
  %v2916 = vrcp.pop %v2907
  %v2917 = vmul.f32 1.0, %v2916
  %v2918 = vrcp.pop %v2908
  %v2919 = vmul.f32 1.0, %v2918
  %v2920 = vrcp.pop %v2909
  %v2921 = vmul.f32 1.0, %v2920
  %v2922 = vrcp.pop %v2910
  %v2923 = vmul.f32 1.0, %v2922
  %v2924 = vrcp.pop %v2911
  %v2925 = vmul.f32 1.0, %v2924
  %v2926 = vrcp.pop %v2912
  %v2927 = vmul.f32 1.0, %v2926
  %v2928 = vrcp.pop %v2913
  %v2929 = vmul.f32 1.0, %v2928
  %v2931 = vcombine.high %v2673, %v2673
  %v2933 = vunpack.c.l.s4 1966171168
  %v2934 = vunpack.c.0.s8 %v2933
  %v2935 = vlaneseq
  %v2936 = vshrl.u32 %v2935, 7
  %v2937 = vsub.s32 %v2934, %v2936
  %v2938 = vrot.slane %v2673, %v2937
  %v2940 = vunpack.c.l.s4 1966171168
  %v2941 = vunpack.c.0.s8 %v2940
  %v2942 = vlaneseq
  %v2943 = vshrl.u32 %v2942, 7
  %v2944 = vsub.s32 %v2941, %v2943
  %v2945 = vrot.slane %v2931, %v2944
  %v2946 = vcombine.high %v2938, %v2938
  %v2947 = vcombine.high %v2945, %v2945
  %v2949 = vunpack.c.l.s4 1966171168
  %v2950 = vunpack.c.0.s8 %v2949
  %v2951 = vlaneseq
  %v2952 = vshrl.u32 %v2951, 7
  %v2953 = vsub.s32 %v2950, %v2952
  %v2954 = vrot.slane %v2938, %v2953
  %v2956 = vunpack.c.l.s4 1966171168
  %v2957 = vunpack.c.0.s8 %v2956
  %v2958 = vlaneseq
  %v2959 = vshrl.u32 %v2958, 7
  %v2960 = vsub.s32 %v2957, %v2959
  %v2961 = vrot.slane %v2945, %v2960
  %v2963 = vunpack.c.l.s4 1966171168
  %v2964 = vunpack.c.0.s8 %v2963
  %v2965 = vlaneseq
  %v2966 = vshrl.u32 %v2965, 7
  %v2967 = vsub.s32 %v2964, %v2966
  %v2968 = vrot.slane %v2946, %v2967
  %v2970 = vunpack.c.l.s4 1966171168
  %v2971 = vunpack.c.0.s8 %v2970
  %v2972 = vlaneseq
  %v2973 = vshrl.u32 %v2972, 7
  %v2974 = vsub.s32 %v2971, %v2973
  %v2975 = vrot.slane %v2947, %v2974
  %v2976 = vcombine.high %v2954, %v2954
  %v2977 = vcombine.high %v2961, %v2961
  %v2978 = vcombine.high %v2968, %v2968
  %v2979 = vcombine.high %v2975, %v2975
  %v2988 = vmul.f32 %v2777, %v2954
  %v2989 = vmul.f32 %v2779, %v2968
  %v2990 = vmul.f32 %v2781, %v2976
  %v2991 = vmul.f32 %v2783, %v2978
  %v2992 = vmul.f32 %v2785, %v2961
  %v2993 = vmul.f32 %v2787, %v2975
  %v2994 = vmul.f32 %v2789, %v2977
  %v2995 = vmul.f32 %v2791, %v2979
  %v2996 = vrot.slane %v2404, 2
  %v2997 = vrot.slane %v2406, 2
  %v2998 = vrot.slane %v2408, 2
  %v2999 = vrot.slane %v2410, 2
  %v3000 = vrot.slane %v2412, 2
  %v3001 = vrot.slane %v2414, 2
  %v3002 = vrot.slane %v2416, 2
  %v3003 = vrot.slane %v2418, 2
  %v3012 = vadd.f32 %v2996, %v2988
  %v3013 = vadd.f32 %v2997, %v2989
  %v3014 = vadd.f32 %v2998, %v2990
  %v3015 = vadd.f32 %v2999, %v2991
  %v3016 = vadd.f32 %v3000, %v2992
  %v3017 = vadd.f32 %v3001, %v2993
  %v3018 = vadd.f32 %v3002, %v2994
  %v3019 = vadd.f32 %v3003, %v2995
  %v3020 = vtanh.pop %v3012
  %v3021 = vtanh.pop %v3013
  %v3022 = vtanh.pop %v3014
  %v3023 = vtanh.pop %v3015
  %v3024 = vtanh.pop %v3016
  %v3025 = vtanh.pop %v3017
  %v3026 = vtanh.pop %v3018
  %v3027 = vtanh.pop %v3019
  %v3028 = vsub.f32 1.0, %v2915
  %v3029 = vsub.f32 1.0, %v2917
  %v3030 = vsub.f32 1.0, %v2919
  %v3031 = vsub.f32 1.0, %v2921
  %v3032 = vsub.f32 1.0, %v2923
  %v3033 = vsub.f32 1.0, %v2925
  %v3034 = vsub.f32 1.0, %v2927
  %v3035 = vsub.f32 1.0, %v2929
  %v3036 = vmul.f32 %v3028, %v3020
  %v3037 = vmul.f32 %v3029, %v3021
  %v3038 = vmul.f32 %v3030, %v3022
  %v3039 = vmul.f32 %v3031, %v3023
  %v3040 = vmul.f32 %v3032, %v3024
  %v3041 = vmul.f32 %v3033, %v3025
  %v3042 = vmul.f32 %v3034, %v3026
  %v3043 = vmul.f32 %v3035, %v3027
  %v3044 = vmul.f32 %v2915, %v2361
  %v3045 = vmul.f32 %v2917, %v2375
  %v3046 = vmul.f32 %v2919, %v2383
  %v3047 = vmul.f32 %v2921, %v2385
  %v3048 = vmul.f32 %v2923, %v2368
  %v3049 = vmul.f32 %v2925, %v2382
  %v3050 = vmul.f32 %v2927, %v2384
  %v3051 = vmul.f32 %v2929, %v2386
  %v3052 = vadd.f32 %v3036, %v3044
  %v3053 = vadd.f32 %v3037, %v3045
  %v3054 = vadd.f32 %v3038, %v3046
  %v3055 = vadd.f32 %v3039, %v3047
  %v3056 = vadd.f32 %v3040, %v3048
  %v3057 = vadd.f32 %v3041, %v3049
  %v3058 = vadd.f32 %v3042, %v3050
  %v3059 = vadd.f32 %v3043, %v3051
  %3060 = vset.pattern.permute.xlu0 3
  %3061 = vperm.xlu0 %3060, %v701
  %v3062 = vpop.permute.xlu0 %3061
  %vm3063 = vcmp.eq.s32.totalorder %v3062, 1
  %v3072 = vcombine.low %v3052, %v3053
  %v3073 = vcombine.low %v3054, %v3055
  %v3074 = vcombine.low %v3056, %v3057
  %v3075 = vcombine.low %v3058, %v3059
  %v3077 = vunpack.c.l.s4 1966171168
  %v3078 = vunpack.c.0.s8 %v3077
  %v3079 = vlaneseq
  %v3080 = vshrl.u32 %v3079, 7
  %v3081 = vsub.s32 %v3078, %v3080
  %v3082 = vrot.slane %v3072, %v3081
  %v3084 = vunpack.c.l.s4 1966171168
  %v3085 = vunpack.c.0.s8 %v3084
  %v3086 = vlaneseq
  %v3087 = vshrl.u32 %v3086, 7
  %v3088 = vsub.s32 %v3085, %v3087
  %v3089 = vrot.slane %v3073, %v3088
  %v3091 = vunpack.c.l.s4 1966171168
  %v3092 = vunpack.c.0.s8 %v3091
  %v3093 = vlaneseq
  %v3094 = vshrl.u32 %v3093, 7
  %v3095 = vsub.s32 %v3092, %v3094
  %v3096 = vrot.slane %v3074, %v3095
  %v3098 = vunpack.c.l.s4 1966171168
  %v3099 = vunpack.c.0.s8 %v3098
  %v3100 = vlaneseq
  %v3101 = vshrl.u32 %v3100, 7
  %v3102 = vsub.s32 %v3099, %v3101
  %v3103 = vrot.slane %v3075, %v3102
  %v3104 = vcombine.low %v3082, %v3089
  %v3105 = vcombine.low %v3096, %v3103
  %v3107 = vunpack.c.l.s4 1966171168
  %v3108 = vunpack.c.0.s8 %v3107
  %v3109 = vlaneseq
  %v3110 = vshrl.u32 %v3109, 7
  %v3111 = vsub.s32 %v3108, %v3110
  %v3112 = vrot.slane %v3104, %v3111
  %v3114 = vunpack.c.l.s4 1966171168
  %v3115 = vunpack.c.0.s8 %v3114
  %v3116 = vlaneseq
  %v3117 = vshrl.u32 %v3116, 7
  %v3118 = vsub.s32 %v3115, %v3117
  %v3119 = vrot.slane %v3105, %v3118
  %v3120 = vcombine.low %v3112, %v3119
  %v3122 = vsel %vm3063, %v3120, %v2336
  %v3124 = vcombine.high %v3122, %v3122
  %v3126 = vunpack.c.l.s4 1966171168
  %v3127 = vunpack.c.0.s8 %v3126
  %v3128 = vlaneseq
  %v3129 = vshrl.u32 %v3128, 7
  %v3130 = vsub.s32 %v3127, %v3129
  %v3131 = vrot.slane %v3122, %v3130
  %v3133 = vunpack.c.l.s4 1966171168
  %v3134 = vunpack.c.0.s8 %v3133
  %v3135 = vlaneseq
  %v3136 = vshrl.u32 %v3135, 7
  %v3137 = vsub.s32 %v3134, %v3136
  %v3138 = vrot.slane %v3124, %v3137
  %v3139 = vcombine.high %v3131, %v3131
  %v3140 = vcombine.high %v3138, %v3138
  %v3142 = vunpack.c.l.s4 1966171168
  %v3143 = vunpack.c.0.s8 %v3142
  %v3144 = vlaneseq
  %v3145 = vshrl.u32 %v3144, 7
  %v3146 = vsub.s32 %v3143, %v3145
  %v3147 = vrot.slane %v3131, %v3146
  %v3149 = vunpack.c.l.s4 1966171168
  %v3150 = vunpack.c.0.s8 %v3149
  %v3151 = vlaneseq
  %v3152 = vshrl.u32 %v3151, 7
  %v3153 = vsub.s32 %v3150, %v3152
  %v3154 = vrot.slane %v3138, %v3153
  %v3156 = vunpack.c.l.s4 1966171168
  %v3157 = vunpack.c.0.s8 %v3156
  %v3158 = vlaneseq
  %v3159 = vshrl.u32 %v3158, 7
  %v3160 = vsub.s32 %v3157, %v3159
  %v3161 = vrot.slane %v3139, %v3160
  %v3163 = vunpack.c.l.s4 1966171168
  %v3164 = vunpack.c.0.s8 %v3163
  %v3165 = vlaneseq
  %v3166 = vshrl.u32 %v3165, 7
  %v3167 = vsub.s32 %v3164, %v3166
  %v3168 = vrot.slane %v3140, %v3167
  %v3169 = vcombine.high %v3147, %v3147
  %v3170 = vcombine.high %v3154, %v3154
  %v3171 = vcombine.high %v3161, %v3161
  %v3172 = vcombine.high %v3168, %v3168
  %3181 = vst [vmem:[#allocation2 + $0x3] sm:$0x1] %v3147
  %3182 = vst [vmem:[#allocation2 + $0xb] sm:$0x1] %v3161
  %3183 = vst [vmem:[#allocation2 + $0x13] sm:$0x1] %v3169
  %3184 = vst [vmem:[#allocation2 + $0x1b] sm:$0x1] %v3171
  %3185 = vst [vmem:[#allocation2 + $0x23] sm:$0x1] %v3154
  %3186 = vst [vmem:[#allocation2 + $0x2b] sm:$0x1] %v3168
  %3187 = vst [vmem:[#allocation2 + $0x33] sm:$0x1] %v3170
  %3188 = vst [vmem:[#allocation2 + $0x3b] sm:$0x1] %v3172
  %s3189 = scalar_lea.vmem %s0, 4
  %v3190 = vld [vmem:[%s3189] ss:$8 sm:$0x7]
  %s3191 = scalar_lea.vmem %s0, 28
  %v3192 = vld [vmem:[%s3191] ss:$8 sm:$0x7]
  %s3193 = scalar_lea.vmem %s0, 52
  %v3194 = vld [vmem:[%s3193] ss:$8 sm:$0x7]
  %s3195 = scalar_lea.vmem %s0, 76
  %v3196 = vld [vmem:[%s3195] ss:$8 sm:$0x7]
  %s3197 = scalar_lea.vmem %s0, 100
  %v3198 = vld [vmem:[%s3197] ss:$8 sm:$0x7]
  %s3199 = scalar_lea.vmem %s0, 124
  %v3200 = vld [vmem:[%s3199] ss:$8 sm:$0x7]
  %s3201 = scalar_lea.vmem %s0, 148
  %v3202 = vld [vmem:[%s3201] ss:$8 sm:$0x7]
  %s3203 = scalar_lea.vmem %s0, 172
  %v3204 = vld [vmem:[%s3203] ss:$8 sm:$0x7]
  %v3205 = vpack.c.bf16 %v3122, %v3122
  %v3206 = vld [vmem:[%s3] sm:$0xff]
  %v3207 = vld [vmem:[%s3 + $0x8] sm:$0xf]
  %v3208 = vld [vmem:[%s3 + $0xc] sm:$0xff]
  %v3209 = vld [vmem:[%s3 + $0x14] sm:$0xf]
  %v3210 = vld [vmem:[%s3 + $0x18] sm:$0xff]
  %v3211 = vld [vmem:[%s3 + $0x20] sm:$0xf]
  %v3212 = vld [vmem:[%s3 + $0x24] sm:$0xff]
  %v3213 = vld [vmem:[%s3 + $0x2c] sm:$0xf]
  %v3214 = vld [vmem:[%s3 + $0x30] sm:$0xff]
  %v3215 = vld [vmem:[%s3 + $0x38] sm:$0xf]
  %v3216 = vld [vmem:[%s3 + $0x3c] sm:$0xff]
  %v3217 = vld [vmem:[%s3 + $0x44] sm:$0xf]
  %v3218 = vld [vmem:[%s3 + $0x48] sm:$0xff]
  %v3219 = vld [vmem:[%s3 + $0x50] sm:$0xf]
  %v3220 = vld [vmem:[%s3 + $0x54] sm:$0xff]
  %v3221 = vld [vmem:[%s3 + $0x5c] sm:$0xf]
  %v3222 = vld [vmem:[%s3 + $0x60] sm:$0xff]
  %v3223 = vld [vmem:[%s3 + $0x68] sm:$0xf]
  %v3224 = vld [vmem:[%s3 + $0x6c] sm:$0xff]
  %v3225 = vld [vmem:[%s3 + $0x74] sm:$0xf]
  %v3226 = vld [vmem:[%s3 + $0x78] sm:$0xff]
  %v3227 = vld [vmem:[%s3 + $0x80] sm:$0xf]
  %v3228 = vld [vmem:[%s3 + $0x84] sm:$0xff]
  %v3229 = vld [vmem:[%s3 + $0x8c] sm:$0xf]
  %v3230 = vld [vmem:[%s3 + $0x90] sm:$0xff]
  %v3231 = vld [vmem:[%s3 + $0x98] sm:$0xf]
  %v3232 = vld [vmem:[%s3 + $0x9c] sm:$0xff]
  %v3233 = vld [vmem:[%s3 + $0xa4] sm:$0xf]
  %v3234 = vld [vmem:[%s3 + $0xa8] sm:$0xff]
  %v3235 = vld [vmem:[%s3 + $0xb0] sm:$0xf]
  %v3236 = vld [vmem:[%s3 + $0xb4] sm:$0xff]
  %v3237 = vld [vmem:[%s3 + $0xbc] sm:$0xf]
  %v3238 = vld [vmem:[%s4] sm:$0x7]
  %v3240 = vlaneseq
  %v3241 = vshrl.u32 %v3240, 7
  %v3242 = vsub.s32 0, %v3241
  %v3243 = vrot.slane %v3238, %v3242
  %v3244 = vlaneseq
  %v3245 = vshrl.u32 %v3244, 7
  %v3246 = vsub.s32 1, %v3245
  %v3247 = vrot.slane %v3238, %v3246
  %v3248 = vlaneseq
  %v3249 = vshrl.u32 %v3248, 7
  %v3250 = vsub.s32 2, %v3249
  %v3251 = vrot.slane %v3238, %v3250
  %v3287 = vunpack.c.l.b16 %v3206
  %v3288 = vunpack.c.h.b16 %v3206
  %v3289 = vunpack.c.l.b16 %v3207
  %v3290 = vunpack.c.l.b16 %v3208
  %v3291 = vunpack.c.h.b16 %v3208
  %v3292 = vunpack.c.l.b16 %v3209
  %v3293 = vunpack.c.l.b16 %v3210
  %v3294 = vunpack.c.h.b16 %v3210
  %v3295 = vunpack.c.l.b16 %v3211
  %v3296 = vunpack.c.l.b16 %v3212
  %v3297 = vunpack.c.h.b16 %v3212
  %v3298 = vunpack.c.l.b16 %v3213
  %v3299 = vunpack.c.l.b16 %v3214
  %v3300 = vunpack.c.h.b16 %v3214
  %v3301 = vunpack.c.l.b16 %v3215
  %v3302 = vunpack.c.l.b16 %v3216
  %v3303 = vunpack.c.h.b16 %v3216
  %v3304 = vunpack.c.l.b16 %v3217
  %v3305 = vunpack.c.l.b16 %v3218
  %v3306 = vunpack.c.h.b16 %v3218
  %v3307 = vunpack.c.l.b16 %v3219
  %v3308 = vunpack.c.l.b16 %v3220
  %v3309 = vunpack.c.h.b16 %v3220
  %v3310 = vunpack.c.l.b16 %v3221
  %v3311 = vunpack.c.l.b16 %v3222
  %v3312 = vunpack.c.h.b16 %v3222
  %v3313 = vunpack.c.l.b16 %v3223
  %v3314 = vunpack.c.l.b16 %v3224
  %v3315 = vunpack.c.h.b16 %v3224
  %v3316 = vunpack.c.l.b16 %v3225
  %v3317 = vunpack.c.l.b16 %v3226
  %v3318 = vunpack.c.h.b16 %v3226
  %v3319 = vunpack.c.l.b16 %v3227
  %v3320 = vunpack.c.l.b16 %v3228
  %v3321 = vunpack.c.h.b16 %v3228
  %v3322 = vunpack.c.l.b16 %v3229
  %v3323 = vunpack.c.l.b16 %v3230
  %v3324 = vunpack.c.h.b16 %v3230
  %v3325 = vunpack.c.l.b16 %v3231
  %v3326 = vunpack.c.l.b16 %v3232
  %v3327 = vunpack.c.h.b16 %v3232
  %v3328 = vunpack.c.l.b16 %v3233
  %v3329 = vunpack.c.l.b16 %v3234
  %v3330 = vunpack.c.h.b16 %v3234
  %v3331 = vunpack.c.l.b16 %v3235
  %v3332 = vunpack.c.l.b16 %v3236
  %v3333 = vunpack.c.h.b16 %v3236
  %v3334 = vunpack.c.l.b16 %v3237
  %v3335 = vpack.c.b16 %v3290, %v3287
  %v3336 = vpack.c.b16 %v3291, %v3288
  %v3337 = vpack.c.b16 %v3292, %v3289
  %v3338 = vpack.c.b16 %v3296, %v3293
  %v3339 = vpack.c.b16 %v3297, %v3294
  %v3340 = vpack.c.b16 %v3298, %v3295
  %v3341 = vpack.c.b16 %v3302, %v3299
  %v3342 = vpack.c.b16 %v3303, %v3300
  %v3343 = vpack.c.b16 %v3304, %v3301
  %v3344 = vpack.c.b16 %v3308, %v3305
  %v3345 = vpack.c.b16 %v3309, %v3306
  %v3346 = vpack.c.b16 %v3310, %v3307
  %v3347 = vpack.c.b16 %v3314, %v3311
  %v3348 = vpack.c.b16 %v3315, %v3312
  %v3349 = vpack.c.b16 %v3316, %v3313
  %v3350 = vpack.c.b16 %v3320, %v3317
  %v3351 = vpack.c.b16 %v3321, %v3318
  %v3352 = vpack.c.b16 %v3322, %v3319
  %v3353 = vpack.c.b16 %v3326, %v3323
  %v3354 = vpack.c.b16 %v3327, %v3324
  %v3355 = vpack.c.b16 %v3328, %v3325
  %v3356 = vpack.c.b16 %v3332, %v3329
  %v3357 = vpack.c.b16 %v3333, %v3330
  %v3358 = vpack.c.b16 %v3334, %v3331
  %3383 = vmatprep.subr.bf16.mxu0 %v3336
  %3384 = vmatpush1.bf16.msra.mxu0 %v3335
  %3385 = vmatprep.subr.bf16.mxu0 %v3339
  %3386 = vmatpush1.bf16.msra.mxu0 %v3338
  %3387 = vmatprep.subr.bf16.mxu0 %v3342
  %3388 = vmatpush1.bf16.msra.mxu0 %v3341
  %3389 = vmatprep.subr.bf16.mxu0 %v3345
  %3390 = vmatpush1.bf16.msra.mxu0 %v3344
  %3391 = vmatprep.subr.bf16.mxu0 %v3348
  %3392 = vmatpush1.bf16.msra.mxu0 %v3347
  %3393 = vmatprep.subr.bf16.mxu0 %v3351
  %3394 = vmatpush1.bf16.msra.mxu0 %v3350
  %3395 = vmatprep.subr.bf16.mxu0 %v3354
  %3396 = vmatpush1.bf16.msra.mxu0 %v3353
  %3397 = vmatprep.subr.bf16.mxu0 %v3357
  %3398 = vmatpush1.bf16.msra.mxu0 %v3356
  %3399 = vmatprep.subr.bf16.mxu0 0
  %3400 = vmatpush1.bf16.msra.mxu0 0
  %3401 = vmatprep.subr.bf16.mxu0 0
  %3402 = vmatpush1.bf16.msra.mxu0 0
  %3403 = vmatprep.subr.bf16.mxu0 0
  %3404 = vmatpush1.bf16.msra.mxu0 0
  %3405 = vmatprep.subr.bf16.mxu0 0
  %3406 = vmatpush1.bf16.msra.mxu0 0
  %3407 = vmatprep.subr.bf16.mxu0 0
  %3408 = vmatpush1.bf16.msra.mxu0 0
  %3409 = vmatprep.subr.bf16.mxu0 0
  %3410 = vmatpush1.bf16.msra.mxu0 0
  %3411 = vmatprep.subr.bf16.mxu0 0
  %3412 = vmatpush1.bf16.msra.mxu0 0
  %3413 = vmatprep.subr.bf16.mxu0 0
  %3414 = vmatpush1.bf16.msra.mxu0 0
  %3415 = vmatprep.mubr.bf16.mxu0 0
  %3416 = vmatmul.mubr.bf16.gmra.mrb[0].mxu0 %v3205
  %v3417 = vpop.f32.mrb[0].mxu0
  %v3418 = vadd.f32 %v3243, %v3417
  %v3419 = vpop.f32.mrb[0].mxu0
  %v3420 = vadd.f32 %v3247, %v3419
  %v3421 = vpop.f32.mrb[0].mxu0
  %v3422 = vpop.f32.mrb[0].mxu0
  %3423 = vdwg.mxu0
  %3424 = vmatprep.subr.bf16.mxu0 0
  %3425 = vmatpush1.bf16.msra.mxu0 %v3337
  %3426 = vmatprep.subr.bf16.mxu0 0
  %3427 = vmatpush1.bf16.msra.mxu0 %v3340
  %3428 = vmatprep.subr.bf16.mxu0 0
  %3429 = vmatpush1.bf16.msra.mxu0 %v3343
  %3430 = vmatprep.subr.bf16.mxu0 0
  %3431 = vmatpush1.bf16.msra.mxu0 %v3346
  %3432 = vmatprep.subr.bf16.mxu0 0
  %3433 = vmatpush1.bf16.msra.mxu0 %v3349
  %3434 = vmatprep.subr.bf16.mxu0 0
  %3435 = vmatpush1.bf16.msra.mxu0 %v3352
  %3436 = vmatprep.subr.bf16.mxu0 0
  %3437 = vmatpush1.bf16.msra.mxu0 %v3355
  %3438 = vmatprep.subr.bf16.mxu0 0
  %3439 = vmatpush1.bf16.msra.mxu0 %v3358
  %3440 = vmatprep.subr.bf16.mxu0 0
  %3441 = vmatpush1.bf16.msra.mxu0 0
  %3442 = vmatprep.subr.bf16.mxu0 0
  %3443 = vmatpush1.bf16.msra.mxu0 0
  %3444 = vmatprep.subr.bf16.mxu0 0
  %3445 = vmatpush1.bf16.msra.mxu0 0
  %3446 = vmatprep.subr.bf16.mxu0 0
  %3447 = vmatpush1.bf16.msra.mxu0 0
  %3448 = vmatprep.subr.bf16.mxu0 0
  %3449 = vmatpush1.bf16.msra.mxu0 0
  %3450 = vmatprep.subr.bf16.mxu0 0
  %3451 = vmatpush1.bf16.msra.mxu0 0
  %3452 = vmatprep.subr.bf16.mxu0 0
  %3453 = vmatpush1.bf16.msra.mxu0 0
  %3454 = vmatprep.subr.bf16.mxu0 0
  %3455 = vmatpush1.bf16.msra.mxu0 0
  %3456 = vmatprep.mubr.bf16.mxu0 0
  %3457 = vmatmul.mubr.bf16.gmra.mrb[0].mxu0 %v3205
  %v3458 = vpop.f32.mrb[0].mxu0
  %v3459 = vadd.f32 %v3251, %v3458
  %v3460 = vpop.f32.mrb[0].mxu0
  %v3461 = vpop.f32.mrb[0].mxu0
  %v3462 = vpop.f32.mrb[0].mxu0
  %3463 = vdwg.mxu0
  %v3465 = vcombine.high %v3418, %v3418
  %v3467 = vunpack.c.l.s4 1966171168
  %v3468 = vunpack.c.0.s8 %v3467
  %v3469 = vlaneseq
  %v3470 = vshrl.u32 %v3469, 7
  %v3471 = vsub.s32 %v3468, %v3470
  %v3472 = vrot.slane %v3418, %v3471
  %v3474 = vunpack.c.l.s4 1966171168
  %v3475 = vunpack.c.0.s8 %v3474
  %v3476 = vlaneseq
  %v3477 = vshrl.u32 %v3476, 7
  %v3478 = vsub.s32 %v3475, %v3477
  %v3479 = vrot.slane %v3465, %v3478
  %v3480 = vcombine.high %v3472, %v3472
  %v3481 = vcombine.high %v3479, %v3479
  %v3483 = vunpack.c.l.s4 1966171168
  %v3484 = vunpack.c.0.s8 %v3483
  %v3485 = vlaneseq
  %v3486 = vshrl.u32 %v3485, 7
  %v3487 = vsub.s32 %v3484, %v3486
  %v3488 = vrot.slane %v3472, %v3487
  %v3490 = vunpack.c.l.s4 1966171168
  %v3491 = vunpack.c.0.s8 %v3490
  %v3492 = vlaneseq
  %v3493 = vshrl.u32 %v3492, 7
  %v3494 = vsub.s32 %v3491, %v3493
  %v3495 = vrot.slane %v3479, %v3494
  %v3497 = vunpack.c.l.s4 1966171168
  %v3498 = vunpack.c.0.s8 %v3497
  %v3499 = vlaneseq
  %v3500 = vshrl.u32 %v3499, 7
  %v3501 = vsub.s32 %v3498, %v3500
  %v3502 = vrot.slane %v3480, %v3501
  %v3504 = vunpack.c.l.s4 1966171168
  %v3505 = vunpack.c.0.s8 %v3504
  %v3506 = vlaneseq
  %v3507 = vshrl.u32 %v3506, 7
  %v3508 = vsub.s32 %v3505, %v3507
  %v3509 = vrot.slane %v3481, %v3508
  %v3510 = vcombine.high %v3488, %v3488
  %v3511 = vcombine.high %v3495, %v3495
  %v3512 = vcombine.high %v3502, %v3502
  %v3513 = vcombine.high %v3509, %v3509
  %v3522 = vadd.f32 %v3190, %v3488
  %v3523 = vadd.f32 %v3192, %v3502
  %v3524 = vadd.f32 %v3194, %v3510
  %v3525 = vadd.f32 %v3196, %v3512
  %v3526 = vadd.f32 %v3198, %v3495
  %v3527 = vadd.f32 %v3200, %v3509
  %v3528 = vadd.f32 %v3202, %v3511
  %v3529 = vadd.f32 %v3204, %v3513
  %v3530 = vxor.u32 %v3522, 2147483648
  %v3531 = vxor.u32 %v3523, 2147483648
  %v3532 = vxor.u32 %v3524, 2147483648
  %v3533 = vxor.u32 %v3525, 2147483648
  %v3534 = vxor.u32 %v3526, 2147483648
  %v3535 = vxor.u32 %v3527, 2147483648
  %v3536 = vxor.u32 %v3528, 2147483648
  %v3537 = vxor.u32 %v3529, 2147483648
  %v3538 = vmul.f32 %v3530, 1.442695
  %v3539 = vpow.pop %v3538
  %v3540 = vmul.f32 %v3531, 1.442695
  %v3541 = vpow.pop %v3540
  %v3542 = vmul.f32 %v3532, 1.442695
  %v3543 = vpow.pop %v3542
  %v3544 = vmul.f32 %v3533, 1.442695
  %v3545 = vpow.pop %v3544
  %v3546 = vmul.f32 %v3534, 1.442695
  %v3547 = vpow.pop %v3546
  %v3548 = vmul.f32 %v3535, 1.442695
  %v3549 = vpow.pop %v3548
  %v3550 = vmul.f32 %v3536, 1.442695
  %v3551 = vpow.pop %v3550
  %v3552 = vmul.f32 %v3537, 1.442695
  %v3553 = vpow.pop %v3552
  %v3554 = vadd.f32 %v3539, 1.0
  %v3555 = vadd.f32 %v3541, 1.0
  %v3556 = vadd.f32 %v3543, 1.0
  %v3557 = vadd.f32 %v3545, 1.0
  %v3558 = vadd.f32 %v3547, 1.0
  %v3559 = vadd.f32 %v3549, 1.0
  %v3560 = vadd.f32 %v3551, 1.0
  %v3561 = vadd.f32 %v3553, 1.0
  %v3562 = vrcp.pop %v3554
  %v3563 = vmul.f32 1.0, %v3562
  %v3564 = vrcp.pop %v3555
  %v3565 = vmul.f32 1.0, %v3564
  %v3566 = vrcp.pop %v3556
  %v3567 = vmul.f32 1.0, %v3566
  %v3568 = vrcp.pop %v3557
  %v3569 = vmul.f32 1.0, %v3568
  %v3570 = vrcp.pop %v3558
  %v3571 = vmul.f32 1.0, %v3570
  %v3572 = vrcp.pop %v3559
  %v3573 = vmul.f32 1.0, %v3572
  %v3574 = vrcp.pop %v3560
  %v3575 = vmul.f32 1.0, %v3574
  %v3576 = vrcp.pop %v3561
  %v3577 = vmul.f32 1.0, %v3576
  %v3586 = vrot.slane %v3190, 1
  %v3587 = vrot.slane %v3192, 1
  %v3588 = vrot.slane %v3194, 1
  %v3589 = vrot.slane %v3196, 1
  %v3590 = vrot.slane %v3198, 1
  %v3591 = vrot.slane %v3200, 1
  %v3592 = vrot.slane %v3202, 1
  %v3593 = vrot.slane %v3204, 1
  %v3603 = vcombine.high %v3420, %v3420
  %v3605 = vunpack.c.l.s4 1966171168
  %v3606 = vunpack.c.0.s8 %v3605
  %v3607 = vlaneseq
  %v3608 = vshrl.u32 %v3607, 7
  %v3609 = vsub.s32 %v3606, %v3608
  %v3610 = vrot.slane %v3420, %v3609
  %v3612 = vunpack.c.l.s4 1966171168
  %v3613 = vunpack.c.0.s8 %v3612
  %v3614 = vlaneseq
  %v3615 = vshrl.u32 %v3614, 7
  %v3616 = vsub.s32 %v3613, %v3615
  %v3617 = vrot.slane %v3603, %v3616
  %v3618 = vcombine.high %v3610, %v3610
  %v3619 = vcombine.high %v3617, %v3617
  %v3621 = vunpack.c.l.s4 1966171168
  %v3622 = vunpack.c.0.s8 %v3621
  %v3623 = vlaneseq
  %v3624 = vshrl.u32 %v3623, 7
  %v3625 = vsub.s32 %v3622, %v3624
  %v3626 = vrot.slane %v3610, %v3625
  %v3628 = vunpack.c.l.s4 1966171168
  %v3629 = vunpack.c.0.s8 %v3628
  %v3630 = vlaneseq
  %v3631 = vshrl.u32 %v3630, 7
  %v3632 = vsub.s32 %v3629, %v3631
  %v3633 = vrot.slane %v3617, %v3632
  %v3635 = vunpack.c.l.s4 1966171168
  %v3636 = vunpack.c.0.s8 %v3635
  %v3637 = vlaneseq
  %v3638 = vshrl.u32 %v3637, 7
  %v3639 = vsub.s32 %v3636, %v3638
  %v3640 = vrot.slane %v3618, %v3639
  %v3642 = vunpack.c.l.s4 1966171168
  %v3643 = vunpack.c.0.s8 %v3642
  %v3644 = vlaneseq
  %v3645 = vshrl.u32 %v3644, 7
  %v3646 = vsub.s32 %v3643, %v3645
  %v3647 = vrot.slane %v3619, %v3646
  %v3648 = vcombine.high %v3626, %v3626
  %v3649 = vcombine.high %v3633, %v3633
  %v3650 = vcombine.high %v3640, %v3640
  %v3651 = vcombine.high %v3647, %v3647
  %v3660 = vadd.f32 %v3586, %v3626
  %v3661 = vadd.f32 %v3587, %v3640
  %v3662 = vadd.f32 %v3588, %v3648
  %v3663 = vadd.f32 %v3589, %v3650
  %v3664 = vadd.f32 %v3590, %v3633
  %v3665 = vadd.f32 %v3591, %v3647
  %v3666 = vadd.f32 %v3592, %v3649
  %v3667 = vadd.f32 %v3593, %v3651
  %v3668 = vxor.u32 %v3660, 2147483648
  %v3669 = vxor.u32 %v3661, 2147483648
  %v3670 = vxor.u32 %v3662, 2147483648
  %v3671 = vxor.u32 %v3663, 2147483648
  %v3672 = vxor.u32 %v3664, 2147483648
  %v3673 = vxor.u32 %v3665, 2147483648
  %v3674 = vxor.u32 %v3666, 2147483648
  %v3675 = vxor.u32 %v3667, 2147483648
  %v3676 = vmul.f32 %v3668, 1.442695
  %v3677 = vpow.pop %v3676
  %v3678 = vmul.f32 %v3669, 1.442695
  %v3679 = vpow.pop %v3678
  %v3680 = vmul.f32 %v3670, 1.442695
  %v3681 = vpow.pop %v3680
  %v3682 = vmul.f32 %v3671, 1.442695
  %v3683 = vpow.pop %v3682
  %v3684 = vmul.f32 %v3672, 1.442695
  %v3685 = vpow.pop %v3684
  %v3686 = vmul.f32 %v3673, 1.442695
  %v3687 = vpow.pop %v3686
  %v3688 = vmul.f32 %v3674, 1.442695
  %v3689 = vpow.pop %v3688
  %v3690 = vmul.f32 %v3675, 1.442695
  %v3691 = vpow.pop %v3690
  %v3692 = vadd.f32 %v3677, 1.0
  %v3693 = vadd.f32 %v3679, 1.0
  %v3694 = vadd.f32 %v3681, 1.0
  %v3695 = vadd.f32 %v3683, 1.0
  %v3696 = vadd.f32 %v3685, 1.0
  %v3697 = vadd.f32 %v3687, 1.0
  %v3698 = vadd.f32 %v3689, 1.0
  %v3699 = vadd.f32 %v3691, 1.0
  %v3700 = vrcp.pop %v3692
  %v3701 = vmul.f32 1.0, %v3700
  %v3702 = vrcp.pop %v3693
  %v3703 = vmul.f32 1.0, %v3702
  %v3704 = vrcp.pop %v3694
  %v3705 = vmul.f32 1.0, %v3704
  %v3706 = vrcp.pop %v3695
  %v3707 = vmul.f32 1.0, %v3706
  %v3708 = vrcp.pop %v3696
  %v3709 = vmul.f32 1.0, %v3708
  %v3710 = vrcp.pop %v3697
  %v3711 = vmul.f32 1.0, %v3710
  %v3712 = vrcp.pop %v3698
  %v3713 = vmul.f32 1.0, %v3712
  %v3714 = vrcp.pop %v3699
  %v3715 = vmul.f32 1.0, %v3714
  %v3717 = vcombine.high %v3459, %v3459
  %v3719 = vunpack.c.l.s4 1966171168
  %v3720 = vunpack.c.0.s8 %v3719
  %v3721 = vlaneseq
  %v3722 = vshrl.u32 %v3721, 7
  %v3723 = vsub.s32 %v3720, %v3722
  %v3724 = vrot.slane %v3459, %v3723
  %v3726 = vunpack.c.l.s4 1966171168
  %v3727 = vunpack.c.0.s8 %v3726
  %v3728 = vlaneseq
  %v3729 = vshrl.u32 %v3728, 7
  %v3730 = vsub.s32 %v3727, %v3729
  %v3731 = vrot.slane %v3717, %v3730
  %v3732 = vcombine.high %v3724, %v3724
  %v3733 = vcombine.high %v3731, %v3731
  %v3735 = vunpack.c.l.s4 1966171168
  %v3736 = vunpack.c.0.s8 %v3735
  %v3737 = vlaneseq
  %v3738 = vshrl.u32 %v3737, 7
  %v3739 = vsub.s32 %v3736, %v3738
  %v3740 = vrot.slane %v3724, %v3739
  %v3742 = vunpack.c.l.s4 1966171168
  %v3743 = vunpack.c.0.s8 %v3742
  %v3744 = vlaneseq
  %v3745 = vshrl.u32 %v3744, 7
  %v3746 = vsub.s32 %v3743, %v3745
  %v3747 = vrot.slane %v3731, %v3746
  %v3749 = vunpack.c.l.s4 1966171168
  %v3750 = vunpack.c.0.s8 %v3749
  %v3751 = vlaneseq
  %v3752 = vshrl.u32 %v3751, 7
  %v3753 = vsub.s32 %v3750, %v3752
  %v3754 = vrot.slane %v3732, %v3753
  %v3756 = vunpack.c.l.s4 1966171168
  %v3757 = vunpack.c.0.s8 %v3756
  %v3758 = vlaneseq
  %v3759 = vshrl.u32 %v3758, 7
  %v3760 = vsub.s32 %v3757, %v3759
  %v3761 = vrot.slane %v3733, %v3760
  %v3762 = vcombine.high %v3740, %v3740
  %v3763 = vcombine.high %v3747, %v3747
  %v3764 = vcombine.high %v3754, %v3754
  %v3765 = vcombine.high %v3761, %v3761
  %v3774 = vmul.f32 %v3563, %v3740
  %v3775 = vmul.f32 %v3565, %v3754
  %v3776 = vmul.f32 %v3567, %v3762
  %v3777 = vmul.f32 %v3569, %v3764
  %v3778 = vmul.f32 %v3571, %v3747
  %v3779 = vmul.f32 %v3573, %v3761
  %v3780 = vmul.f32 %v3575, %v3763
  %v3781 = vmul.f32 %v3577, %v3765
  %v3782 = vrot.slane %v3190, 2
  %v3783 = vrot.slane %v3192, 2
  %v3784 = vrot.slane %v3194, 2
  %v3785 = vrot.slane %v3196, 2
  %v3786 = vrot.slane %v3198, 2
  %v3787 = vrot.slane %v3200, 2
  %v3788 = vrot.slane %v3202, 2
  %v3789 = vrot.slane %v3204, 2
  %v3798 = vadd.f32 %v3782, %v3774
  %v3799 = vadd.f32 %v3783, %v3775
  %v3800 = vadd.f32 %v3784, %v3776
  %v3801 = vadd.f32 %v3785, %v3777
  %v3802 = vadd.f32 %v3786, %v3778
  %v3803 = vadd.f32 %v3787, %v3779
  %v3804 = vadd.f32 %v3788, %v3780
  %v3805 = vadd.f32 %v3789, %v3781
  %v3806 = vtanh.pop %v3798
  %v3807 = vtanh.pop %v3799
  %v3808 = vtanh.pop %v3800
  %v3809 = vtanh.pop %v3801
  %v3810 = vtanh.pop %v3802
  %v3811 = vtanh.pop %v3803
  %v3812 = vtanh.pop %v3804
  %v3813 = vtanh.pop %v3805
  %v3814 = vsub.f32 1.0, %v3701
  %v3815 = vsub.f32 1.0, %v3703
  %v3816 = vsub.f32 1.0, %v3705
  %v3817 = vsub.f32 1.0, %v3707
  %v3818 = vsub.f32 1.0, %v3709
  %v3819 = vsub.f32 1.0, %v3711
  %v3820 = vsub.f32 1.0, %v3713
  %v3821 = vsub.f32 1.0, %v3715
  %v3822 = vmul.f32 %v3814, %v3806
  %v3823 = vmul.f32 %v3815, %v3807
  %v3824 = vmul.f32 %v3816, %v3808
  %v3825 = vmul.f32 %v3817, %v3809
  %v3826 = vmul.f32 %v3818, %v3810
  %v3827 = vmul.f32 %v3819, %v3811
  %v3828 = vmul.f32 %v3820, %v3812
  %v3829 = vmul.f32 %v3821, %v3813
  %v3830 = vmul.f32 %v3701, %v3147
  %v3831 = vmul.f32 %v3703, %v3161
  %v3832 = vmul.f32 %v3705, %v3169
  %v3833 = vmul.f32 %v3707, %v3171
  %v3834 = vmul.f32 %v3709, %v3154
  %v3835 = vmul.f32 %v3711, %v3168
  %v3836 = vmul.f32 %v3713, %v3170
  %v3837 = vmul.f32 %v3715, %v3172
  %v3838 = vadd.f32 %v3822, %v3830
  %v3839 = vadd.f32 %v3823, %v3831
  %v3840 = vadd.f32 %v3824, %v3832
  %v3841 = vadd.f32 %v3825, %v3833
  %v3842 = vadd.f32 %v3826, %v3834
  %v3843 = vadd.f32 %v3827, %v3835
  %v3844 = vadd.f32 %v3828, %v3836
  %v3845 = vadd.f32 %v3829, %v3837
  %3846 = vset.pattern.permute.xlu0 4
  %3847 = vperm.xlu0 %3846, %v701
  %v3848 = vpop.permute.xlu0 %3847
  %vm3849 = vcmp.eq.s32.totalorder %v3848, 1
  %v3858 = vcombine.low %v3838, %v3839
  %v3859 = vcombine.low %v3840, %v3841
  %v3860 = vcombine.low %v3842, %v3843
  %v3861 = vcombine.low %v3844, %v3845
  %v3863 = vunpack.c.l.s4 1966171168
  %v3864 = vunpack.c.0.s8 %v3863
  %v3865 = vlaneseq
  %v3866 = vshrl.u32 %v3865, 7
  %v3867 = vsub.s32 %v3864, %v3866
  %v3868 = vrot.slane %v3858, %v3867
  %v3870 = vunpack.c.l.s4 1966171168
  %v3871 = vunpack.c.0.s8 %v3870
  %v3872 = vlaneseq
  %v3873 = vshrl.u32 %v3872, 7
  %v3874 = vsub.s32 %v3871, %v3873
  %v3875 = vrot.slane %v3859, %v3874
  %v3877 = vunpack.c.l.s4 1966171168
  %v3878 = vunpack.c.0.s8 %v3877
  %v3879 = vlaneseq
  %v3880 = vshrl.u32 %v3879, 7
  %v3881 = vsub.s32 %v3878, %v3880
  %v3882 = vrot.slane %v3860, %v3881
  %v3884 = vunpack.c.l.s4 1966171168
  %v3885 = vunpack.c.0.s8 %v3884
  %v3886 = vlaneseq
  %v3887 = vshrl.u32 %v3886, 7
  %v3888 = vsub.s32 %v3885, %v3887
  %v3889 = vrot.slane %v3861, %v3888
  %v3890 = vcombine.low %v3868, %v3875
  %v3891 = vcombine.low %v3882, %v3889
  %v3893 = vunpack.c.l.s4 1966171168
  %v3894 = vunpack.c.0.s8 %v3893
  %v3895 = vlaneseq
  %v3896 = vshrl.u32 %v3895, 7
  %v3897 = vsub.s32 %v3894, %v3896
  %v3898 = vrot.slane %v3890, %v3897
  %v3900 = vunpack.c.l.s4 1966171168
  %v3901 = vunpack.c.0.s8 %v3900
  %v3902 = vlaneseq
  %v3903 = vshrl.u32 %v3902, 7
  %v3904 = vsub.s32 %v3901, %v3903
  %v3905 = vrot.slane %v3891, %v3904
  %v3906 = vcombine.low %v3898, %v3905
  %v3908 = vsel %vm3849, %v3906, %v3122
  %v3910 = vcombine.high %v3908, %v3908
  %v3912 = vunpack.c.l.s4 1966171168
  %v3913 = vunpack.c.0.s8 %v3912
  %v3914 = vlaneseq
  %v3915 = vshrl.u32 %v3914, 7
  %v3916 = vsub.s32 %v3913, %v3915
  %v3917 = vrot.slane %v3908, %v3916
  %v3919 = vunpack.c.l.s4 1966171168
  %v3920 = vunpack.c.0.s8 %v3919
  %v3921 = vlaneseq
  %v3922 = vshrl.u32 %v3921, 7
  %v3923 = vsub.s32 %v3920, %v3922
  %v3924 = vrot.slane %v3910, %v3923
  %v3925 = vcombine.high %v3917, %v3917
  %v3926 = vcombine.high %v3924, %v3924
  %v3928 = vunpack.c.l.s4 1966171168
  %v3929 = vunpack.c.0.s8 %v3928
  %v3930 = vlaneseq
  %v3931 = vshrl.u32 %v3930, 7
  %v3932 = vsub.s32 %v3929, %v3931
  %v3933 = vrot.slane %v3917, %v3932
  %v3935 = vunpack.c.l.s4 1966171168
  %v3936 = vunpack.c.0.s8 %v3935
  %v3937 = vlaneseq
  %v3938 = vshrl.u32 %v3937, 7
  %v3939 = vsub.s32 %v3936, %v3938
  %v3940 = vrot.slane %v3924, %v3939
  %v3942 = vunpack.c.l.s4 1966171168
  %v3943 = vunpack.c.0.s8 %v3942
  %v3944 = vlaneseq
  %v3945 = vshrl.u32 %v3944, 7
  %v3946 = vsub.s32 %v3943, %v3945
  %v3947 = vrot.slane %v3925, %v3946
  %v3949 = vunpack.c.l.s4 1966171168
  %v3950 = vunpack.c.0.s8 %v3949
  %v3951 = vlaneseq
  %v3952 = vshrl.u32 %v3951, 7
  %v3953 = vsub.s32 %v3950, %v3952
  %v3954 = vrot.slane %v3926, %v3953
  %v3955 = vcombine.high %v3933, %v3933
  %v3956 = vcombine.high %v3940, %v3940
  %v3957 = vcombine.high %v3947, %v3947
  %v3958 = vcombine.high %v3954, %v3954
  %3967 = vst [vmem:[#allocation2 + $0x4] sm:$0x1] %v3933
  %3968 = vst [vmem:[#allocation2 + $0xc] sm:$0x1] %v3947
  %3969 = vst [vmem:[#allocation2 + $0x14] sm:$0x1] %v3955
  %3970 = vst [vmem:[#allocation2 + $0x1c] sm:$0x1] %v3957
  %3971 = vst [vmem:[#allocation2 + $0x24] sm:$0x1] %v3940
  %3972 = vst [vmem:[#allocation2 + $0x2c] sm:$0x1] %v3954
  %3973 = vst [vmem:[#allocation2 + $0x34] sm:$0x1] %v3956
  %3974 = vst [vmem:[#allocation2 + $0x3c] sm:$0x1] %v3958
  %s3975 = scalar_lea.vmem %s0, 5
  %v3976 = vld [vmem:[%s3975] ss:$8 sm:$0x7]
  %s3977 = scalar_lea.vmem %s0, 29
  %v3978 = vld [vmem:[%s3977] ss:$8 sm:$0x7]
  %s3979 = scalar_lea.vmem %s0, 53
  %v3980 = vld [vmem:[%s3979] ss:$8 sm:$0x7]
  %s3981 = scalar_lea.vmem %s0, 77
  %v3982 = vld [vmem:[%s3981] ss:$8 sm:$0x7]
  %s3983 = scalar_lea.vmem %s0, 101
  %v3984 = vld [vmem:[%s3983] ss:$8 sm:$0x7]
  %s3985 = scalar_lea.vmem %s0, 125
  %v3986 = vld [vmem:[%s3985] ss:$8 sm:$0x7]
  %s3987 = scalar_lea.vmem %s0, 149
  %v3988 = vld [vmem:[%s3987] ss:$8 sm:$0x7]
  %s3989 = scalar_lea.vmem %s0, 173
  %v3990 = vld [vmem:[%s3989] ss:$8 sm:$0x7]
  %v3991 = vpack.c.bf16 %v3908, %v3908
  %v3992 = vld [vmem:[%s3] sm:$0xff]
  %v3993 = vld [vmem:[%s3 + $0x8] sm:$0xf]
  %v3994 = vld [vmem:[%s3 + $0xc] sm:$0xff]
  %v3995 = vld [vmem:[%s3 + $0x14] sm:$0xf]
  %v3996 = vld [vmem:[%s3 + $0x18] sm:$0xff]
  %v3997 = vld [vmem:[%s3 + $0x20] sm:$0xf]
  %v3998 = vld [vmem:[%s3 + $0x24] sm:$0xff]
  %v3999 = vld [vmem:[%s3 + $0x2c] sm:$0xf]
  %v4000 = vld [vmem:[%s3 + $0x30] sm:$0xff]
  %v4001 = vld [vmem:[%s3 + $0x38] sm:$0xf]
  %v4002 = vld [vmem:[%s3 + $0x3c] sm:$0xff]
  %v4003 = vld [vmem:[%s3 + $0x44] sm:$0xf]
  %v4004 = vld [vmem:[%s3 + $0x48] sm:$0xff]
  %v4005 = vld [vmem:[%s3 + $0x50] sm:$0xf]
  %v4006 = vld [vmem:[%s3 + $0x54] sm:$0xff]
  %v4007 = vld [vmem:[%s3 + $0x5c] sm:$0xf]
  %v4008 = vld [vmem:[%s3 + $0x60] sm:$0xff]
  %v4009 = vld [vmem:[%s3 + $0x68] sm:$0xf]
  %v4010 = vld [vmem:[%s3 + $0x6c] sm:$0xff]
  %v4011 = vld [vmem:[%s3 + $0x74] sm:$0xf]
  %v4012 = vld [vmem:[%s3 + $0x78] sm:$0xff]
  %v4013 = vld [vmem:[%s3 + $0x80] sm:$0xf]
  %v4014 = vld [vmem:[%s3 + $0x84] sm:$0xff]
  %v4015 = vld [vmem:[%s3 + $0x8c] sm:$0xf]
  %v4016 = vld [vmem:[%s3 + $0x90] sm:$0xff]
  %v4017 = vld [vmem:[%s3 + $0x98] sm:$0xf]
  %v4018 = vld [vmem:[%s3 + $0x9c] sm:$0xff]
  %v4019 = vld [vmem:[%s3 + $0xa4] sm:$0xf]
  %v4020 = vld [vmem:[%s3 + $0xa8] sm:$0xff]
  %v4021 = vld [vmem:[%s3 + $0xb0] sm:$0xf]
  %v4022 = vld [vmem:[%s3 + $0xb4] sm:$0xff]
  %v4023 = vld [vmem:[%s3 + $0xbc] sm:$0xf]
  %v4024 = vld [vmem:[%s4] sm:$0x7]
  %v4026 = vlaneseq
  %v4027 = vshrl.u32 %v4026, 7
  %v4028 = vsub.s32 0, %v4027
  %v4029 = vrot.slane %v4024, %v4028
  %v4030 = vlaneseq
  %v4031 = vshrl.u32 %v4030, 7
  %v4032 = vsub.s32 1, %v4031
  %v4033 = vrot.slane %v4024, %v4032
  %v4034 = vlaneseq
  %v4035 = vshrl.u32 %v4034, 7
  %v4036 = vsub.s32 2, %v4035
  %v4037 = vrot.slane %v4024, %v4036
  %v4073 = vunpack.c.l.b16 %v3992
  %v4074 = vunpack.c.h.b16 %v3992
  %v4075 = vunpack.c.l.b16 %v3993
  %v4076 = vunpack.c.l.b16 %v3994
  %v4077 = vunpack.c.h.b16 %v3994
  %v4078 = vunpack.c.l.b16 %v3995
  %v4079 = vunpack.c.l.b16 %v3996
  %v4080 = vunpack.c.h.b16 %v3996
  %v4081 = vunpack.c.l.b16 %v3997
  %v4082 = vunpack.c.l.b16 %v3998
  %v4083 = vunpack.c.h.b16 %v3998
  %v4084 = vunpack.c.l.b16 %v3999
  %v4085 = vunpack.c.l.b16 %v4000
  %v4086 = vunpack.c.h.b16 %v4000
  %v4087 = vunpack.c.l.b16 %v4001
  %v4088 = vunpack.c.l.b16 %v4002
  %v4089 = vunpack.c.h.b16 %v4002
  %v4090 = vunpack.c.l.b16 %v4003
  %v4091 = vunpack.c.l.b16 %v4004
  %v4092 = vunpack.c.h.b16 %v4004
  %v4093 = vunpack.c.l.b16 %v4005
  %v4094 = vunpack.c.l.b16 %v4006
  %v4095 = vunpack.c.h.b16 %v4006
  %v4096 = vunpack.c.l.b16 %v4007
  %v4097 = vunpack.c.l.b16 %v4008
  %v4098 = vunpack.c.h.b16 %v4008
  %v4099 = vunpack.c.l.b16 %v4009
  %v4100 = vunpack.c.l.b16 %v4010
  %v4101 = vunpack.c.h.b16 %v4010
  %v4102 = vunpack.c.l.b16 %v4011
  %v4103 = vunpack.c.l.b16 %v4012
  %v4104 = vunpack.c.h.b16 %v4012
  %v4105 = vunpack.c.l.b16 %v4013
  %v4106 = vunpack.c.l.b16 %v4014
  %v4107 = vunpack.c.h.b16 %v4014
  %v4108 = vunpack.c.l.b16 %v4015
  %v4109 = vunpack.c.l.b16 %v4016
  %v4110 = vunpack.c.h.b16 %v4016
  %v4111 = vunpack.c.l.b16 %v4017
  %v4112 = vunpack.c.l.b16 %v4018
  %v4113 = vunpack.c.h.b16 %v4018
  %v4114 = vunpack.c.l.b16 %v4019
  %v4115 = vunpack.c.l.b16 %v4020
  %v4116 = vunpack.c.h.b16 %v4020
  %v4117 = vunpack.c.l.b16 %v4021
  %v4118 = vunpack.c.l.b16 %v4022
  %v4119 = vunpack.c.h.b16 %v4022
  %v4120 = vunpack.c.l.b16 %v4023
  %v4121 = vpack.c.b16 %v4076, %v4073
  %v4122 = vpack.c.b16 %v4077, %v4074
  %v4123 = vpack.c.b16 %v4078, %v4075
  %v4124 = vpack.c.b16 %v4082, %v4079
  %v4125 = vpack.c.b16 %v4083, %v4080
  %v4126 = vpack.c.b16 %v4084, %v4081
  %v4127 = vpack.c.b16 %v4088, %v4085
  %v4128 = vpack.c.b16 %v4089, %v4086
  %v4129 = vpack.c.b16 %v4090, %v4087
  %v4130 = vpack.c.b16 %v4094, %v4091
  %v4131 = vpack.c.b16 %v4095, %v4092
  %v4132 = vpack.c.b16 %v4096, %v4093
  %v4133 = vpack.c.b16 %v4100, %v4097
  %v4134 = vpack.c.b16 %v4101, %v4098
  %v4135 = vpack.c.b16 %v4102, %v4099
  %v4136 = vpack.c.b16 %v4106, %v4103
  %v4137 = vpack.c.b16 %v4107, %v4104
  %v4138 = vpack.c.b16 %v4108, %v4105
  %v4139 = vpack.c.b16 %v4112, %v4109
  %v4140 = vpack.c.b16 %v4113, %v4110
  %v4141 = vpack.c.b16 %v4114, %v4111
  %v4142 = vpack.c.b16 %v4118, %v4115
  %v4143 = vpack.c.b16 %v4119, %v4116
  %v4144 = vpack.c.b16 %v4120, %v4117
  %4169 = vmatprep.subr.bf16.mxu0 %v4122
  %4170 = vmatpush1.bf16.msra.mxu0 %v4121
  %4171 = vmatprep.subr.bf16.mxu0 %v4125
  %4172 = vmatpush1.bf16.msra.mxu0 %v4124
  %4173 = vmatprep.subr.bf16.mxu0 %v4128
  %4174 = vmatpush1.bf16.msra.mxu0 %v4127
  %4175 = vmatprep.subr.bf16.mxu0 %v4131
  %4176 = vmatpush1.bf16.msra.mxu0 %v4130
  %4177 = vmatprep.subr.bf16.mxu0 %v4134
  %4178 = vmatpush1.bf16.msra.mxu0 %v4133
  %4179 = vmatprep.subr.bf16.mxu0 %v4137
  %4180 = vmatpush1.bf16.msra.mxu0 %v4136
  %4181 = vmatprep.subr.bf16.mxu0 %v4140
  %4182 = vmatpush1.bf16.msra.mxu0 %v4139
  %4183 = vmatprep.subr.bf16.mxu0 %v4143
  %4184 = vmatpush1.bf16.msra.mxu0 %v4142
  %4185 = vmatprep.subr.bf16.mxu0 0
  %4186 = vmatpush1.bf16.msra.mxu0 0
  %4187 = vmatprep.subr.bf16.mxu0 0
  %4188 = vmatpush1.bf16.msra.mxu0 0
  %4189 = vmatprep.subr.bf16.mxu0 0
  %4190 = vmatpush1.bf16.msra.mxu0 0
  %4191 = vmatprep.subr.bf16.mxu0 0
  %4192 = vmatpush1.bf16.msra.mxu0 0
  %4193 = vmatprep.subr.bf16.mxu0 0
  %4194 = vmatpush1.bf16.msra.mxu0 0
  %4195 = vmatprep.subr.bf16.mxu0 0
  %4196 = vmatpush1.bf16.msra.mxu0 0
  %4197 = vmatprep.subr.bf16.mxu0 0
  %4198 = vmatpush1.bf16.msra.mxu0 0
  %4199 = vmatprep.subr.bf16.mxu0 0
  %4200 = vmatpush1.bf16.msra.mxu0 0
  %4201 = vmatprep.mubr.bf16.mxu0 0
  %4202 = vmatmul.mubr.bf16.gmra.mrb[0].mxu0 %v3991
  %v4203 = vpop.f32.mrb[0].mxu0
  %v4204 = vadd.f32 %v4029, %v4203
  %v4205 = vpop.f32.mrb[0].mxu0
  %v4206 = vadd.f32 %v4033, %v4205
  %v4207 = vpop.f32.mrb[0].mxu0
  %v4208 = vpop.f32.mrb[0].mxu0
  %4209 = vdwg.mxu0
  %4210 = vmatprep.subr.bf16.mxu0 0
  %4211 = vmatpush1.bf16.msra.mxu0 %v4123
  %4212 = vmatprep.subr.bf16.mxu0 0
  %4213 = vmatpush1.bf16.msra.mxu0 %v4126
  %4214 = vmatprep.subr.bf16.mxu0 0
  %4215 = vmatpush1.bf16.msra.mxu0 %v4129
  %4216 = vmatprep.subr.bf16.mxu0 0
  %4217 = vmatpush1.bf16.msra.mxu0 %v4132
  %4218 = vmatprep.subr.bf16.mxu0 0
  %4219 = vmatpush1.bf16.msra.mxu0 %v4135
  %4220 = vmatprep.subr.bf16.mxu0 0
  %4221 = vmatpush1.bf16.msra.mxu0 %v4138
  %4222 = vmatprep.subr.bf16.mxu0 0
  %4223 = vmatpush1.bf16.msra.mxu0 %v4141
  %4224 = vmatprep.subr.bf16.mxu0 0
  %4225 = vmatpush1.bf16.msra.mxu0 %v4144
  %4226 = vmatprep.subr.bf16.mxu0 0
  %4227 = vmatpush1.bf16.msra.mxu0 0
  %4228 = vmatprep.subr.bf16.mxu0 0
  %4229 = vmatpush1.bf16.msra.mxu0 0
  %4230 = vmatprep.subr.bf16.mxu0 0
  %4231 = vmatpush1.bf16.msra.mxu0 0
  %4232 = vmatprep.subr.bf16.mxu0 0
  %4233 = vmatpush1.bf16.msra.mxu0 0
  %4234 = vmatprep.subr.bf16.mxu0 0
  %4235 = vmatpush1.bf16.msra.mxu0 0
  %4236 = vmatprep.subr.bf16.mxu0 0
  %4237 = vmatpush1.bf16.msra.mxu0 0
  %4238 = vmatprep.subr.bf16.mxu0 0
  %4239 = vmatpush1.bf16.msra.mxu0 0
  %4240 = vmatprep.subr.bf16.mxu0 0
  %4241 = vmatpush1.bf16.msra.mxu0 0
  %4242 = vmatprep.mubr.bf16.mxu0 0
  %4243 = vmatmul.mubr.bf16.gmra.mrb[0].mxu0 %v3991
  %v4244 = vpop.f32.mrb[0].mxu0
  %v4245 = vadd.f32 %v4037, %v4244
  %v4246 = vpop.f32.mrb[0].mxu0
  %v4247 = vpop.f32.mrb[0].mxu0
  %v4248 = vpop.f32.mrb[0].mxu0
  %4249 = vdwg.mxu0
  %v4251 = vcombine.high %v4204, %v4204
  %v4253 = vunpack.c.l.s4 1966171168
  %v4254 = vunpack.c.0.s8 %v4253
  %v4255 = vlaneseq
  %v4256 = vshrl.u32 %v4255, 7
  %v4257 = vsub.s32 %v4254, %v4256
  %v4258 = vrot.slane %v4204, %v4257
  %v4260 = vunpack.c.l.s4 1966171168
  %v4261 = vunpack.c.0.s8 %v4260
  %v4262 = vlaneseq
  %v4263 = vshrl.u32 %v4262, 7
  %v4264 = vsub.s32 %v4261, %v4263
  %v4265 = vrot.slane %v4251, %v4264
  %v4266 = vcombine.high %v4258, %v4258
  %v4267 = vcombine.high %v4265, %v4265
  %v4269 = vunpack.c.l.s4 1966171168
  %v4270 = vunpack.c.0.s8 %v4269
  %v4271 = vlaneseq
  %v4272 = vshrl.u32 %v4271, 7
  %v4273 = vsub.s32 %v4270, %v4272
  %v4274 = vrot.slane %v4258, %v4273
  %v4276 = vunpack.c.l.s4 1966171168
  %v4277 = vunpack.c.0.s8 %v4276
  %v4278 = vlaneseq
  %v4279 = vshrl.u32 %v4278, 7
  %v4280 = vsub.s32 %v4277, %v4279
  %v4281 = vrot.slane %v4265, %v4280
  %v4283 = vunpack.c.l.s4 1966171168
  %v4284 = vunpack.c.0.s8 %v4283
  %v4285 = vlaneseq
  %v4286 = vshrl.u32 %v4285, 7
  %v4287 = vsub.s32 %v4284, %v4286
  %v4288 = vrot.slane %v4266, %v4287
  %v4290 = vunpack.c.l.s4 1966171168
  %v4291 = vunpack.c.0.s8 %v4290
  %v4292 = vlaneseq
  %v4293 = vshrl.u32 %v4292, 7
  %v4294 = vsub.s32 %v4291, %v4293
  %v4295 = vrot.slane %v4267, %v4294
  %v4296 = vcombine.high %v4274, %v4274
  %v4297 = vcombine.high %v4281, %v4281
  %v4298 = vcombine.high %v4288, %v4288
  %v4299 = vcombine.high %v4295, %v4295
  %v4308 = vadd.f32 %v3976, %v4274
  %v4309 = vadd.f32 %v3978, %v4288
  %v4310 = vadd.f32 %v3980, %v4296
  %v4311 = vadd.f32 %v3982, %v4298
  %v4312 = vadd.f32 %v3984, %v4281
  %v4313 = vadd.f32 %v3986, %v4295
  %v4314 = vadd.f32 %v3988, %v4297
  %v4315 = vadd.f32 %v3990, %v4299
  %v4316 = vxor.u32 %v4308, 2147483648
  %v4317 = vxor.u32 %v4309, 2147483648
  %v4318 = vxor.u32 %v4310, 2147483648
  %v4319 = vxor.u32 %v4311, 2147483648
  %v4320 = vxor.u32 %v4312, 2147483648
  %v4321 = vxor.u32 %v4313, 2147483648
  %v4322 = vxor.u32 %v4314, 2147483648
  %v4323 = vxor.u32 %v4315, 2147483648
  %v4324 = vmul.f32 %v4316, 1.442695
  %v4325 = vpow.pop %v4324
  %v4326 = vmul.f32 %v4317, 1.442695
  %v4327 = vpow.pop %v4326
  %v4328 = vmul.f32 %v4318, 1.442695
  %v4329 = vpow.pop %v4328
  %v4330 = vmul.f32 %v4319, 1.442695
  %v4331 = vpow.pop %v4330
  %v4332 = vmul.f32 %v4320, 1.442695
  %v4333 = vpow.pop %v4332
  %v4334 = vmul.f32 %v4321, 1.442695
  %v4335 = vpow.pop %v4334
  %v4336 = vmul.f32 %v4322, 1.442695
  %v4337 = vpow.pop %v4336
  %v4338 = vmul.f32 %v4323, 1.442695
  %v4339 = vpow.pop %v4338
  %v4340 = vadd.f32 %v4325, 1.0
  %v4341 = vadd.f32 %v4327, 1.0
  %v4342 = vadd.f32 %v4329, 1.0
  %v4343 = vadd.f32 %v4331, 1.0
  %v4344 = vadd.f32 %v4333, 1.0
  %v4345 = vadd.f32 %v4335, 1.0
  %v4346 = vadd.f32 %v4337, 1.0
  %v4347 = vadd.f32 %v4339, 1.0
  %v4348 = vrcp.pop %v4340
  %v4349 = vmul.f32 1.0, %v4348
  %v4350 = vrcp.pop %v4341
  %v4351 = vmul.f32 1.0, %v4350
  %v4352 = vrcp.pop %v4342
  %v4353 = vmul.f32 1.0, %v4352
  %v4354 = vrcp.pop %v4343
  %v4355 = vmul.f32 1.0, %v4354
  %v4356 = vrcp.pop %v4344
  %v4357 = vmul.f32 1.0, %v4356
  %v4358 = vrcp.pop %v4345
  %v4359 = vmul.f32 1.0, %v4358
  %v4360 = vrcp.pop %v4346
  %v4361 = vmul.f32 1.0, %v4360
  %v4362 = vrcp.pop %v4347
  %v4363 = vmul.f32 1.0, %v4362
  %v4372 = vrot.slane %v3976, 1
  %v4373 = vrot.slane %v3978, 1
  %v4374 = vrot.slane %v3980, 1
  %v4375 = vrot.slane %v3982, 1
  %v4376 = vrot.slane %v3984, 1
  %v4377 = vrot.slane %v3986, 1
  %v4378 = vrot.slane %v3988, 1
  %v4379 = vrot.slane %v3990, 1
  %v4389 = vcombine.high %v4206, %v4206
  %v4391 = vunpack.c.l.s4 1966171168
  %v4392 = vunpack.c.0.s8 %v4391
  %v4393 = vlaneseq
  %v4394 = vshrl.u32 %v4393, 7
  %v4395 = vsub.s32 %v4392, %v4394
  %v4396 = vrot.slane %v4206, %v4395
  %v4398 = vunpack.c.l.s4 1966171168
  %v4399 = vunpack.c.0.s8 %v4398
  %v4400 = vlaneseq
  %v4401 = vshrl.u32 %v4400, 7
  %v4402 = vsub.s32 %v4399, %v4401
  %v4403 = vrot.slane %v4389, %v4402
  %v4404 = vcombine.high %v4396, %v4396
  %v4405 = vcombine.high %v4403, %v4403
  %v4407 = vunpack.c.l.s4 1966171168
  %v4408 = vunpack.c.0.s8 %v4407
  %v4409 = vlaneseq
  %v4410 = vshrl.u32 %v4409, 7
  %v4411 = vsub.s32 %v4408, %v4410
  %v4412 = vrot.slane %v4396, %v4411
  %v4414 = vunpack.c.l.s4 1966171168
  %v4415 = vunpack.c.0.s8 %v4414
  %v4416 = vlaneseq
  %v4417 = vshrl.u32 %v4416, 7
  %v4418 = vsub.s32 %v4415, %v4417
  %v4419 = vrot.slane %v4403, %v4418
  %v4421 = vunpack.c.l.s4 1966171168
  %v4422 = vunpack.c.0.s8 %v4421
  %v4423 = vlaneseq
  %v4424 = vshrl.u32 %v4423, 7
  %v4425 = vsub.s32 %v4422, %v4424
  %v4426 = vrot.slane %v4404, %v4425
  %v4428 = vunpack.c.l.s4 1966171168
  %v4429 = vunpack.c.0.s8 %v4428
  %v4430 = vlaneseq
  %v4431 = vshrl.u32 %v4430, 7
  %v4432 = vsub.s32 %v4429, %v4431
  %v4433 = vrot.slane %v4405, %v4432
  %v4434 = vcombine.high %v4412, %v4412
  %v4435 = vcombine.high %v4419, %v4419
  %v4436 = vcombine.high %v4426, %v4426
  %v4437 = vcombine.high %v4433, %v4433
  %v4446 = vadd.f32 %v4372, %v4412
  %v4447 = vadd.f32 %v4373, %v4426
  %v4448 = vadd.f32 %v4374, %v4434
  %v4449 = vadd.f32 %v4375, %v4436
  %v4450 = vadd.f32 %v4376, %v4419
  %v4451 = vadd.f32 %v4377, %v4433
  %v4452 = vadd.f32 %v4378, %v4435
  %v4453 = vadd.f32 %v4379, %v4437
  %v4454 = vxor.u32 %v4446, 2147483648
  %v4455 = vxor.u32 %v4447, 2147483648
  %v4456 = vxor.u32 %v4448, 2147483648
  %v4457 = vxor.u32 %v4449, 2147483648
  %v4458 = vxor.u32 %v4450, 2147483648
  %v4459 = vxor.u32 %v4451, 2147483648
  %v4460 = vxor.u32 %v4452, 2147483648
  %v4461 = vxor.u32 %v4453, 2147483648
  %v4462 = vmul.f32 %v4454, 1.442695
  %v4463 = vpow.pop %v4462
  %v4464 = vmul.f32 %v4455, 1.442695
  %v4465 = vpow.pop %v4464
  %v4466 = vmul.f32 %v4456, 1.442695
  %v4467 = vpow.pop %v4466
  %v4468 = vmul.f32 %v4457, 1.442695
  %v4469 = vpow.pop %v4468
  %v4470 = vmul.f32 %v4458, 1.442695
  %v4471 = vpow.pop %v4470
  %v4472 = vmul.f32 %v4459, 1.442695
  %v4473 = vpow.pop %v4472
  %v4474 = vmul.f32 %v4460, 1.442695
  %v4475 = vpow.pop %v4474
  %v4476 = vmul.f32 %v4461, 1.442695
  %v4477 = vpow.pop %v4476
  %v4478 = vadd.f32 %v4463, 1.0
  %v4479 = vadd.f32 %v4465, 1.0
  %v4480 = vadd.f32 %v4467, 1.0
  %v4481 = vadd.f32 %v4469, 1.0
  %v4482 = vadd.f32 %v4471, 1.0
  %v4483 = vadd.f32 %v4473, 1.0
  %v4484 = vadd.f32 %v4475, 1.0
  %v4485 = vadd.f32 %v4477, 1.0
  %v4486 = vrcp.pop %v4478
  %v4487 = vmul.f32 1.0, %v4486
  %v4488 = vrcp.pop %v4479
  %v4489 = vmul.f32 1.0, %v4488
  %v4490 = vrcp.pop %v4480
  %v4491 = vmul.f32 1.0, %v4490
  %v4492 = vrcp.pop %v4481
  %v4493 = vmul.f32 1.0, %v4492
  %v4494 = vrcp.pop %v4482
  %v4495 = vmul.f32 1.0, %v4494
  %v4496 = vrcp.pop %v4483
  %v4497 = vmul.f32 1.0, %v4496
  %v4498 = vrcp.pop %v4484
  %v4499 = vmul.f32 1.0, %v4498
  %v4500 = vrcp.pop %v4485
  %v4501 = vmul.f32 1.0, %v4500
  %v4503 = vcombine.high %v4245, %v4245
  %v4505 = vunpack.c.l.s4 1966171168
  %v4506 = vunpack.c.0.s8 %v4505
  %v4507 = vlaneseq
  %v4508 = vshrl.u32 %v4507, 7
  %v4509 = vsub.s32 %v4506, %v4508
  %v4510 = vrot.slane %v4245, %v4509
  %v4512 = vunpack.c.l.s4 1966171168
  %v4513 = vunpack.c.0.s8 %v4512
  %v4514 = vlaneseq
  %v4515 = vshrl.u32 %v4514, 7
  %v4516 = vsub.s32 %v4513, %v4515
  %v4517 = vrot.slane %v4503, %v4516
  %v4518 = vcombine.high %v4510, %v4510
  %v4519 = vcombine.high %v4517, %v4517
  %v4521 = vunpack.c.l.s4 1966171168
  %v4522 = vunpack.c.0.s8 %v4521
  %v4523 = vlaneseq
  %v4524 = vshrl.u32 %v4523, 7
  %v4525 = vsub.s32 %v4522, %v4524
  %v4526 = vrot.slane %v4510, %v4525
  %v4528 = vunpack.c.l.s4 1966171168
  %v4529 = vunpack.c.0.s8 %v4528
  %v4530 = vlaneseq
  %v4531 = vshrl.u32 %v4530, 7
  %v4532 = vsub.s32 %v4529, %v4531
  %v4533 = vrot.slane %v4517, %v4532
  %v4535 = vunpack.c.l.s4 1966171168
  %v4536 = vunpack.c.0.s8 %v4535
  %v4537 = vlaneseq
  %v4538 = vshrl.u32 %v4537, 7
  %v4539 = vsub.s32 %v4536, %v4538
  %v4540 = vrot.slane %v4518, %v4539
  %v4542 = vunpack.c.l.s4 1966171168
  %v4543 = vunpack.c.0.s8 %v4542
  %v4544 = vlaneseq
  %v4545 = vshrl.u32 %v4544, 7
  %v4546 = vsub.s32 %v4543, %v4545
  %v4547 = vrot.slane %v4519, %v4546
  %v4548 = vcombine.high %v4526, %v4526
  %v4549 = vcombine.high %v4533, %v4533
  %v4550 = vcombine.high %v4540, %v4540
  %v4551 = vcombine.high %v4547, %v4547
  %v4560 = vmul.f32 %v4349, %v4526
  %v4561 = vmul.f32 %v4351, %v4540
  %v4562 = vmul.f32 %v4353, %v4548
  %v4563 = vmul.f32 %v4355, %v4550
  %v4564 = vmul.f32 %v4357, %v4533
  %v4565 = vmul.f32 %v4359, %v4547
  %v4566 = vmul.f32 %v4361, %v4549
  %v4567 = vmul.f32 %v4363, %v4551
  %v4568 = vrot.slane %v3976, 2
  %v4569 = vrot.slane %v3978, 2
  %v4570 = vrot.slane %v3980, 2
  %v4571 = vrot.slane %v3982, 2
  %v4572 = vrot.slane %v3984, 2
  %v4573 = vrot.slane %v3986, 2
  %v4574 = vrot.slane %v3988, 2
  %v4575 = vrot.slane %v3990, 2
  %v4584 = vadd.f32 %v4568, %v4560
  %v4585 = vadd.f32 %v4569, %v4561
  %v4586 = vadd.f32 %v4570, %v4562
  %v4587 = vadd.f32 %v4571, %v4563
  %v4588 = vadd.f32 %v4572, %v4564
  %v4589 = vadd.f32 %v4573, %v4565
  %v4590 = vadd.f32 %v4574, %v4566
  %v4591 = vadd.f32 %v4575, %v4567
  %v4592 = vtanh.pop %v4584
  %v4593 = vtanh.pop %v4585
  %v4594 = vtanh.pop %v4586
  %v4595 = vtanh.pop %v4587
  %v4596 = vtanh.pop %v4588
  %v4597 = vtanh.pop %v4589
  %v4598 = vtanh.pop %v4590
  %v4599 = vtanh.pop %v4591
  %v4600 = vsub.f32 1.0, %v4487
  %v4601 = vsub.f32 1.0, %v4489
  %v4602 = vsub.f32 1.0, %v4491
  %v4603 = vsub.f32 1.0, %v4493
  %v4604 = vsub.f32 1.0, %v4495
  %v4605 = vsub.f32 1.0, %v4497
  %v4606 = vsub.f32 1.0, %v4499
  %v4607 = vsub.f32 1.0, %v4501
  %v4608 = vmul.f32 %v4600, %v4592
  %v4609 = vmul.f32 %v4601, %v4593
  %v4610 = vmul.f32 %v4602, %v4594
  %v4611 = vmul.f32 %v4603, %v4595
  %v4612 = vmul.f32 %v4604, %v4596
  %v4613 = vmul.f32 %v4605, %v4597
  %v4614 = vmul.f32 %v4606, %v4598
  %v4615 = vmul.f32 %v4607, %v4599
  %v4616 = vmul.f32 %v4487, %v3933
  %v4617 = vmul.f32 %v4489, %v3947
  %v4618 = vmul.f32 %v4491, %v3955
  %v4619 = vmul.f32 %v4493, %v3957
  %v4620 = vmul.f32 %v4495, %v3940
  %v4621 = vmul.f32 %v4497, %v3954
  %v4622 = vmul.f32 %v4499, %v3956
  %v4623 = vmul.f32 %v4501, %v3958
  %v4624 = vadd.f32 %v4608, %v4616
  %v4625 = vadd.f32 %v4609, %v4617
  %v4626 = vadd.f32 %v4610, %v4618
  %v4627 = vadd.f32 %v4611, %v4619
  %v4628 = vadd.f32 %v4612, %v4620
  %v4629 = vadd.f32 %v4613, %v4621
  %v4630 = vadd.f32 %v4614, %v4622
  %v4631 = vadd.f32 %v4615, %v4623
  %4632 = vset.pattern.permute.xlu0 5
  %4633 = vperm.xlu0 %4632, %v701
  %v4634 = vpop.permute.xlu0 %4633
  %vm4635 = vcmp.eq.s32.totalorder %v4634, 1
  %v4644 = vcombine.low %v4624, %v4625
  %v4645 = vcombine.low %v4626, %v4627
  %v4646 = vcombine.low %v4628, %v4629
  %v4647 = vcombine.low %v4630, %v4631
  %v4649 = vunpack.c.l.s4 1966171168
  %v4650 = vunpack.c.0.s8 %v4649
  %v4651 = vlaneseq
  %v4652 = vshrl.u32 %v4651, 7
  %v4653 = vsub.s32 %v4650, %v4652
  %v4654 = vrot.slane %v4644, %v4653
  %v4656 = vunpack.c.l.s4 1966171168
  %v4657 = vunpack.c.0.s8 %v4656
  %v4658 = vlaneseq
  %v4659 = vshrl.u32 %v4658, 7
  %v4660 = vsub.s32 %v4657, %v4659
  %v4661 = vrot.slane %v4645, %v4660
  %v4663 = vunpack.c.l.s4 1966171168
  %v4664 = vunpack.c.0.s8 %v4663
  %v4665 = vlaneseq
  %v4666 = vshrl.u32 %v4665, 7
  %v4667 = vsub.s32 %v4664, %v4666
  %v4668 = vrot.slane %v4646, %v4667
  %v4670 = vunpack.c.l.s4 1966171168
  %v4671 = vunpack.c.0.s8 %v4670
  %v4672 = vlaneseq
  %v4673 = vshrl.u32 %v4672, 7
  %v4674 = vsub.s32 %v4671, %v4673
  %v4675 = vrot.slane %v4647, %v4674
  %v4676 = vcombine.low %v4654, %v4661
  %v4677 = vcombine.low %v4668, %v4675
  %v4679 = vunpack.c.l.s4 1966171168
  %v4680 = vunpack.c.0.s8 %v4679
  %v4681 = vlaneseq
  %v4682 = vshrl.u32 %v4681, 7
  %v4683 = vsub.s32 %v4680, %v4682
  %v4684 = vrot.slane %v4676, %v4683
  %v4686 = vunpack.c.l.s4 1966171168
  %v4687 = vunpack.c.0.s8 %v4686
  %v4688 = vlaneseq
  %v4689 = vshrl.u32 %v4688, 7
  %v4690 = vsub.s32 %v4687, %v4689
  %v4691 = vrot.slane %v4677, %v4690
  %v4692 = vcombine.low %v4684, %v4691
  %v4694 = vsel %vm4635, %v4692, %v3908
  %v4696 = vcombine.high %v4694, %v4694
  %v4698 = vunpack.c.l.s4 1966171168
  %v4699 = vunpack.c.0.s8 %v4698
  %v4700 = vlaneseq
  %v4701 = vshrl.u32 %v4700, 7
  %v4702 = vsub.s32 %v4699, %v4701
  %v4703 = vrot.slane %v4694, %v4702
  %v4705 = vunpack.c.l.s4 1966171168
  %v4706 = vunpack.c.0.s8 %v4705
  %v4707 = vlaneseq
  %v4708 = vshrl.u32 %v4707, 7
  %v4709 = vsub.s32 %v4706, %v4708
  %v4710 = vrot.slane %v4696, %v4709
  %v4711 = vcombine.high %v4703, %v4703
  %v4712 = vcombine.high %v4710, %v4710
  %v4714 = vunpack.c.l.s4 1966171168
  %v4715 = vunpack.c.0.s8 %v4714
  %v4716 = vlaneseq
  %v4717 = vshrl.u32 %v4716, 7
  %v4718 = vsub.s32 %v4715, %v4717
  %v4719 = vrot.slane %v4703, %v4718
  %v4721 = vunpack.c.l.s4 1966171168
  %v4722 = vunpack.c.0.s8 %v4721
  %v4723 = vlaneseq
  %v4724 = vshrl.u32 %v4723, 7
  %v4725 = vsub.s32 %v4722, %v4724
  %v4726 = vrot.slane %v4710, %v4725
  %v4728 = vunpack.c.l.s4 1966171168
  %v4729 = vunpack.c.0.s8 %v4728
  %v4730 = vlaneseq
  %v4731 = vshrl.u32 %v4730, 7
  %v4732 = vsub.s32 %v4729, %v4731
  %v4733 = vrot.slane %v4711, %v4732
  %v4735 = vunpack.c.l.s4 1966171168
  %v4736 = vunpack.c.0.s8 %v4735
  %v4737 = vlaneseq
  %v4738 = vshrl.u32 %v4737, 7
  %v4739 = vsub.s32 %v4736, %v4738
  %v4740 = vrot.slane %v4712, %v4739
  %v4741 = vcombine.high %v4719, %v4719
  %v4742 = vcombine.high %v4726, %v4726
  %v4743 = vcombine.high %v4733, %v4733
  %v4744 = vcombine.high %v4740, %v4740
  %4753 = vst [vmem:[#allocation2 + $0x5] sm:$0x1] %v4719
  %4754 = vst [vmem:[#allocation2 + $0xd] sm:$0x1] %v4733
  %4755 = vst [vmem:[#allocation2 + $0x15] sm:$0x1] %v4741
  %4756 = vst [vmem:[#allocation2 + $0x1d] sm:$0x1] %v4743
  %4757 = vst [vmem:[#allocation2 + $0x25] sm:$0x1] %v4726
  %4758 = vst [vmem:[#allocation2 + $0x2d] sm:$0x1] %v4740
  %4759 = vst [vmem:[#allocation2 + $0x35] sm:$0x1] %v4742
  %4760 = vst [vmem:[#allocation2 + $0x3d] sm:$0x1] %v4744
  %s4761 = scalar_lea.vmem %s0, 6
  %v4762 = vld [vmem:[%s4761] ss:$8 sm:$0x7]
  %s4763 = scalar_lea.vmem %s0, 30
  %v4764 = vld [vmem:[%s4763] ss:$8 sm:$0x7]
  %s4765 = scalar_lea.vmem %s0, 54
  %v4766 = vld [vmem:[%s4765] ss:$8 sm:$0x7]
  %s4767 = scalar_lea.vmem %s0, 78
  %v4768 = vld [vmem:[%s4767] ss:$8 sm:$0x7]
  %s4769 = scalar_lea.vmem %s0, 102
  %v4770 = vld [vmem:[%s4769] ss:$8 sm:$0x7]
  %s4771 = scalar_lea.vmem %s0, 126
  %v4772 = vld [vmem:[%s4771] ss:$8 sm:$0x7]
  %s4773 = scalar_lea.vmem %s0, 150
  %v4774 = vld [vmem:[%s4773] ss:$8 sm:$0x7]
  %s4775 = scalar_lea.vmem %s0, 174
  %v4776 = vld [vmem:[%s4775] ss:$8 sm:$0x7]
  %v4777 = vpack.c.bf16 %v4694, %v4694
  %v4778 = vld [vmem:[%s3] sm:$0xff]
  %v4779 = vld [vmem:[%s3 + $0x8] sm:$0xf]
  %v4780 = vld [vmem:[%s3 + $0xc] sm:$0xff]
  %v4781 = vld [vmem:[%s3 + $0x14] sm:$0xf]
  %v4782 = vld [vmem:[%s3 + $0x18] sm:$0xff]
  %v4783 = vld [vmem:[%s3 + $0x20] sm:$0xf]
  %v4784 = vld [vmem:[%s3 + $0x24] sm:$0xff]
  %v4785 = vld [vmem:[%s3 + $0x2c] sm:$0xf]
  %v4786 = vld [vmem:[%s3 + $0x30] sm:$0xff]
  %v4787 = vld [vmem:[%s3 + $0x38] sm:$0xf]
  %v4788 = vld [vmem:[%s3 + $0x3c] sm:$0xff]
  %v4789 = vld [vmem:[%s3 + $0x44] sm:$0xf]
  %v4790 = vld [vmem:[%s3 + $0x48] sm:$0xff]
  %v4791 = vld [vmem:[%s3 + $0x50] sm:$0xf]
  %v4792 = vld [vmem:[%s3 + $0x54] sm:$0xff]
  %v4793 = vld [vmem:[%s3 + $0x5c] sm:$0xf]
  %v4794 = vld [vmem:[%s3 + $0x60] sm:$0xff]
  %v4795 = vld [vmem:[%s3 + $0x68] sm:$0xf]
  %v4796 = vld [vmem:[%s3 + $0x6c] sm:$0xff]
  %v4797 = vld [vmem:[%s3 + $0x74] sm:$0xf]
  %v4798 = vld [vmem:[%s3 + $0x78] sm:$0xff]
  %v4799 = vld [vmem:[%s3 + $0x80] sm:$0xf]
  %v4800 = vld [vmem:[%s3 + $0x84] sm:$0xff]
  %v4801 = vld [vmem:[%s3 + $0x8c] sm:$0xf]
  %v4802 = vld [vmem:[%s3 + $0x90] sm:$0xff]
  %v4803 = vld [vmem:[%s3 + $0x98] sm:$0xf]
  %v4804 = vld [vmem:[%s3 + $0x9c] sm:$0xff]
  %v4805 = vld [vmem:[%s3 + $0xa4] sm:$0xf]
  %v4806 = vld [vmem:[%s3 + $0xa8] sm:$0xff]
  %v4807 = vld [vmem:[%s3 + $0xb0] sm:$0xf]
  %v4808 = vld [vmem:[%s3 + $0xb4] sm:$0xff]
  %v4809 = vld [vmem:[%s3 + $0xbc] sm:$0xf]
  %v4810 = vld [vmem:[%s4] sm:$0x7]
  %v4812 = vlaneseq
  %v4813 = vshrl.u32 %v4812, 7
  %v4814 = vsub.s32 0, %v4813
  %v4815 = vrot.slane %v4810, %v4814
  %v4816 = vlaneseq
  %v4817 = vshrl.u32 %v4816, 7
  %v4818 = vsub.s32 1, %v4817
  %v4819 = vrot.slane %v4810, %v4818
  %v4820 = vlaneseq
  %v4821 = vshrl.u32 %v4820, 7
  %v4822 = vsub.s32 2, %v4821
  %v4823 = vrot.slane %v4810, %v4822
  %v4859 = vunpack.c.l.b16 %v4778
  %v4860 = vunpack.c.h.b16 %v4778
  %v4861 = vunpack.c.l.b16 %v4779
  %v4862 = vunpack.c.l.b16 %v4780
  %v4863 = vunpack.c.h.b16 %v4780
  %v4864 = vunpack.c.l.b16 %v4781
  %v4865 = vunpack.c.l.b16 %v4782
  %v4866 = vunpack.c.h.b16 %v4782
  %v4867 = vunpack.c.l.b16 %v4783
  %v4868 = vunpack.c.l.b16 %v4784
  %v4869 = vunpack.c.h.b16 %v4784
  %v4870 = vunpack.c.l.b16 %v4785
  %v4871 = vunpack.c.l.b16 %v4786
  %v4872 = vunpack.c.h.b16 %v4786
  %v4873 = vunpack.c.l.b16 %v4787
  %v4874 = vunpack.c.l.b16 %v4788
  %v4875 = vunpack.c.h.b16 %v4788
  %v4876 = vunpack.c.l.b16 %v4789
  %v4877 = vunpack.c.l.b16 %v4790
  %v4878 = vunpack.c.h.b16 %v4790
  %v4879 = vunpack.c.l.b16 %v4791
  %v4880 = vunpack.c.l.b16 %v4792
  %v4881 = vunpack.c.h.b16 %v4792
  %v4882 = vunpack.c.l.b16 %v4793
  %v4883 = vunpack.c.l.b16 %v4794
  %v4884 = vunpack.c.h.b16 %v4794
  %v4885 = vunpack.c.l.b16 %v4795
  %v4886 = vunpack.c.l.b16 %v4796
  %v4887 = vunpack.c.h.b16 %v4796
  %v4888 = vunpack.c.l.b16 %v4797
  %v4889 = vunpack.c.l.b16 %v4798
  %v4890 = vunpack.c.h.b16 %v4798
  %v4891 = vunpack.c.l.b16 %v4799
  %v4892 = vunpack.c.l.b16 %v4800
  %v4893 = vunpack.c.h.b16 %v4800
  %v4894 = vunpack.c.l.b16 %v4801
  %v4895 = vunpack.c.l.b16 %v4802
  %v4896 = vunpack.c.h.b16 %v4802
  %v4897 = vunpack.c.l.b16 %v4803
  %v4898 = vunpack.c.l.b16 %v4804
  %v4899 = vunpack.c.h.b16 %v4804
  %v4900 = vunpack.c.l.b16 %v4805
  %v4901 = vunpack.c.l.b16 %v4806
  %v4902 = vunpack.c.h.b16 %v4806
  %v4903 = vunpack.c.l.b16 %v4807
  %v4904 = vunpack.c.l.b16 %v4808
  %v4905 = vunpack.c.h.b16 %v4808
  %v4906 = vunpack.c.l.b16 %v4809
  %v4907 = vpack.c.b16 %v4862, %v4859
  %v4908 = vpack.c.b16 %v4863, %v4860
  %v4909 = vpack.c.b16 %v4864, %v4861
  %v4910 = vpack.c.b16 %v4868, %v4865
  %v4911 = vpack.c.b16 %v4869, %v4866
  %v4912 = vpack.c.b16 %v4870, %v4867
  %v4913 = vpack.c.b16 %v4874, %v4871
  %v4914 = vpack.c.b16 %v4875, %v4872
  %v4915 = vpack.c.b16 %v4876, %v4873
  %v4916 = vpack.c.b16 %v4880, %v4877
  %v4917 = vpack.c.b16 %v4881, %v4878
  %v4918 = vpack.c.b16 %v4882, %v4879
  %v4919 = vpack.c.b16 %v4886, %v4883
  %v4920 = vpack.c.b16 %v4887, %v4884
  %v4921 = vpack.c.b16 %v4888, %v4885
  %v4922 = vpack.c.b16 %v4892, %v4889
  %v4923 = vpack.c.b16 %v4893, %v4890
  %v4924 = vpack.c.b16 %v4894, %v4891
  %v4925 = vpack.c.b16 %v4898, %v4895
  %v4926 = vpack.c.b16 %v4899, %v4896
  %v4927 = vpack.c.b16 %v4900, %v4897
  %v4928 = vpack.c.b16 %v4904, %v4901
  %v4929 = vpack.c.b16 %v4905, %v4902
  %v4930 = vpack.c.b16 %v4906, %v4903
  %4955 = vmatprep.subr.bf16.mxu0 %v4908
  %4956 = vmatpush1.bf16.msra.mxu0 %v4907
  %4957 = vmatprep.subr.bf16.mxu0 %v4911
  %4958 = vmatpush1.bf16.msra.mxu0 %v4910
  %4959 = vmatprep.subr.bf16.mxu0 %v4914
  %4960 = vmatpush1.bf16.msra.mxu0 %v4913
  %4961 = vmatprep.subr.bf16.mxu0 %v4917
  %4962 = vmatpush1.bf16.msra.mxu0 %v4916
  %4963 = vmatprep.subr.bf16.mxu0 %v4920
  %4964 = vmatpush1.bf16.msra.mxu0 %v4919
  %4965 = vmatprep.subr.bf16.mxu0 %v4923
  %4966 = vmatpush1.bf16.msra.mxu0 %v4922
  %4967 = vmatprep.subr.bf16.mxu0 %v4926
  %4968 = vmatpush1.bf16.msra.mxu0 %v4925
  %4969 = vmatprep.subr.bf16.mxu0 %v4929
  %4970 = vmatpush1.bf16.msra.mxu0 %v4928
  %4971 = vmatprep.subr.bf16.mxu0 0
  %4972 = vmatpush1.bf16.msra.mxu0 0
  %4973 = vmatprep.subr.bf16.mxu0 0
  %4974 = vmatpush1.bf16.msra.mxu0 0
  %4975 = vmatprep.subr.bf16.mxu0 0
  %4976 = vmatpush1.bf16.msra.mxu0 0
  %4977 = vmatprep.subr.bf16.mxu0 0
  %4978 = vmatpush1.bf16.msra.mxu0 0
  %4979 = vmatprep.subr.bf16.mxu0 0
  %4980 = vmatpush1.bf16.msra.mxu0 0
  %4981 = vmatprep.subr.bf16.mxu0 0
  %4982 = vmatpush1.bf16.msra.mxu0 0
  %4983 = vmatprep.subr.bf16.mxu0 0
  %4984 = vmatpush1.bf16.msra.mxu0 0
  %4985 = vmatprep.subr.bf16.mxu0 0
  %4986 = vmatpush1.bf16.msra.mxu0 0
  %4987 = vmatprep.mubr.bf16.mxu0 0
  %4988 = vmatmul.mubr.bf16.gmra.mrb[0].mxu0 %v4777
  %v4989 = vpop.f32.mrb[0].mxu0
  %v4990 = vadd.f32 %v4815, %v4989
  %v4991 = vpop.f32.mrb[0].mxu0
  %v4992 = vadd.f32 %v4819, %v4991
  %v4993 = vpop.f32.mrb[0].mxu0
  %v4994 = vpop.f32.mrb[0].mxu0
  %4995 = vdwg.mxu0
  %4996 = vmatprep.subr.bf16.mxu0 0
  %4997 = vmatpush1.bf16.msra.mxu0 %v4909
  %4998 = vmatprep.subr.bf16.mxu0 0
  %4999 = vmatpush1.bf16.msra.mxu0 %v4912
  %5000 = vmatprep.subr.bf16.mxu0 0
  %5001 = vmatpush1.bf16.msra.mxu0 %v4915
  %5002 = vmatprep.subr.bf16.mxu0 0
  %5003 = vmatpush1.bf16.msra.mxu0 %v4918
  %5004 = vmatprep.subr.bf16.mxu0 0
  %5005 = vmatpush1.bf16.msra.mxu0 %v4921
  %5006 = vmatprep.subr.bf16.mxu0 0
  %5007 = vmatpush1.bf16.msra.mxu0 %v4924
  %5008 = vmatprep.subr.bf16.mxu0 0
  %5009 = vmatpush1.bf16.msra.mxu0 %v4927
  %5010 = vmatprep.subr.bf16.mxu0 0
  %5011 = vmatpush1.bf16.msra.mxu0 %v4930
  %5012 = vmatprep.subr.bf16.mxu0 0
  %5013 = vmatpush1.bf16.msra.mxu0 0
  %5014 = vmatprep.subr.bf16.mxu0 0
  %5015 = vmatpush1.bf16.msra.mxu0 0
  %5016 = vmatprep.subr.bf16.mxu0 0
  %5017 = vmatpush1.bf16.msra.mxu0 0
  %5018 = vmatprep.subr.bf16.mxu0 0
  %5019 = vmatpush1.bf16.msra.mxu0 0
  %5020 = vmatprep.subr.bf16.mxu0 0
  %5021 = vmatpush1.bf16.msra.mxu0 0
  %5022 = vmatprep.subr.bf16.mxu0 0
  %5023 = vmatpush1.bf16.msra.mxu0 0
  %5024 = vmatprep.subr.bf16.mxu0 0
  %5025 = vmatpush1.bf16.msra.mxu0 0
  %5026 = vmatprep.subr.bf16.mxu0 0
  %5027 = vmatpush1.bf16.msra.mxu0 0
  %5028 = vmatprep.mubr.bf16.mxu0 0
  %5029 = vmatmul.mubr.bf16.gmra.mrb[0].mxu0 %v4777
  %v5030 = vpop.f32.mrb[0].mxu0
  %v5031 = vadd.f32 %v4823, %v5030
  %v5032 = vpop.f32.mrb[0].mxu0
  %v5033 = vpop.f32.mrb[0].mxu0
  %v5034 = vpop.f32.mrb[0].mxu0
  %5035 = vdwg.mxu0
  %v5037 = vcombine.high %v4990, %v4990
  %v5039 = vunpack.c.l.s4 1966171168
  %v5040 = vunpack.c.0.s8 %v5039
  %v5041 = vlaneseq
  %v5042 = vshrl.u32 %v5041, 7
  %v5043 = vsub.s32 %v5040, %v5042
  %v5044 = vrot.slane %v4990, %v5043
  %v5046 = vunpack.c.l.s4 1966171168
  %v5047 = vunpack.c.0.s8 %v5046
  %v5048 = vlaneseq
  %v5049 = vshrl.u32 %v5048, 7
  %v5050 = vsub.s32 %v5047, %v5049
  %v5051 = vrot.slane %v5037, %v5050
  %v5052 = vcombine.high %v5044, %v5044
  %v5053 = vcombine.high %v5051, %v5051
  %v5055 = vunpack.c.l.s4 1966171168
  %v5056 = vunpack.c.0.s8 %v5055
  %v5057 = vlaneseq
  %v5058 = vshrl.u32 %v5057, 7
  %v5059 = vsub.s32 %v5056, %v5058
  %v5060 = vrot.slane %v5044, %v5059
  %v5062 = vunpack.c.l.s4 1966171168
  %v5063 = vunpack.c.0.s8 %v5062
  %v5064 = vlaneseq
  %v5065 = vshrl.u32 %v5064, 7
  %v5066 = vsub.s32 %v5063, %v5065
  %v5067 = vrot.slane %v5051, %v5066
  %v5069 = vunpack.c.l.s4 1966171168
  %v5070 = vunpack.c.0.s8 %v5069
  %v5071 = vlaneseq
  %v5072 = vshrl.u32 %v5071, 7
  %v5073 = vsub.s32 %v5070, %v5072
  %v5074 = vrot.slane %v5052, %v5073
  %v5076 = vunpack.c.l.s4 1966171168
  %v5077 = vunpack.c.0.s8 %v5076
  %v5078 = vlaneseq
  %v5079 = vshrl.u32 %v5078, 7
  %v5080 = vsub.s32 %v5077, %v5079
  %v5081 = vrot.slane %v5053, %v5080
  %v5082 = vcombine.high %v5060, %v5060
  %v5083 = vcombine.high %v5067, %v5067
  %v5084 = vcombine.high %v5074, %v5074
  %v5085 = vcombine.high %v5081, %v5081
  %v5094 = vadd.f32 %v4762, %v5060
  %v5095 = vadd.f32 %v4764, %v5074
  %v5096 = vadd.f32 %v4766, %v5082
  %v5097 = vadd.f32 %v4768, %v5084
  %v5098 = vadd.f32 %v4770, %v5067
  %v5099 = vadd.f32 %v4772, %v5081
  %v5100 = vadd.f32 %v4774, %v5083
  %v5101 = vadd.f32 %v4776, %v5085
  %v5102 = vxor.u32 %v5094, 2147483648
  %v5103 = vxor.u32 %v5095, 2147483648
  %v5104 = vxor.u32 %v5096, 2147483648
  %v5105 = vxor.u32 %v5097, 2147483648
  %v5106 = vxor.u32 %v5098, 2147483648
  %v5107 = vxor.u32 %v5099, 2147483648
  %v5108 = vxor.u32 %v5100, 2147483648
  %v5109 = vxor.u32 %v5101, 2147483648
  %v5110 = vmul.f32 %v5102, 1.442695
  %v5111 = vpow.pop %v5110
  %v5112 = vmul.f32 %v5103, 1.442695
  %v5113 = vpow.pop %v5112
  %v5114 = vmul.f32 %v5104, 1.442695
  %v5115 = vpow.pop %v5114
  %v5116 = vmul.f32 %v5105, 1.442695
  %v5117 = vpow.pop %v5116
  %v5118 = vmul.f32 %v5106, 1.442695
  %v5119 = vpow.pop %v5118
  %v5120 = vmul.f32 %v5107, 1.442695
  %v5121 = vpow.pop %v5120
  %v5122 = vmul.f32 %v5108, 1.442695
  %v5123 = vpow.pop %v5122
  %v5124 = vmul.f32 %v5109, 1.442695
  %v5125 = vpow.pop %v5124
  %v5126 = vadd.f32 %v5111, 1.0
  %v5127 = vadd.f32 %v5113, 1.0
  %v5128 = vadd.f32 %v5115, 1.0
  %v5129 = vadd.f32 %v5117, 1.0
  %v5130 = vadd.f32 %v5119, 1.0
  %v5131 = vadd.f32 %v5121, 1.0
  %v5132 = vadd.f32 %v5123, 1.0
  %v5133 = vadd.f32 %v5125, 1.0
  %v5134 = vrcp.pop %v5126
  %v5135 = vmul.f32 1.0, %v5134
  %v5136 = vrcp.pop %v5127
  %v5137 = vmul.f32 1.0, %v5136
  %v5138 = vrcp.pop %v5128
  %v5139 = vmul.f32 1.0, %v5138
  %v5140 = vrcp.pop %v5129
  %v5141 = vmul.f32 1.0, %v5140
  %v5142 = vrcp.pop %v5130
  %v5143 = vmul.f32 1.0, %v5142
  %v5144 = vrcp.pop %v5131
  %v5145 = vmul.f32 1.0, %v5144
  %v5146 = vrcp.pop %v5132
  %v5147 = vmul.f32 1.0, %v5146
  %v5148 = vrcp.pop %v5133
  %v5149 = vmul.f32 1.0, %v5148
  %v5158 = vrot.slane %v4762, 1
  %v5159 = vrot.slane %v4764, 1
  %v5160 = vrot.slane %v4766, 1
  %v5161 = vrot.slane %v4768, 1
  %v5162 = vrot.slane %v4770, 1
  %v5163 = vrot.slane %v4772, 1
  %v5164 = vrot.slane %v4774, 1
  %v5165 = vrot.slane %v4776, 1
  %v5175 = vcombine.high %v4992, %v4992
  %v5177 = vunpack.c.l.s4 1966171168
  %v5178 = vunpack.c.0.s8 %v5177
  %v5179 = vlaneseq
  %v5180 = vshrl.u32 %v5179, 7
  %v5181 = vsub.s32 %v5178, %v5180
  %v5182 = vrot.slane %v4992, %v5181
  %v5184 = vunpack.c.l.s4 1966171168
  %v5185 = vunpack.c.0.s8 %v5184
  %v5186 = vlaneseq
  %v5187 = vshrl.u32 %v5186, 7
  %v5188 = vsub.s32 %v5185, %v5187
  %v5189 = vrot.slane %v5175, %v5188
  %v5190 = vcombine.high %v5182, %v5182
  %v5191 = vcombine.high %v5189, %v5189
  %v5193 = vunpack.c.l.s4 1966171168
  %v5194 = vunpack.c.0.s8 %v5193
  %v5195 = vlaneseq
  %v5196 = vshrl.u32 %v5195, 7
  %v5197 = vsub.s32 %v5194, %v5196
  %v5198 = vrot.slane %v5182, %v5197
  %v5200 = vunpack.c.l.s4 1966171168
  %v5201 = vunpack.c.0.s8 %v5200
  %v5202 = vlaneseq
  %v5203 = vshrl.u32 %v5202, 7
  %v5204 = vsub.s32 %v5201, %v5203
  %v5205 = vrot.slane %v5189, %v5204
  %v5207 = vunpack.c.l.s4 1966171168
  %v5208 = vunpack.c.0.s8 %v5207
  %v5209 = vlaneseq
  %v5210 = vshrl.u32 %v5209, 7
  %v5211 = vsub.s32 %v5208, %v5210
  %v5212 = vrot.slane %v5190, %v5211
  %v5214 = vunpack.c.l.s4 1966171168
  %v5215 = vunpack.c.0.s8 %v5214
  %v5216 = vlaneseq
  %v5217 = vshrl.u32 %v5216, 7
  %v5218 = vsub.s32 %v5215, %v5217
  %v5219 = vrot.slane %v5191, %v5218
  %v5220 = vcombine.high %v5198, %v5198
  %v5221 = vcombine.high %v5205, %v5205
  %v5222 = vcombine.high %v5212, %v5212
  %v5223 = vcombine.high %v5219, %v5219
  %v5232 = vadd.f32 %v5158, %v5198
  %v5233 = vadd.f32 %v5159, %v5212
  %v5234 = vadd.f32 %v5160, %v5220
  %v5235 = vadd.f32 %v5161, %v5222
  %v5236 = vadd.f32 %v5162, %v5205
  %v5237 = vadd.f32 %v5163, %v5219
  %v5238 = vadd.f32 %v5164, %v5221
  %v5239 = vadd.f32 %v5165, %v5223
  %v5240 = vxor.u32 %v5232, 2147483648
  %v5241 = vxor.u32 %v5233, 2147483648
  %v5242 = vxor.u32 %v5234, 2147483648
  %v5243 = vxor.u32 %v5235, 2147483648
  %v5244 = vxor.u32 %v5236, 2147483648
  %v5245 = vxor.u32 %v5237, 2147483648
  %v5246 = vxor.u32 %v5238, 2147483648
  %v5247 = vxor.u32 %v5239, 2147483648
  %v5248 = vmul.f32 %v5240, 1.442695
  %v5249 = vpow.pop %v5248
  %v5250 = vmul.f32 %v5241, 1.442695
  %v5251 = vpow.pop %v5250
  %v5252 = vmul.f32 %v5242, 1.442695
  %v5253 = vpow.pop %v5252
  %v5254 = vmul.f32 %v5243, 1.442695
  %v5255 = vpow.pop %v5254
  %v5256 = vmul.f32 %v5244, 1.442695
  %v5257 = vpow.pop %v5256
  %v5258 = vmul.f32 %v5245, 1.442695
  %v5259 = vpow.pop %v5258
  %v5260 = vmul.f32 %v5246, 1.442695
  %v5261 = vpow.pop %v5260
  %v5262 = vmul.f32 %v5247, 1.442695
  %v5263 = vpow.pop %v5262
  %v5264 = vadd.f32 %v5249, 1.0
  %v5265 = vadd.f32 %v5251, 1.0
  %v5266 = vadd.f32 %v5253, 1.0
  %v5267 = vadd.f32 %v5255, 1.0
  %v5268 = vadd.f32 %v5257, 1.0
  %v5269 = vadd.f32 %v5259, 1.0
  %v5270 = vadd.f32 %v5261, 1.0
  %v5271 = vadd.f32 %v5263, 1.0
  %v5272 = vrcp.pop %v5264
  %v5273 = vmul.f32 1.0, %v5272
  %v5274 = vrcp.pop %v5265
  %v5275 = vmul.f32 1.0, %v5274
  %v5276 = vrcp.pop %v5266
  %v5277 = vmul.f32 1.0, %v5276
  %v5278 = vrcp.pop %v5267
  %v5279 = vmul.f32 1.0, %v5278
  %v5280 = vrcp.pop %v5268
  %v5281 = vmul.f32 1.0, %v5280
  %v5282 = vrcp.pop %v5269
  %v5283 = vmul.f32 1.0, %v5282
  %v5284 = vrcp.pop %v5270
  %v5285 = vmul.f32 1.0, %v5284
  %v5286 = vrcp.pop %v5271
  %v5287 = vmul.f32 1.0, %v5286
  %v5289 = vcombine.high %v5031, %v5031
  %v5291 = vunpack.c.l.s4 1966171168
  %v5292 = vunpack.c.0.s8 %v5291
  %v5293 = vlaneseq
  %v5294 = vshrl.u32 %v5293, 7
  %v5295 = vsub.s32 %v5292, %v5294
  %v5296 = vrot.slane %v5031, %v5295
  %v5298 = vunpack.c.l.s4 1966171168
  %v5299 = vunpack.c.0.s8 %v5298
  %v5300 = vlaneseq
  %v5301 = vshrl.u32 %v5300, 7
  %v5302 = vsub.s32 %v5299, %v5301
  %v5303 = vrot.slane %v5289, %v5302
  %v5304 = vcombine.high %v5296, %v5296
  %v5305 = vcombine.high %v5303, %v5303
  %v5307 = vunpack.c.l.s4 1966171168
  %v5308 = vunpack.c.0.s8 %v5307
  %v5309 = vlaneseq
  %v5310 = vshrl.u32 %v5309, 7
  %v5311 = vsub.s32 %v5308, %v5310
  %v5312 = vrot.slane %v5296, %v5311
  %v5314 = vunpack.c.l.s4 1966171168
  %v5315 = vunpack.c.0.s8 %v5314
  %v5316 = vlaneseq
  %v5317 = vshrl.u32 %v5316, 7
  %v5318 = vsub.s32 %v5315, %v5317
  %v5319 = vrot.slane %v5303, %v5318
  %v5321 = vunpack.c.l.s4 1966171168
  %v5322 = vunpack.c.0.s8 %v5321
  %v5323 = vlaneseq
  %v5324 = vshrl.u32 %v5323, 7
  %v5325 = vsub.s32 %v5322, %v5324
  %v5326 = vrot.slane %v5304, %v5325
  %v5328 = vunpack.c.l.s4 1966171168
  %v5329 = vunpack.c.0.s8 %v5328
  %v5330 = vlaneseq
  %v5331 = vshrl.u32 %v5330, 7
  %v5332 = vsub.s32 %v5329, %v5331
  %v5333 = vrot.slane %v5305, %v5332
  %v5334 = vcombine.high %v5312, %v5312
  %v5335 = vcombine.high %v5319, %v5319
  %v5336 = vcombine.high %v5326, %v5326
  %v5337 = vcombine.high %v5333, %v5333
  %v5346 = vmul.f32 %v5135, %v5312
  %v5347 = vmul.f32 %v5137, %v5326
  %v5348 = vmul.f32 %v5139, %v5334
  %v5349 = vmul.f32 %v5141, %v5336
  %v5350 = vmul.f32 %v5143, %v5319
  %v5351 = vmul.f32 %v5145, %v5333
  %v5352 = vmul.f32 %v5147, %v5335
  %v5353 = vmul.f32 %v5149, %v5337
  %v5354 = vrot.slane %v4762, 2
  %v5355 = vrot.slane %v4764, 2
  %v5356 = vrot.slane %v4766, 2
  %v5357 = vrot.slane %v4768, 2
  %v5358 = vrot.slane %v4770, 2
  %v5359 = vrot.slane %v4772, 2
  %v5360 = vrot.slane %v4774, 2
  %v5361 = vrot.slane %v4776, 2
  %v5370 = vadd.f32 %v5354, %v5346
  %v5371 = vadd.f32 %v5355, %v5347
  %v5372 = vadd.f32 %v5356, %v5348
  %v5373 = vadd.f32 %v5357, %v5349
  %v5374 = vadd.f32 %v5358, %v5350
  %v5375 = vadd.f32 %v5359, %v5351
  %v5376 = vadd.f32 %v5360, %v5352
  %v5377 = vadd.f32 %v5361, %v5353
  %v5378 = vtanh.pop %v5370
  %v5379 = vtanh.pop %v5371
  %v5380 = vtanh.pop %v5372
  %v5381 = vtanh.pop %v5373
  %v5382 = vtanh.pop %v5374
  %v5383 = vtanh.pop %v5375
  %v5384 = vtanh.pop %v5376
  %v5385 = vtanh.pop %v5377
  %v5386 = vsub.f32 1.0, %v5273
  %v5387 = vsub.f32 1.0, %v5275
  %v5388 = vsub.f32 1.0, %v5277
  %v5389 = vsub.f32 1.0, %v5279
  %v5390 = vsub.f32 1.0, %v5281
  %v5391 = vsub.f32 1.0, %v5283
  %v5392 = vsub.f32 1.0, %v5285
  %v5393 = vsub.f32 1.0, %v5287
  %v5394 = vmul.f32 %v5386, %v5378
  %v5395 = vmul.f32 %v5387, %v5379
  %v5396 = vmul.f32 %v5388, %v5380
  %v5397 = vmul.f32 %v5389, %v5381
  %v5398 = vmul.f32 %v5390, %v5382
  %v5399 = vmul.f32 %v5391, %v5383
  %v5400 = vmul.f32 %v5392, %v5384
  %v5401 = vmul.f32 %v5393, %v5385
  %v5402 = vmul.f32 %v5273, %v4719
  %v5403 = vmul.f32 %v5275, %v4733
  %v5404 = vmul.f32 %v5277, %v4741
  %v5405 = vmul.f32 %v5279, %v4743
  %v5406 = vmul.f32 %v5281, %v4726
  %v5407 = vmul.f32 %v5283, %v4740
  %v5408 = vmul.f32 %v5285, %v4742
  %v5409 = vmul.f32 %v5287, %v4744
  %v5410 = vadd.f32 %v5394, %v5402
  %v5411 = vadd.f32 %v5395, %v5403
  %v5412 = vadd.f32 %v5396, %v5404
  %v5413 = vadd.f32 %v5397, %v5405
  %v5414 = vadd.f32 %v5398, %v5406
  %v5415 = vadd.f32 %v5399, %v5407
  %v5416 = vadd.f32 %v5400, %v5408
  %v5417 = vadd.f32 %v5401, %v5409
  %5418 = vset.pattern.permute.xlu0 6
  %5419 = vperm.xlu0 %5418, %v701
  %v5420 = vpop.permute.xlu0 %5419
  %vm5421 = vcmp.eq.s32.totalorder %v5420, 1
  %v5430 = vcombine.low %v5410, %v5411
  %v5431 = vcombine.low %v5412, %v5413
  %v5432 = vcombine.low %v5414, %v5415
  %v5433 = vcombine.low %v5416, %v5417
  %v5435 = vunpack.c.l.s4 1966171168
  %v5436 = vunpack.c.0.s8 %v5435
  %v5437 = vlaneseq
  %v5438 = vshrl.u32 %v5437, 7
  %v5439 = vsub.s32 %v5436, %v5438
  %v5440 = vrot.slane %v5430, %v5439
  %v5442 = vunpack.c.l.s4 1966171168
  %v5443 = vunpack.c.0.s8 %v5442
  %v5444 = vlaneseq
  %v5445 = vshrl.u32 %v5444, 7
  %v5446 = vsub.s32 %v5443, %v5445
  %v5447 = vrot.slane %v5431, %v5446
  %v5449 = vunpack.c.l.s4 1966171168
  %v5450 = vunpack.c.0.s8 %v5449
  %v5451 = vlaneseq
  %v5452 = vshrl.u32 %v5451, 7
  %v5453 = vsub.s32 %v5450, %v5452
  %v5454 = vrot.slane %v5432, %v5453
  %v5456 = vunpack.c.l.s4 1966171168
  %v5457 = vunpack.c.0.s8 %v5456
  %v5458 = vlaneseq
  %v5459 = vshrl.u32 %v5458, 7
  %v5460 = vsub.s32 %v5457, %v5459
  %v5461 = vrot.slane %v5433, %v5460
  %v5462 = vcombine.low %v5440, %v5447
  %v5463 = vcombine.low %v5454, %v5461
  %v5465 = vunpack.c.l.s4 1966171168
  %v5466 = vunpack.c.0.s8 %v5465
  %v5467 = vlaneseq
  %v5468 = vshrl.u32 %v5467, 7
  %v5469 = vsub.s32 %v5466, %v5468
  %v5470 = vrot.slane %v5462, %v5469
  %v5472 = vunpack.c.l.s4 1966171168
  %v5473 = vunpack.c.0.s8 %v5472
  %v5474 = vlaneseq
  %v5475 = vshrl.u32 %v5474, 7
  %v5476 = vsub.s32 %v5473, %v5475
  %v5477 = vrot.slane %v5463, %v5476
  %v5478 = vcombine.low %v5470, %v5477
  %v5480 = vsel %vm5421, %v5478, %v4694
  %v5482 = vcombine.high %v5480, %v5480
  %v5484 = vunpack.c.l.s4 1966171168
  %v5485 = vunpack.c.0.s8 %v5484
  %v5486 = vlaneseq
  %v5487 = vshrl.u32 %v5486, 7
  %v5488 = vsub.s32 %v5485, %v5487
  %v5489 = vrot.slane %v5480, %v5488
  %v5491 = vunpack.c.l.s4 1966171168
  %v5492 = vunpack.c.0.s8 %v5491
  %v5493 = vlaneseq
  %v5494 = vshrl.u32 %v5493, 7
  %v5495 = vsub.s32 %v5492, %v5494
  %v5496 = vrot.slane %v5482, %v5495
  %v5497 = vcombine.high %v5489, %v5489
  %v5498 = vcombine.high %v5496, %v5496
  %v5500 = vunpack.c.l.s4 1966171168
  %v5501 = vunpack.c.0.s8 %v5500
  %v5502 = vlaneseq
  %v5503 = vshrl.u32 %v5502, 7
  %v5504 = vsub.s32 %v5501, %v5503
  %v5505 = vrot.slane %v5489, %v5504
  %v5507 = vunpack.c.l.s4 1966171168
  %v5508 = vunpack.c.0.s8 %v5507
  %v5509 = vlaneseq
  %v5510 = vshrl.u32 %v5509, 7
  %v5511 = vsub.s32 %v5508, %v5510
  %v5512 = vrot.slane %v5496, %v5511
  %v5514 = vunpack.c.l.s4 1966171168
  %v5515 = vunpack.c.0.s8 %v5514
  %v5516 = vlaneseq
  %v5517 = vshrl.u32 %v5516, 7
  %v5518 = vsub.s32 %v5515, %v5517
  %v5519 = vrot.slane %v5497, %v5518
  %v5521 = vunpack.c.l.s4 1966171168
  %v5522 = vunpack.c.0.s8 %v5521
  %v5523 = vlaneseq
  %v5524 = vshrl.u32 %v5523, 7
  %v5525 = vsub.s32 %v5522, %v5524
  %v5526 = vrot.slane %v5498, %v5525
  %v5527 = vcombine.high %v5505, %v5505
  %v5528 = vcombine.high %v5512, %v5512
  %v5529 = vcombine.high %v5519, %v5519
  %v5530 = vcombine.high %v5526, %v5526
  %5539 = vst [vmem:[#allocation2 + $0x6] sm:$0x1] %v5505
  %5540 = vst [vmem:[#allocation2 + $0xe] sm:$0x1] %v5519
  %5541 = vst [vmem:[#allocation2 + $0x16] sm:$0x1] %v5527
  %5542 = vst [vmem:[#allocation2 + $0x1e] sm:$0x1] %v5529
  %5543 = vst [vmem:[#allocation2 + $0x26] sm:$0x1] %v5512
  %5544 = vst [vmem:[#allocation2 + $0x2e] sm:$0x1] %v5526
  %5545 = vst [vmem:[#allocation2 + $0x36] sm:$0x1] %v5528
  %5546 = vst [vmem:[#allocation2 + $0x3e] sm:$0x1] %v5530
  %s5547 = scalar_lea.vmem %s0, 7
  %v5548 = vld [vmem:[%s5547] ss:$8 sm:$0x7]
  %s5549 = scalar_lea.vmem %s0, 31
  %v5550 = vld [vmem:[%s5549] ss:$8 sm:$0x7]
  %s5551 = scalar_lea.vmem %s0, 55
  %v5552 = vld [vmem:[%s5551] ss:$8 sm:$0x7]
  %s5553 = scalar_lea.vmem %s0, 79
  %v5554 = vld [vmem:[%s5553] ss:$8 sm:$0x7]
  %s5555 = scalar_lea.vmem %s0, 103
  %v5556 = vld [vmem:[%s5555] ss:$8 sm:$0x7]
  %s5557 = scalar_lea.vmem %s0, 127
  %v5558 = vld [vmem:[%s5557] ss:$8 sm:$0x7]
  %s5559 = scalar_lea.vmem %s0, 151
  %v5560 = vld [vmem:[%s5559] ss:$8 sm:$0x7]
  %s5561 = scalar_lea.vmem %s0, 175
  %v5562 = vld [vmem:[%s5561] ss:$8 sm:$0x7]
  %v5563 = vpack.c.bf16 %v5480, %v5480
  %v5564 = vld [vmem:[%s3] sm:$0xff]
  %v5565 = vld [vmem:[%s3 + $0x8] sm:$0xf]
  %v5566 = vld [vmem:[%s3 + $0xc] sm:$0xff]
  %v5567 = vld [vmem:[%s3 + $0x14] sm:$0xf]
  %v5568 = vld [vmem:[%s3 + $0x18] sm:$0xff]
  %v5569 = vld [vmem:[%s3 + $0x20] sm:$0xf]
  %v5570 = vld [vmem:[%s3 + $0x24] sm:$0xff]
  %v5571 = vld [vmem:[%s3 + $0x2c] sm:$0xf]
  %v5572 = vld [vmem:[%s3 + $0x30] sm:$0xff]
  %v5573 = vld [vmem:[%s3 + $0x38] sm:$0xf]
  %v5574 = vld [vmem:[%s3 + $0x3c] sm:$0xff]
  %v5575 = vld [vmem:[%s3 + $0x44] sm:$0xf]
  %v5576 = vld [vmem:[%s3 + $0x48] sm:$0xff]
  %v5577 = vld [vmem:[%s3 + $0x50] sm:$0xf]
  %v5578 = vld [vmem:[%s3 + $0x54] sm:$0xff]
  %v5579 = vld [vmem:[%s3 + $0x5c] sm:$0xf]
  %v5580 = vld [vmem:[%s3 + $0x60] sm:$0xff]
  %v5581 = vld [vmem:[%s3 + $0x68] sm:$0xf]
  %v5582 = vld [vmem:[%s3 + $0x6c] sm:$0xff]
  %v5583 = vld [vmem:[%s3 + $0x74] sm:$0xf]
  %v5584 = vld [vmem:[%s3 + $0x78] sm:$0xff]
  %v5585 = vld [vmem:[%s3 + $0x80] sm:$0xf]
  %v5586 = vld [vmem:[%s3 + $0x84] sm:$0xff]
  %v5587 = vld [vmem:[%s3 + $0x8c] sm:$0xf]
  %v5588 = vld [vmem:[%s3 + $0x90] sm:$0xff]
  %v5589 = vld [vmem:[%s3 + $0x98] sm:$0xf]
  %v5590 = vld [vmem:[%s3 + $0x9c] sm:$0xff]
  %v5591 = vld [vmem:[%s3 + $0xa4] sm:$0xf]
  %v5592 = vld [vmem:[%s3 + $0xa8] sm:$0xff]
  %v5593 = vld [vmem:[%s3 + $0xb0] sm:$0xf]
  %v5594 = vld [vmem:[%s3 + $0xb4] sm:$0xff]
  %v5595 = vld [vmem:[%s3 + $0xbc] sm:$0xf]
  %v5596 = vld [vmem:[%s4] sm:$0x7]
  %v5598 = vlaneseq
  %v5599 = vshrl.u32 %v5598, 7
  %v5600 = vsub.s32 0, %v5599
  %v5601 = vrot.slane %v5596, %v5600
  %v5602 = vlaneseq
  %v5603 = vshrl.u32 %v5602, 7
  %v5604 = vsub.s32 1, %v5603
  %v5605 = vrot.slane %v5596, %v5604
  %v5606 = vlaneseq
  %v5607 = vshrl.u32 %v5606, 7
  %v5608 = vsub.s32 2, %v5607
  %v5609 = vrot.slane %v5596, %v5608
  %v5645 = vunpack.c.l.b16 %v5564
  %v5646 = vunpack.c.h.b16 %v5564
  %v5647 = vunpack.c.l.b16 %v5565
  %v5648 = vunpack.c.l.b16 %v5566
  %v5649 = vunpack.c.h.b16 %v5566
  %v5650 = vunpack.c.l.b16 %v5567
  %v5651 = vunpack.c.l.b16 %v5568
  %v5652 = vunpack.c.h.b16 %v5568
  %v5653 = vunpack.c.l.b16 %v5569
  %v5654 = vunpack.c.l.b16 %v5570
  %v5655 = vunpack.c.h.b16 %v5570
  %v5656 = vunpack.c.l.b16 %v5571
  %v5657 = vunpack.c.l.b16 %v5572
  %v5658 = vunpack.c.h.b16 %v5572
  %v5659 = vunpack.c.l.b16 %v5573
  %v5660 = vunpack.c.l.b16 %v5574
  %v5661 = vunpack.c.h.b16 %v5574
  %v5662 = vunpack.c.l.b16 %v5575
  %v5663 = vunpack.c.l.b16 %v5576
  %v5664 = vunpack.c.h.b16 %v5576
  %v5665 = vunpack.c.l.b16 %v5577
  %v5666 = vunpack.c.l.b16 %v5578
  %v5667 = vunpack.c.h.b16 %v5578
  %v5668 = vunpack.c.l.b16 %v5579
  %v5669 = vunpack.c.l.b16 %v5580
  %v5670 = vunpack.c.h.b16 %v5580
  %v5671 = vunpack.c.l.b16 %v5581
  %v5672 = vunpack.c.l.b16 %v5582
  %v5673 = vunpack.c.h.b16 %v5582
  %v5674 = vunpack.c.l.b16 %v5583
  %v5675 = vunpack.c.l.b16 %v5584
  %v5676 = vunpack.c.h.b16 %v5584
  %v5677 = vunpack.c.l.b16 %v5585
  %v5678 = vunpack.c.l.b16 %v5586
  %v5679 = vunpack.c.h.b16 %v5586
  %v5680 = vunpack.c.l.b16 %v5587
  %v5681 = vunpack.c.l.b16 %v5588
  %v5682 = vunpack.c.h.b16 %v5588
  %v5683 = vunpack.c.l.b16 %v5589
  %v5684 = vunpack.c.l.b16 %v5590
  %v5685 = vunpack.c.h.b16 %v5590
  %v5686 = vunpack.c.l.b16 %v5591
  %v5687 = vunpack.c.l.b16 %v5592
  %v5688 = vunpack.c.h.b16 %v5592
  %v5689 = vunpack.c.l.b16 %v5593
  %v5690 = vunpack.c.l.b16 %v5594
  %v5691 = vunpack.c.h.b16 %v5594
  %v5692 = vunpack.c.l.b16 %v5595
  %v5693 = vpack.c.b16 %v5648, %v5645
  %v5694 = vpack.c.b16 %v5649, %v5646
  %v5695 = vpack.c.b16 %v5650, %v5647
  %v5696 = vpack.c.b16 %v5654, %v5651
  %v5697 = vpack.c.b16 %v5655, %v5652
  %v5698 = vpack.c.b16 %v5656, %v5653
  %v5699 = vpack.c.b16 %v5660, %v5657
  %v5700 = vpack.c.b16 %v5661, %v5658
  %v5701 = vpack.c.b16 %v5662, %v5659
  %v5702 = vpack.c.b16 %v5666, %v5663
  %v5703 = vpack.c.b16 %v5667, %v5664
  %v5704 = vpack.c.b16 %v5668, %v5665
  %v5705 = vpack.c.b16 %v5672, %v5669
  %v5706 = vpack.c.b16 %v5673, %v5670
  %v5707 = vpack.c.b16 %v5674, %v5671
  %v5708 = vpack.c.b16 %v5678, %v5675
  %v5709 = vpack.c.b16 %v5679, %v5676
  %v5710 = vpack.c.b16 %v5680, %v5677
  %v5711 = vpack.c.b16 %v5684, %v5681
  %v5712 = vpack.c.b16 %v5685, %v5682
  %v5713 = vpack.c.b16 %v5686, %v5683
  %v5714 = vpack.c.b16 %v5690, %v5687
  %v5715 = vpack.c.b16 %v5691, %v5688
  %v5716 = vpack.c.b16 %v5692, %v5689
  %5741 = vmatprep.subr.bf16.mxu0 %v5694
  %5742 = vmatpush1.bf16.msra.mxu0 %v5693
  %5743 = vmatprep.subr.bf16.mxu0 %v5697
  %5744 = vmatpush1.bf16.msra.mxu0 %v5696
  %5745 = vmatprep.subr.bf16.mxu0 %v5700
  %5746 = vmatpush1.bf16.msra.mxu0 %v5699
  %5747 = vmatprep.subr.bf16.mxu0 %v5703
  %5748 = vmatpush1.bf16.msra.mxu0 %v5702
  %5749 = vmatprep.subr.bf16.mxu0 %v5706
  %5750 = vmatpush1.bf16.msra.mxu0 %v5705
  %5751 = vmatprep.subr.bf16.mxu0 %v5709
  %5752 = vmatpush1.bf16.msra.mxu0 %v5708
  %5753 = vmatprep.subr.bf16.mxu0 %v5712
  %5754 = vmatpush1.bf16.msra.mxu0 %v5711
  %5755 = vmatprep.subr.bf16.mxu0 %v5715
  %5756 = vmatpush1.bf16.msra.mxu0 %v5714
  %5757 = vmatprep.subr.bf16.mxu0 0
  %5758 = vmatpush1.bf16.msra.mxu0 0
  %5759 = vmatprep.subr.bf16.mxu0 0
  %5760 = vmatpush1.bf16.msra.mxu0 0
  %5761 = vmatprep.subr.bf16.mxu0 0
  %5762 = vmatpush1.bf16.msra.mxu0 0
  %5763 = vmatprep.subr.bf16.mxu0 0
  %5764 = vmatpush1.bf16.msra.mxu0 0
  %5765 = vmatprep.subr.bf16.mxu0 0
  %5766 = vmatpush1.bf16.msra.mxu0 0
  %5767 = vmatprep.subr.bf16.mxu0 0
  %5768 = vmatpush1.bf16.msra.mxu0 0
  %5769 = vmatprep.subr.bf16.mxu0 0
  %5770 = vmatpush1.bf16.msra.mxu0 0
  %5771 = vmatprep.subr.bf16.mxu0 0
  %5772 = vmatpush1.bf16.msra.mxu0 0
  %5773 = vmatprep.mubr.bf16.mxu0 0
  %5774 = vmatmul.mubr.bf16.gmra.mrb[0].mxu0 %v5563
  %v5775 = vpop.f32.mrb[0].mxu0
  %v5776 = vadd.f32 %v5601, %v5775
  %v5777 = vpop.f32.mrb[0].mxu0
  %v5778 = vadd.f32 %v5605, %v5777
  %v5779 = vpop.f32.mrb[0].mxu0
  %v5780 = vpop.f32.mrb[0].mxu0
  %5781 = vdwg.mxu0
  %5782 = vmatprep.subr.bf16.mxu0 0
  %5783 = vmatpush1.bf16.msra.mxu0 %v5695
  %5784 = vmatprep.subr.bf16.mxu0 0
  %5785 = vmatpush1.bf16.msra.mxu0 %v5698
  %5786 = vmatprep.subr.bf16.mxu0 0
  %5787 = vmatpush1.bf16.msra.mxu0 %v5701
  %5788 = vmatprep.subr.bf16.mxu0 0
  %5789 = vmatpush1.bf16.msra.mxu0 %v5704
  %5790 = vmatprep.subr.bf16.mxu0 0
  %5791 = vmatpush1.bf16.msra.mxu0 %v5707
  %5792 = vmatprep.subr.bf16.mxu0 0
  %5793 = vmatpush1.bf16.msra.mxu0 %v5710
  %5794 = vmatprep.subr.bf16.mxu0 0
  %5795 = vmatpush1.bf16.msra.mxu0 %v5713
  %5796 = vmatprep.subr.bf16.mxu0 0
  %5797 = vmatpush1.bf16.msra.mxu0 %v5716
  %5798 = vmatprep.subr.bf16.mxu0 0
  %5799 = vmatpush1.bf16.msra.mxu0 0
  %5800 = vmatprep.subr.bf16.mxu0 0
  %5801 = vmatpush1.bf16.msra.mxu0 0
  %5802 = vmatprep.subr.bf16.mxu0 0
  %5803 = vmatpush1.bf16.msra.mxu0 0
  %5804 = vmatprep.subr.bf16.mxu0 0
  %5805 = vmatpush1.bf16.msra.mxu0 0
  %5806 = vmatprep.subr.bf16.mxu0 0
  %5807 = vmatpush1.bf16.msra.mxu0 0
  %5808 = vmatprep.subr.bf16.mxu0 0
  %5809 = vmatpush1.bf16.msra.mxu0 0
  %5810 = vmatprep.subr.bf16.mxu0 0
  %5811 = vmatpush1.bf16.msra.mxu0 0
  %5812 = vmatprep.subr.bf16.mxu0 0
  %5813 = vmatpush1.bf16.msra.mxu0 0
  %5814 = vmatprep.mubr.bf16.mxu0 0
  %5815 = vmatmul.mubr.bf16.gmra.mrb[0].mxu0 %v5563
  %v5816 = vpop.f32.mrb[0].mxu0
  %v5817 = vadd.f32 %v5609, %v5816
  %v5818 = vpop.f32.mrb[0].mxu0
  %v5819 = vpop.f32.mrb[0].mxu0
  %v5820 = vpop.f32.mrb[0].mxu0
  %5821 = vdwg.mxu0
  %v5823 = vcombine.high %v5776, %v5776
  %v5825 = vunpack.c.l.s4 1966171168
  %v5826 = vunpack.c.0.s8 %v5825
  %v5827 = vlaneseq
  %v5828 = vshrl.u32 %v5827, 7
  %v5829 = vsub.s32 %v5826, %v5828
  %v5830 = vrot.slane %v5776, %v5829
  %v5832 = vunpack.c.l.s4 1966171168
  %v5833 = vunpack.c.0.s8 %v5832
  %v5834 = vlaneseq
  %v5835 = vshrl.u32 %v5834, 7
  %v5836 = vsub.s32 %v5833, %v5835
  %v5837 = vrot.slane %v5823, %v5836
  %v5838 = vcombine.high %v5830, %v5830
  %v5839 = vcombine.high %v5837, %v5837
  %v5841 = vunpack.c.l.s4 1966171168
  %v5842 = vunpack.c.0.s8 %v5841
  %v5843 = vlaneseq
  %v5844 = vshrl.u32 %v5843, 7
  %v5845 = vsub.s32 %v5842, %v5844
  %v5846 = vrot.slane %v5830, %v5845
  %v5848 = vunpack.c.l.s4 1966171168
  %v5849 = vunpack.c.0.s8 %v5848
  %v5850 = vlaneseq
  %v5851 = vshrl.u32 %v5850, 7
  %v5852 = vsub.s32 %v5849, %v5851
  %v5853 = vrot.slane %v5837, %v5852
  %v5855 = vunpack.c.l.s4 1966171168
  %v5856 = vunpack.c.0.s8 %v5855
  %v5857 = vlaneseq
  %v5858 = vshrl.u32 %v5857, 7
  %v5859 = vsub.s32 %v5856, %v5858
  %v5860 = vrot.slane %v5838, %v5859
  %v5862 = vunpack.c.l.s4 1966171168
  %v5863 = vunpack.c.0.s8 %v5862
  %v5864 = vlaneseq
  %v5865 = vshrl.u32 %v5864, 7
  %v5866 = vsub.s32 %v5863, %v5865
  %v5867 = vrot.slane %v5839, %v5866
  %v5868 = vcombine.high %v5846, %v5846
  %v5869 = vcombine.high %v5853, %v5853
  %v5870 = vcombine.high %v5860, %v5860
  %v5871 = vcombine.high %v5867, %v5867
  %v5880 = vadd.f32 %v5548, %v5846
  %v5881 = vadd.f32 %v5550, %v5860
  %v5882 = vadd.f32 %v5552, %v5868
  %v5883 = vadd.f32 %v5554, %v5870
  %v5884 = vadd.f32 %v5556, %v5853
  %v5885 = vadd.f32 %v5558, %v5867
  %v5886 = vadd.f32 %v5560, %v5869
  %v5887 = vadd.f32 %v5562, %v5871
  %v5888 = vxor.u32 %v5880, 2147483648
  %v5889 = vxor.u32 %v5881, 2147483648
  %v5890 = vxor.u32 %v5882, 2147483648
  %v5891 = vxor.u32 %v5883, 2147483648
  %v5892 = vxor.u32 %v5884, 2147483648
  %v5893 = vxor.u32 %v5885, 2147483648
  %v5894 = vxor.u32 %v5886, 2147483648
  %v5895 = vxor.u32 %v5887, 2147483648
  %v5896 = vmul.f32 %v5888, 1.442695
  %v5897 = vpow.pop %v5896
  %v5898 = vmul.f32 %v5889, 1.442695
  %v5899 = vpow.pop %v5898
  %v5900 = vmul.f32 %v5890, 1.442695
  %v5901 = vpow.pop %v5900
  %v5902 = vmul.f32 %v5891, 1.442695
  %v5903 = vpow.pop %v5902
  %v5904 = vmul.f32 %v5892, 1.442695
  %v5905 = vpow.pop %v5904
  %v5906 = vmul.f32 %v5893, 1.442695
  %v5907 = vpow.pop %v5906
  %v5908 = vmul.f32 %v5894, 1.442695
  %v5909 = vpow.pop %v5908
  %v5910 = vmul.f32 %v5895, 1.442695
  %v5911 = vpow.pop %v5910
  %v5912 = vadd.f32 %v5897, 1.0
  %v5913 = vadd.f32 %v5899, 1.0
  %v5914 = vadd.f32 %v5901, 1.0
  %v5915 = vadd.f32 %v5903, 1.0
  %v5916 = vadd.f32 %v5905, 1.0
  %v5917 = vadd.f32 %v5907, 1.0
  %v5918 = vadd.f32 %v5909, 1.0
  %v5919 = vadd.f32 %v5911, 1.0
  %v5920 = vrcp.pop %v5912
  %v5921 = vmul.f32 1.0, %v5920
  %v5922 = vrcp.pop %v5913
  %v5923 = vmul.f32 1.0, %v5922
  %v5924 = vrcp.pop %v5914
  %v5925 = vmul.f32 1.0, %v5924
  %v5926 = vrcp.pop %v5915
  %v5927 = vmul.f32 1.0, %v5926
  %v5928 = vrcp.pop %v5916
  %v5929 = vmul.f32 1.0, %v5928
  %v5930 = vrcp.pop %v5917
  %v5931 = vmul.f32 1.0, %v5930
  %v5932 = vrcp.pop %v5918
  %v5933 = vmul.f32 1.0, %v5932
  %v5934 = vrcp.pop %v5919
  %v5935 = vmul.f32 1.0, %v5934
  %v5944 = vrot.slane %v5548, 1
  %v5945 = vrot.slane %v5550, 1
  %v5946 = vrot.slane %v5552, 1
  %v5947 = vrot.slane %v5554, 1
  %v5948 = vrot.slane %v5556, 1
  %v5949 = vrot.slane %v5558, 1
  %v5950 = vrot.slane %v5560, 1
  %v5951 = vrot.slane %v5562, 1
  %v5961 = vcombine.high %v5778, %v5778
  %v5963 = vunpack.c.l.s4 1966171168
  %v5964 = vunpack.c.0.s8 %v5963
  %v5965 = vlaneseq
  %v5966 = vshrl.u32 %v5965, 7
  %v5967 = vsub.s32 %v5964, %v5966
  %v5968 = vrot.slane %v5778, %v5967
  %v5970 = vunpack.c.l.s4 1966171168
  %v5971 = vunpack.c.0.s8 %v5970
  %v5972 = vlaneseq
  %v5973 = vshrl.u32 %v5972, 7
  %v5974 = vsub.s32 %v5971, %v5973
  %v5975 = vrot.slane %v5961, %v5974
  %v5976 = vcombine.high %v5968, %v5968
  %v5977 = vcombine.high %v5975, %v5975
  %v5979 = vunpack.c.l.s4 1966171168
  %v5980 = vunpack.c.0.s8 %v5979
  %v5981 = vlaneseq
  %v5982 = vshrl.u32 %v5981, 7
  %v5983 = vsub.s32 %v5980, %v5982
  %v5984 = vrot.slane %v5968, %v5983
  %v5986 = vunpack.c.l.s4 1966171168
  %v5987 = vunpack.c.0.s8 %v5986
  %v5988 = vlaneseq
  %v5989 = vshrl.u32 %v5988, 7
  %v5990 = vsub.s32 %v5987, %v5989
  %v5991 = vrot.slane %v5975, %v5990
  %v5993 = vunpack.c.l.s4 1966171168
  %v5994 = vunpack.c.0.s8 %v5993
  %v5995 = vlaneseq
  %v5996 = vshrl.u32 %v5995, 7
  %v5997 = vsub.s32 %v5994, %v5996
  %v5998 = vrot.slane %v5976, %v5997
  %v6000 = vunpack.c.l.s4 1966171168
  %v6001 = vunpack.c.0.s8 %v6000
  %v6002 = vlaneseq
  %v6003 = vshrl.u32 %v6002, 7
  %v6004 = vsub.s32 %v6001, %v6003
  %v6005 = vrot.slane %v5977, %v6004
  %v6006 = vcombine.high %v5984, %v5984
  %v6007 = vcombine.high %v5991, %v5991
  %v6008 = vcombine.high %v5998, %v5998
  %v6009 = vcombine.high %v6005, %v6005
  %v6018 = vadd.f32 %v5944, %v5984
  %v6019 = vadd.f32 %v5945, %v5998
  %v6020 = vadd.f32 %v5946, %v6006
  %v6021 = vadd.f32 %v5947, %v6008
  %v6022 = vadd.f32 %v5948, %v5991
  %v6023 = vadd.f32 %v5949, %v6005
  %v6024 = vadd.f32 %v5950, %v6007
  %v6025 = vadd.f32 %v5951, %v6009
  %v6026 = vxor.u32 %v6018, 2147483648
  %v6027 = vxor.u32 %v6019, 2147483648
  %v6028 = vxor.u32 %v6020, 2147483648
  %v6029 = vxor.u32 %v6021, 2147483648
  %v6030 = vxor.u32 %v6022, 2147483648
  %v6031 = vxor.u32 %v6023, 2147483648
  %v6032 = vxor.u32 %v6024, 2147483648
  %v6033 = vxor.u32 %v6025, 2147483648
  %v6034 = vmul.f32 %v6026, 1.442695
  %v6035 = vpow.pop %v6034
  %v6036 = vmul.f32 %v6027, 1.442695
  %v6037 = vpow.pop %v6036
  %v6038 = vmul.f32 %v6028, 1.442695
  %v6039 = vpow.pop %v6038
  %v6040 = vmul.f32 %v6029, 1.442695
  %v6041 = vpow.pop %v6040
  %v6042 = vmul.f32 %v6030, 1.442695
  %v6043 = vpow.pop %v6042
  %v6044 = vmul.f32 %v6031, 1.442695
  %v6045 = vpow.pop %v6044
  %v6046 = vmul.f32 %v6032, 1.442695
  %v6047 = vpow.pop %v6046
  %v6048 = vmul.f32 %v6033, 1.442695
  %v6049 = vpow.pop %v6048
  %v6050 = vadd.f32 %v6035, 1.0
  %v6051 = vadd.f32 %v6037, 1.0
  %v6052 = vadd.f32 %v6039, 1.0
  %v6053 = vadd.f32 %v6041, 1.0
  %v6054 = vadd.f32 %v6043, 1.0
  %v6055 = vadd.f32 %v6045, 1.0
  %v6056 = vadd.f32 %v6047, 1.0
  %v6057 = vadd.f32 %v6049, 1.0
  %v6058 = vrcp.pop %v6050
  %v6059 = vmul.f32 1.0, %v6058
  %v6060 = vrcp.pop %v6051
  %v6061 = vmul.f32 1.0, %v6060
  %v6062 = vrcp.pop %v6052
  %v6063 = vmul.f32 1.0, %v6062
  %v6064 = vrcp.pop %v6053
  %v6065 = vmul.f32 1.0, %v6064
  %v6066 = vrcp.pop %v6054
  %v6067 = vmul.f32 1.0, %v6066
  %v6068 = vrcp.pop %v6055
  %v6069 = vmul.f32 1.0, %v6068
  %v6070 = vrcp.pop %v6056
  %v6071 = vmul.f32 1.0, %v6070
  %v6072 = vrcp.pop %v6057
  %v6073 = vmul.f32 1.0, %v6072
  %v6075 = vcombine.high %v5817, %v5817
  %v6077 = vunpack.c.l.s4 1966171168
  %v6078 = vunpack.c.0.s8 %v6077
  %v6079 = vlaneseq
  %v6080 = vshrl.u32 %v6079, 7
  %v6081 = vsub.s32 %v6078, %v6080
  %v6082 = vrot.slane %v5817, %v6081
  %v6084 = vunpack.c.l.s4 1966171168
  %v6085 = vunpack.c.0.s8 %v6084
  %v6086 = vlaneseq
  %v6087 = vshrl.u32 %v6086, 7
  %v6088 = vsub.s32 %v6085, %v6087
  %v6089 = vrot.slane %v6075, %v6088
  %v6090 = vcombine.high %v6082, %v6082
  %v6091 = vcombine.high %v6089, %v6089
  %v6093 = vunpack.c.l.s4 1966171168
  %v6094 = vunpack.c.0.s8 %v6093
  %v6095 = vlaneseq
  %v6096 = vshrl.u32 %v6095, 7
  %v6097 = vsub.s32 %v6094, %v6096
  %v6098 = vrot.slane %v6082, %v6097
  %v6100 = vunpack.c.l.s4 1966171168
  %v6101 = vunpack.c.0.s8 %v6100
  %v6102 = vlaneseq
  %v6103 = vshrl.u32 %v6102, 7
  %v6104 = vsub.s32 %v6101, %v6103
  %v6105 = vrot.slane %v6089, %v6104
  %v6107 = vunpack.c.l.s4 1966171168
  %v6108 = vunpack.c.0.s8 %v6107
  %v6109 = vlaneseq
  %v6110 = vshrl.u32 %v6109, 7
  %v6111 = vsub.s32 %v6108, %v6110
  %v6112 = vrot.slane %v6090, %v6111
  %v6114 = vunpack.c.l.s4 1966171168
  %v6115 = vunpack.c.0.s8 %v6114
  %v6116 = vlaneseq
  %v6117 = vshrl.u32 %v6116, 7
  %v6118 = vsub.s32 %v6115, %v6117
  %v6119 = vrot.slane %v6091, %v6118
  %v6120 = vcombine.high %v6098, %v6098
  %v6121 = vcombine.high %v6105, %v6105
  %v6122 = vcombine.high %v6112, %v6112
  %v6123 = vcombine.high %v6119, %v6119
  %v6132 = vmul.f32 %v5921, %v6098
  %v6133 = vmul.f32 %v5923, %v6112
  %v6134 = vmul.f32 %v5925, %v6120
  %v6135 = vmul.f32 %v5927, %v6122
  %v6136 = vmul.f32 %v5929, %v6105
  %v6137 = vmul.f32 %v5931, %v6119
  %v6138 = vmul.f32 %v5933, %v6121
  %v6139 = vmul.f32 %v5935, %v6123
  %v6140 = vrot.slane %v5548, 2
  %v6141 = vrot.slane %v5550, 2
  %v6142 = vrot.slane %v5552, 2
  %v6143 = vrot.slane %v5554, 2
  %v6144 = vrot.slane %v5556, 2
  %v6145 = vrot.slane %v5558, 2
  %v6146 = vrot.slane %v5560, 2
  %v6147 = vrot.slane %v5562, 2
  %v6156 = vadd.f32 %v6140, %v6132
  %v6157 = vadd.f32 %v6141, %v6133
  %v6158 = vadd.f32 %v6142, %v6134
  %v6159 = vadd.f32 %v6143, %v6135
  %v6160 = vadd.f32 %v6144, %v6136
  %v6161 = vadd.f32 %v6145, %v6137
  %v6162 = vadd.f32 %v6146, %v6138
  %v6163 = vadd.f32 %v6147, %v6139
  %v6164 = vtanh.pop %v6156
  %v6165 = vtanh.pop %v6157
  %v6166 = vtanh.pop %v6158
  %v6167 = vtanh.pop %v6159
  %v6168 = vtanh.pop %v6160
  %v6169 = vtanh.pop %v6161
  %v6170 = vtanh.pop %v6162
  %v6171 = vtanh.pop %v6163
  %v6172 = vsub.f32 1.0, %v6059
  %v6173 = vsub.f32 1.0, %v6061
  %v6174 = vsub.f32 1.0, %v6063
  %v6175 = vsub.f32 1.0, %v6065
  %v6176 = vsub.f32 1.0, %v6067
  %v6177 = vsub.f32 1.0, %v6069
  %v6178 = vsub.f32 1.0, %v6071
  %v6179 = vsub.f32 1.0, %v6073
  %v6180 = vmul.f32 %v6172, %v6164
  %v6181 = vmul.f32 %v6173, %v6165
  %v6182 = vmul.f32 %v6174, %v6166
  %v6183 = vmul.f32 %v6175, %v6167
  %v6184 = vmul.f32 %v6176, %v6168
  %v6185 = vmul.f32 %v6177, %v6169
  %v6186 = vmul.f32 %v6178, %v6170
  %v6187 = vmul.f32 %v6179, %v6171
  %v6188 = vmul.f32 %v6059, %v5505
  %v6189 = vmul.f32 %v6061, %v5519
  %v6190 = vmul.f32 %v6063, %v5527
  %v6191 = vmul.f32 %v6065, %v5529
  %v6192 = vmul.f32 %v6067, %v5512
  %v6193 = vmul.f32 %v6069, %v5526
  %v6194 = vmul.f32 %v6071, %v5528
  %v6195 = vmul.f32 %v6073, %v5530
  %v6196 = vadd.f32 %v6180, %v6188
  %v6197 = vadd.f32 %v6181, %v6189
  %v6198 = vadd.f32 %v6182, %v6190
  %v6199 = vadd.f32 %v6183, %v6191
  %v6200 = vadd.f32 %v6184, %v6192
  %v6201 = vadd.f32 %v6185, %v6193
  %v6202 = vadd.f32 %v6186, %v6194
  %v6203 = vadd.f32 %v6187, %v6195
  %6204 = vset.pattern.permute.xlu0 7
  %6205 = vperm.xlu0 %6204, %v701
  %v6206 = vpop.permute.xlu0 %6205
  %vm6207 = vcmp.eq.s32.totalorder %v6206, 1
  %v6216 = vcombine.low %v6196, %v6197
  %v6217 = vcombine.low %v6198, %v6199
  %v6218 = vcombine.low %v6200, %v6201
  %v6219 = vcombine.low %v6202, %v6203
  %v6221 = vunpack.c.l.s4 1966171168
  %v6222 = vunpack.c.0.s8 %v6221
  %v6223 = vlaneseq
  %v6224 = vshrl.u32 %v6223, 7
  %v6225 = vsub.s32 %v6222, %v6224
  %v6226 = vrot.slane %v6216, %v6225
  %v6228 = vunpack.c.l.s4 1966171168
  %v6229 = vunpack.c.0.s8 %v6228
  %v6230 = vlaneseq
  %v6231 = vshrl.u32 %v6230, 7
  %v6232 = vsub.s32 %v6229, %v6231
  %v6233 = vrot.slane %v6217, %v6232
  %v6235 = vunpack.c.l.s4 1966171168
  %v6236 = vunpack.c.0.s8 %v6235
  %v6237 = vlaneseq
  %v6238 = vshrl.u32 %v6237, 7
  %v6239 = vsub.s32 %v6236, %v6238
  %v6240 = vrot.slane %v6218, %v6239
  %v6242 = vunpack.c.l.s4 1966171168
  %v6243 = vunpack.c.0.s8 %v6242
  %v6244 = vlaneseq
  %v6245 = vshrl.u32 %v6244, 7
  %v6246 = vsub.s32 %v6243, %v6245
  %v6247 = vrot.slane %v6219, %v6246
  %v6248 = vcombine.low %v6226, %v6233
  %v6249 = vcombine.low %v6240, %v6247
  %v6251 = vunpack.c.l.s4 1966171168
  %v6252 = vunpack.c.0.s8 %v6251
  %v6253 = vlaneseq
  %v6254 = vshrl.u32 %v6253, 7
  %v6255 = vsub.s32 %v6252, %v6254
  %v6256 = vrot.slane %v6248, %v6255
  %v6258 = vunpack.c.l.s4 1966171168
  %v6259 = vunpack.c.0.s8 %v6258
  %v6260 = vlaneseq
  %v6261 = vshrl.u32 %v6260, 7
  %v6262 = vsub.s32 %v6259, %v6261
  %v6263 = vrot.slane %v6249, %v6262
  %v6264 = vcombine.low %v6256, %v6263
  %v6266 = vsel %vm6207, %v6264, %v5480
  %v6268 = vcombine.high %v6266, %v6266
  %v6270 = vunpack.c.l.s4 1966171168
  %v6271 = vunpack.c.0.s8 %v6270
  %v6272 = vlaneseq
  %v6273 = vshrl.u32 %v6272, 7
  %v6274 = vsub.s32 %v6271, %v6273
  %v6275 = vrot.slane %v6266, %v6274
  %v6277 = vunpack.c.l.s4 1966171168
  %v6278 = vunpack.c.0.s8 %v6277
  %v6279 = vlaneseq
  %v6280 = vshrl.u32 %v6279, 7
  %v6281 = vsub.s32 %v6278, %v6280
  %v6282 = vrot.slane %v6268, %v6281
  %v6283 = vcombine.high %v6275, %v6275
  %v6284 = vcombine.high %v6282, %v6282
  %v6286 = vunpack.c.l.s4 1966171168
  %v6287 = vunpack.c.0.s8 %v6286
  %v6288 = vlaneseq
  %v6289 = vshrl.u32 %v6288, 7
  %v6290 = vsub.s32 %v6287, %v6289
  %v6291 = vrot.slane %v6275, %v6290
  %v6293 = vunpack.c.l.s4 1966171168
  %v6294 = vunpack.c.0.s8 %v6293
  %v6295 = vlaneseq
  %v6296 = vshrl.u32 %v6295, 7
  %v6297 = vsub.s32 %v6294, %v6296
  %v6298 = vrot.slane %v6282, %v6297
  %v6300 = vunpack.c.l.s4 1966171168
  %v6301 = vunpack.c.0.s8 %v6300
  %v6302 = vlaneseq
  %v6303 = vshrl.u32 %v6302, 7
  %v6304 = vsub.s32 %v6301, %v6303
  %v6305 = vrot.slane %v6283, %v6304
  %v6307 = vunpack.c.l.s4 1966171168
  %v6308 = vunpack.c.0.s8 %v6307
  %v6309 = vlaneseq
  %v6310 = vshrl.u32 %v6309, 7
  %v6311 = vsub.s32 %v6308, %v6310
  %v6312 = vrot.slane %v6284, %v6311
  %v6313 = vcombine.high %v6291, %v6291
  %v6314 = vcombine.high %v6298, %v6298
  %v6315 = vcombine.high %v6305, %v6305
  %v6316 = vcombine.high %v6312, %v6312
  %6325 = vst [vmem:[#allocation2 + $0x7] sm:$0x1] %v6291
  %6326 = vst [vmem:[#allocation2 + $0xf] sm:$0x1] %v6305
  %6327 = vst [vmem:[#allocation2 + $0x17] sm:$0x1] %v6313
  %6328 = vst [vmem:[#allocation2 + $0x1f] sm:$0x1] %v6315
  %6329 = vst [vmem:[#allocation2 + $0x27] sm:$0x1] %v6298
  %6330 = vst [vmem:[#allocation2 + $0x2f] sm:$0x1] %v6312
  %6331 = vst [vmem:[#allocation2 + $0x37] sm:$0x1] %v6314
  %6332 = vst [vmem:[#allocation2 + $0x3f] sm:$0x1] %v6316
  %v6333 = vld [vmem:[#allocation2] sm:$0xff]
  %v6334 = vld [vmem:[#allocation2 + $0x8] sm:$0xff]
  %v6335 = vld [vmem:[#allocation2 + $0x10] sm:$0xff]
  %v6336 = vld [vmem:[#allocation2 + $0x18] sm:$0xff]
  %v6337 = vld [vmem:[#allocation2 + $0x20] sm:$0xff]
  %v6338 = vld [vmem:[#allocation2 + $0x28] sm:$0xff]
  %v6339 = vld [vmem:[#allocation2 + $0x30] sm:$0xff]
  %v6340 = vld [vmem:[#allocation2 + $0x38] sm:$0xff]
  %v6341 = vpack.c.bf16 %v6334, %v6333
  %v6342 = vpack.c.bf16 %v6336, %v6335
  %v6343 = vpack.c.bf16 %v6338, %v6337
  %v6344 = vpack.c.bf16 %v6340, %v6339
  %v6345 = vld [vmem:[%s5] sm:$0xf]
  %v6346 = vld [vmem:[%s5 + $0x4] sm:$0xf]
  %v6347 = vld [vmem:[%s5 + $0x8] sm:$0xf]
  %v6348 = vld [vmem:[%s5 + $0xc] sm:$0xf]
  %v6349 = vld [vmem:[%s5 + $0x10] sm:$0xf]
  %v6350 = vld [vmem:[%s5 + $0x14] sm:$0xf]
  %v6351 = vld [vmem:[%s5 + $0x18] sm:$0xf]
  %v6352 = vld [vmem:[%s5 + $0x1c] sm:$0xf]
  %v6353 = vld [vmem:[%s5 + $0x20] sm:$0xf]
  %v6354 = vld [vmem:[%s5 + $0x24] sm:$0xf]
  %v6355 = vld [vmem:[%s5 + $0x28] sm:$0xf]
  %v6356 = vld [vmem:[%s5 + $0x2c] sm:$0xf]
  %v6357 = vld [vmem:[%s5 + $0x30] sm:$0xf]
  %v6358 = vld [vmem:[%s5 + $0x34] sm:$0xf]
  %v6359 = vld [vmem:[%s5 + $0x38] sm:$0xf]
  %v6360 = vld [vmem:[%s5 + $0x3c] sm:$0xf]
  %v6361 = vld [vmem:[%s6] sm:$0x1]
  %v6363 = vlaneseq
  %v6364 = vshrl.u32 %v6363, 7
  %v6365 = vsub.s32 0, %v6364
  %v6366 = vrot.slane %v6361, %v6365
  %v6384 = vunpack.c.l.b16 %v6345
  %v6385 = vunpack.c.l.b16 %v6346
  %v6386 = vunpack.c.l.b16 %v6347
  %v6387 = vunpack.c.l.b16 %v6348
  %v6388 = vunpack.c.l.b16 %v6349
  %v6389 = vunpack.c.l.b16 %v6350
  %v6390 = vunpack.c.l.b16 %v6351
  %v6391 = vunpack.c.l.b16 %v6352
  %v6392 = vunpack.c.l.b16 %v6353
  %v6393 = vunpack.c.l.b16 %v6354
  %v6394 = vunpack.c.l.b16 %v6355
  %v6395 = vunpack.c.l.b16 %v6356
  %v6396 = vunpack.c.l.b16 %v6357
  %v6397 = vunpack.c.l.b16 %v6358
  %v6398 = vunpack.c.l.b16 %v6359
  %v6399 = vunpack.c.l.b16 %v6360
  %v6400 = vpack.c.b16 %v6385, %v6384
  %v6401 = vpack.c.b16 %v6387, %v6386
  %v6402 = vpack.c.b16 %v6389, %v6388
  %v6403 = vpack.c.b16 %v6391, %v6390
  %v6404 = vpack.c.b16 %v6393, %v6392
  %v6405 = vpack.c.b16 %v6395, %v6394
  %v6406 = vpack.c.b16 %v6397, %v6396
  %v6407 = vpack.c.b16 %v6399, %v6398
  %6416 = vmatprep.subr.bf16.mxu0 0
  %6417 = vmatpush1.bf16.msra.mxu0 %v6400
  %6418 = vmatprep.subr.bf16.mxu0 0
  %6419 = vmatpush1.bf16.msra.mxu0 %v6401
  %6420 = vmatprep.subr.bf16.mxu0 0
  %6421 = vmatpush1.bf16.msra.mxu0 %v6402
  %6422 = vmatprep.subr.bf16.mxu0 0
  %6423 = vmatpush1.bf16.msra.mxu0 %v6403
  %6424 = vmatprep.subr.bf16.mxu0 0
  %6425 = vmatpush1.bf16.msra.mxu0 %v6404
  %6426 = vmatprep.subr.bf16.mxu0 0
  %6427 = vmatpush1.bf16.msra.mxu0 %v6405
  %6428 = vmatprep.subr.bf16.mxu0 0
  %6429 = vmatpush1.bf16.msra.mxu0 %v6406
  %6430 = vmatprep.subr.bf16.mxu0 0
  %6431 = vmatpush1.bf16.msra.mxu0 %v6407
  %6432 = vmatprep.subr.bf16.mxu0 0
  %6433 = vmatpush1.bf16.msra.mxu0 0
  %6434 = vmatprep.subr.bf16.mxu0 0
  %6435 = vmatpush1.bf16.msra.mxu0 0
  %6436 = vmatprep.subr.bf16.mxu0 0
  %6437 = vmatpush1.bf16.msra.mxu0 0
  %6438 = vmatprep.subr.bf16.mxu0 0
  %6439 = vmatpush1.bf16.msra.mxu0 0
  %6440 = vmatprep.subr.bf16.mxu0 0
  %6441 = vmatpush1.bf16.msra.mxu0 0
  %6442 = vmatprep.subr.bf16.mxu0 0
  %6443 = vmatpush1.bf16.msra.mxu0 0
  %6444 = vmatprep.subr.bf16.mxu0 0
  %6445 = vmatpush1.bf16.msra.mxu0 0
  %6446 = vmatprep.subr.bf16.mxu0 0
  %6447 = vmatpush1.bf16.msra.mxu0 0
  %6448 = vmatprep.mubr.bf16.mxu0 0
  %6449 = vmatmul.mubr.bf16.gmra.mrb[0].mxu0 %v6341
  %v6450 = vpop.f32.mrb[0].mxu0
  %v6451 = vadd.f32 %v6366, %v6450
  %v6452 = vpop.f32.mrb[0].mxu0
  %v6453 = vpop.f32.mrb[0].mxu0
  %v6454 = vadd.f32 %v6366, %v6453
  %v6455 = vpop.f32.mrb[0].mxu0
  %6456 = vmatprep.mubr.bf16.mxu0 0
  %6457 = vmatmul.mubr.bf16.gmra.mrb[0].mxu0 %v6342
  %v6458 = vpop.f32.mrb[0].mxu0
  %v6459 = vadd.f32 %v6366, %v6458
  %v6460 = vpop.f32.mrb[0].mxu0
  %v6461 = vpop.f32.mrb[0].mxu0
  %v6462 = vadd.f32 %v6366, %v6461
  %v6463 = vpop.f32.mrb[0].mxu0
  %6464 = vmatprep.mubr.bf16.mxu0 0
  %6465 = vmatmul.mubr.bf16.gmra.mrb[0].mxu0 %v6343
  %v6466 = vpop.f32.mrb[0].mxu0
  %v6467 = vadd.f32 %v6366, %v6466
  %v6468 = vpop.f32.mrb[0].mxu0
  %v6469 = vpop.f32.mrb[0].mxu0
  %v6470 = vadd.f32 %v6366, %v6469
  %v6471 = vpop.f32.mrb[0].mxu0
  %6472 = vmatprep.mubr.bf16.mxu0 0
  %6473 = vmatmul.mubr.bf16.gmra.mrb[0].mxu0 %v6344
  %v6474 = vpop.f32.mrb[0].mxu0
  %v6475 = vadd.f32 %v6366, %v6474
  %v6476 = vpop.f32.mrb[0].mxu0
  %v6477 = vpop.f32.mrb[0].mxu0
  %v6478 = vadd.f32 %v6366, %v6477
  %v6479 = vpop.f32.mrb[0].mxu0
  %6480 = vdwg.mxu0
  %v6481 = vtanh.pop %v6451
  %v6482 = vtanh.pop %v6454
  %v6483 = vtanh.pop %v6459
  %v6484 = vtanh.pop %v6462
  %v6485 = vtanh.pop %v6467
  %v6486 = vtanh.pop %v6470
  %v6487 = vtanh.pop %v6475
  %v6488 = vtanh.pop %v6478
  %v6489 = vld [vmem:[%s7] sm:$0x1]
  %v6491 = vlaneseq
  %v6492 = vshrl.u32 %v6491, 7
  %v6493 = vsub.s32 0, %v6492
  %v6494 = vrot.slane %v6489, %v6493
  %v6496 = vmul.f32 %v6481, %v6494
  %v6497 = vmul.f32 %v6482, %v6494
  %v6498 = vmul.f32 %v6483, %v6494
  %v6499 = vmul.f32 %v6484, %v6494
  %v6500 = vmul.f32 %v6485, %v6494
  %v6501 = vmul.f32 %v6486, %v6494
  %v6502 = vmul.f32 %v6487, %v6494
  %v6503 = vmul.f32 %v6488, %v6494
  %6504 = vadd.xlane.f32.xlu0 %v6496
  %v6505 = vpop.xlane.xlu0 %6504
  %6506 = vadd.xlane.f32.xlu0 %v6497
  %v6507 = vpop.xlane.xlu0 %6506
  %6508 = vadd.xlane.f32.xlu0 %v6498
  %v6509 = vpop.xlane.xlu0 %6508
  %6510 = vadd.xlane.f32.xlu0 %v6499
  %v6511 = vpop.xlane.xlu0 %6510
  %6512 = vadd.xlane.f32.xlu0 %v6500
  %v6513 = vpop.xlane.xlu0 %6512
  %6514 = vadd.xlane.f32.xlu0 %v6501
  %v6515 = vpop.xlane.xlu0 %6514
  %6516 = vadd.xlane.f32.xlu0 %v6502
  %v6517 = vpop.xlane.xlu0 %6516
  %6518 = vadd.xlane.f32.xlu0 %v6503
  %v6519 = vpop.xlane.xlu0 %6518
  %v6528 = vlaneseq
  %v6529 = vshrl.u32 %v6528, 7
  %v6530 = vsub.s32 %v41, %v6529
  %v6531 = vrot.slane %v6505, %v6530
  %v6532 = vlaneseq
  %v6533 = vshrl.u32 %v6532, 7
  %v6534 = vsub.s32 %v41, %v6533
  %v6535 = vrot.slane %v6507, %v6534
  %v6536 = vlaneseq
  %v6537 = vshrl.u32 %v6536, 7
  %v6538 = vsub.s32 %v41, %v6537
  %v6539 = vrot.slane %v6509, %v6538
  %v6540 = vlaneseq
  %v6541 = vshrl.u32 %v6540, 7
  %v6542 = vsub.s32 %v41, %v6541
  %v6543 = vrot.slane %v6511, %v6542
  %v6544 = vlaneseq
  %v6545 = vshrl.u32 %v6544, 7
  %v6546 = vsub.s32 %v41, %v6545
  %v6547 = vrot.slane %v6513, %v6546
  %v6548 = vlaneseq
  %v6549 = vshrl.u32 %v6548, 7
  %v6550 = vsub.s32 %v41, %v6549
  %v6551 = vrot.slane %v6515, %v6550
  %v6552 = vlaneseq
  %v6553 = vshrl.u32 %v6552, 7
  %v6554 = vsub.s32 %v41, %v6553
  %v6555 = vrot.slane %v6517, %v6554
  %v6556 = vlaneseq
  %v6557 = vshrl.u32 %v6556, 7
  %v6558 = vsub.s32 %v41, %v6557
  %v6559 = vrot.slane %v6519, %v6558
  %vm6560 = vcmask 1041409
  %v6561 = vsel %vm6560, %v6535, %v6531
  %vm6562 = vcmask 1042434
  %v6563 = vsel %vm6562, %v6539, %v6561
  %vm6564 = vcmask 1043459
  %v6565 = vsel %vm6564, %v6543, %v6563
  %vm6566 = vcmask 1044484
  %v6567 = vsel %vm6566, %v6547, %v6565
  %vm6568 = vcmask 1045509
  %v6569 = vsel %vm6568, %v6551, %v6567
  %vm6570 = vcmask 1046534
  %v6571 = vsel %vm6570, %v6555, %v6569
  %vm6572 = vcmask 1047559
  %v6573 = vsel %vm6572, %v6559, %v6571
  %v6575 = vsel %vm45, %v6573, -inf
  %vm6576 = vcmask 64512
  %v6577 = vsel %vm6576, %v6575, -inf
  %6578 = vmax.xlane.f32.xlu0 %v6577
  %v6579 = vpop.xlane.xlu0 %6578
  %vm6580 = vcmp.gt.f32.partialorder %v6579, -inf
  %v6581 = vsel %vm6580, %v6579, 0.0
  %v6582 = vsub.f32 %v6575, %v6581
  %v6583 = vmul.f32 %v6582, 1.442695
  %v6584 = vpow.pop %v6583
  %v6585 = vsel %vm45, %v6584, 0.0
  %v6586 = vsel %vm6576, %v6585, 0.0
  %6587 = vadd.xlane.f32.xlu0 %v6586
  %v6588 = vpop.xlane.xlu0 %6587
  %vm6589 = vcmp.gt.f32.partialorder %v6588, 0.0
  %v6590 = vsel %vm6589, %v6588, 1.0
  %v6591 = vrcp.pop %v6590
  %v6592 = vmul.f32 1.0, %v6591
  %v6593 = vlaneseq
  %v6594 = vshrl.u32 %v6593, 7
  %v6595 = vsub.s32 0, %v6594
  %v6596 = vrot.slane %v6585, %v6595
  %6598 = vbcast.lane.b32.xlu0 %v6596, 256
  %v6599 = vpop.permute.xlu0 %6598
  %v6600 = vlaneseq
  %v6601 = vshrl.u32 %v6600, 7
  %v6602 = vsub.s32 1, %v6601
  %v6603 = vrot.slane %v6585, %v6602
  %6605 = vbcast.lane.b32.xlu0 %v6603, 256
  %v6606 = vpop.permute.xlu0 %6605
  %v6607 = vlaneseq
  %v6608 = vshrl.u32 %v6607, 7
  %v6609 = vsub.s32 2, %v6608
  %v6610 = vrot.slane %v6585, %v6609
  %6612 = vbcast.lane.b32.xlu0 %v6610, 256
  %v6613 = vpop.permute.xlu0 %6612
  %v6614 = vlaneseq
  %v6615 = vshrl.u32 %v6614, 7
  %v6616 = vsub.s32 3, %v6615
  %v6617 = vrot.slane %v6585, %v6616
  %6619 = vbcast.lane.b32.xlu0 %v6617, 256
  %v6620 = vpop.permute.xlu0 %6619
  %v6621 = vlaneseq
  %v6622 = vshrl.u32 %v6621, 7
  %v6623 = vsub.s32 4, %v6622
  %v6624 = vrot.slane %v6585, %v6623
  %6626 = vbcast.lane.b32.xlu0 %v6624, 256
  %v6627 = vpop.permute.xlu0 %6626
  %v6628 = vlaneseq
  %v6629 = vshrl.u32 %v6628, 7
  %v6630 = vsub.s32 5, %v6629
  %v6631 = vrot.slane %v6585, %v6630
  %6633 = vbcast.lane.b32.xlu0 %v6631, 256
  %v6634 = vpop.permute.xlu0 %6633
  %v6635 = vlaneseq
  %v6636 = vshrl.u32 %v6635, 7
  %v6637 = vsub.s32 6, %v6636
  %v6638 = vrot.slane %v6585, %v6637
  %6640 = vbcast.lane.b32.xlu0 %v6638, 256
  %v6641 = vpop.permute.xlu0 %6640
  %v6642 = vlaneseq
  %v6643 = vshrl.u32 %v6642, 7
  %v6644 = vsub.s32 7, %v6643
  %v6645 = vrot.slane %v6585, %v6644
  %6647 = vbcast.lane.b32.xlu0 %v6645, 256
  %v6648 = vpop.permute.xlu0 %6647
  %v6649 = vmul.f32 %v6599, %v6333
  %v6650 = vmul.f32 %v6606, %v6334
  %v6651 = vmul.f32 %v6613, %v6335
  %v6652 = vmul.f32 %v6620, %v6336
  %v6653 = vmul.f32 %v6627, %v6337
  %v6654 = vmul.f32 %v6634, %v6338
  %v6655 = vmul.f32 %v6641, %v6339
  %v6656 = vmul.f32 %v6648, %v6340
  %v6657 = vrot.slane %v6649, 4
  %v6658 = vadd.f32 %v6649, %v6657
  %v6659 = vrot.slane %v6658, 2
  %v6660 = vadd.f32 %v6658, %v6659
  %v6661 = vrot.slane %v6660, 1
  %v6662 = vadd.f32 %v6660, %v6661
  %v6663 = vrot.slane %v6650, 4
  %v6664 = vadd.f32 %v6650, %v6663
  %v6665 = vrot.slane %v6664, 2
  %v6666 = vadd.f32 %v6664, %v6665
  %v6667 = vrot.slane %v6666, 1
  %v6668 = vadd.f32 %v6666, %v6667
  %v6669 = vrot.slane %v6651, 4
  %v6670 = vadd.f32 %v6651, %v6669
  %v6671 = vrot.slane %v6670, 2
  %v6672 = vadd.f32 %v6670, %v6671
  %v6673 = vrot.slane %v6672, 1
  %v6674 = vadd.f32 %v6672, %v6673
  %v6675 = vrot.slane %v6652, 4
  %v6676 = vadd.f32 %v6652, %v6675
  %v6677 = vrot.slane %v6676, 2
  %v6678 = vadd.f32 %v6676, %v6677
  %v6679 = vrot.slane %v6678, 1
  %v6680 = vadd.f32 %v6678, %v6679
  %v6681 = vrot.slane %v6653, 4
  %v6682 = vadd.f32 %v6653, %v6681
  %v6683 = vrot.slane %v6682, 2
  %v6684 = vadd.f32 %v6682, %v6683
  %v6685 = vrot.slane %v6684, 1
  %v6686 = vadd.f32 %v6684, %v6685
  %v6687 = vrot.slane %v6654, 4
  %v6688 = vadd.f32 %v6654, %v6687
  %v6689 = vrot.slane %v6688, 2
  %v6690 = vadd.f32 %v6688, %v6689
  %v6691 = vrot.slane %v6690, 1
  %v6692 = vadd.f32 %v6690, %v6691
  %v6693 = vrot.slane %v6655, 4
  %v6694 = vadd.f32 %v6655, %v6693
  %v6695 = vrot.slane %v6694, 2
  %v6696 = vadd.f32 %v6694, %v6695
  %v6697 = vrot.slane %v6696, 1
  %v6698 = vadd.f32 %v6696, %v6697
  %v6699 = vrot.slane %v6656, 4
  %v6700 = vadd.f32 %v6656, %v6699
  %v6701 = vrot.slane %v6700, 2
  %v6702 = vadd.f32 %v6700, %v6701
  %v6703 = vrot.slane %v6702, 1
  %v6704 = vadd.f32 %v6702, %v6703
  %v6706 = vrot.slane %v6592, 1
  %v6707 = vrot.slane %v6592, 2
  %v6708 = vrot.slane %v6592, 3
  %v6709 = vrot.slane %v6592, 4
  %v6710 = vrot.slane %v6592, 5
  %v6711 = vrot.slane %v6592, 6
  %v6712 = vrot.slane %v6592, 7
  %v6721 = vmul.f32 %v6662, %v6592
  %v6722 = vmul.f32 %v6668, %v6706
  %v6723 = vmul.f32 %v6674, %v6707
  %v6724 = vmul.f32 %v6680, %v6708
  %v6725 = vmul.f32 %v6686, %v6709
  %v6726 = vmul.f32 %v6692, %v6710
  %v6727 = vmul.f32 %v6698, %v6711
  %v6728 = vmul.f32 %v6704, %v6712
  %v6729 = vpack.c.bf16 %v6721, %v6721
  %v6730 = vpack.c.bf16 %v6722, %v6722
  %v6731 = vpack.c.bf16 %v6723, %v6723
  %v6732 = vpack.c.bf16 %v6724, %v6724
  %v6733 = vpack.c.bf16 %v6725, %v6725
  %v6734 = vpack.c.bf16 %v6726, %v6726
  %v6735 = vpack.c.bf16 %v6727, %v6727
  %v6736 = vpack.c.bf16 %v6728, %v6728
  %v6737 = vld [vmem:[%s8] sm:$0xf]
  %v6738 = vld [vmem:[%s8 + $0x4] sm:$0xf]
  %v6739 = vld [vmem:[%s8 + $0x8] sm:$0xf]
  %v6740 = vld [vmem:[%s8 + $0xc] sm:$0xf]
  %v6741 = vld [vmem:[%s8 + $0x10] sm:$0xf]
  %v6742 = vld [vmem:[%s8 + $0x14] sm:$0xf]
  %v6743 = vld [vmem:[%s8 + $0x18] sm:$0xf]
  %v6744 = vld [vmem:[%s8 + $0x1c] sm:$0xf]
  %v6745 = vld [vmem:[%s8 + $0x20] sm:$0xf]
  %v6746 = vld [vmem:[%s8 + $0x24] sm:$0xf]
  %v6747 = vld [vmem:[%s8 + $0x28] sm:$0xf]
  %v6748 = vld [vmem:[%s8 + $0x2c] sm:$0xf]
  %v6749 = vld [vmem:[%s8 + $0x30] sm:$0xf]
  %v6750 = vld [vmem:[%s8 + $0x34] sm:$0xf]
  %v6751 = vld [vmem:[%s8 + $0x38] sm:$0xf]
  %v6752 = vld [vmem:[%s8 + $0x3c] sm:$0xf]
  %v6753 = vld [vmem:[%s2] sm:$0xff]
  %v6754 = vld [vmem:[%s9] sm:$0x1]
  %6756 = vset.pattern.permute.xlu0 0
  %6757 = vperm.xlu0 %6756, %v6753
  %v6758 = vpop.permute.xlu0 %6757
  %v6761 = vlaneseq
  %v6762 = vshrl.u32 %v6761, 7
  %v6763 = vsub.s32 0, %v6762
  %v6764 = vrot.slane %v6754, %v6763
  %v6766 = vmul.f32 %v6758, %v6764
  %v6775 = vunpack.c.l.b16 %v6729
  %v6776 = vunpack.c.l.b16 %v6730
  %v6777 = vunpack.c.l.b16 %v6731
  %v6778 = vunpack.c.l.b16 %v6732
  %v6779 = vunpack.c.l.b16 %v6733
  %v6780 = vunpack.c.l.b16 %v6734
  %v6781 = vunpack.c.l.b16 %v6735
  %v6782 = vunpack.c.l.b16 %v6736
  %v6783 = vrot.slane %v6776, 7
  %v6784 = vsel %vm6560, %v6783, %v6775
  %v6785 = vrot.slane %v6777, 6
  %v6786 = vsel %vm6562, %v6785, %v6784
  %v6787 = vrot.slane %v6778, 5
  %v6788 = vsel %vm6564, %v6787, %v6786
  %v6789 = vrot.slane %v6779, 4
  %v6790 = vsel %vm6566, %v6789, %v6788
  %v6791 = vrot.slane %v6780, 3
  %v6792 = vsel %vm6568, %v6791, %v6790
  %v6793 = vrot.slane %v6781, 2
  %v6794 = vsel %vm6570, %v6793, %v6792
  %v6795 = vrot.slane %v6782, 1
  %v6796 = vsel %vm6572, %v6795, %v6794
  %v6797 = vpack.c.b16 %v6796, %v6796
  %v6815 = vunpack.c.l.b16 %v6737
  %v6816 = vunpack.c.l.b16 %v6738
  %v6817 = vunpack.c.l.b16 %v6739
  %v6818 = vunpack.c.l.b16 %v6740
  %v6819 = vunpack.c.l.b16 %v6741
  %v6820 = vunpack.c.l.b16 %v6742
  %v6821 = vunpack.c.l.b16 %v6743
  %v6822 = vunpack.c.l.b16 %v6744
  %v6823 = vunpack.c.l.b16 %v6745
  %v6824 = vunpack.c.l.b16 %v6746
  %v6825 = vunpack.c.l.b16 %v6747
  %v6826 = vunpack.c.l.b16 %v6748
  %v6827 = vunpack.c.l.b16 %v6749
  %v6828 = vunpack.c.l.b16 %v6750
  %v6829 = vunpack.c.l.b16 %v6751
  %v6830 = vunpack.c.l.b16 %v6752
  %v6831 = vpack.c.b16 %v6816, %v6815
  %v6832 = vpack.c.b16 %v6818, %v6817
  %v6833 = vpack.c.b16 %v6820, %v6819
  %v6834 = vpack.c.b16 %v6822, %v6821
  %v6835 = vpack.c.b16 %v6824, %v6823
  %v6836 = vpack.c.b16 %v6826, %v6825
  %v6837 = vpack.c.b16 %v6828, %v6827
  %v6838 = vpack.c.b16 %v6830, %v6829
  %6847 = vmatprep.subr.bf16.mxu0 0
  %6848 = vmatpush1.bf16.msra.mxu0 %v6831
  %6849 = vmatprep.subr.bf16.mxu0 0
  %6850 = vmatpush1.bf16.msra.mxu0 %v6832
  %6851 = vmatprep.subr.bf16.mxu0 0
  %6852 = vmatpush1.bf16.msra.mxu0 %v6833
  %6853 = vmatprep.subr.bf16.mxu0 0
  %6854 = vmatpush1.bf16.msra.mxu0 %v6834
  %6855 = vmatprep.subr.bf16.mxu0 0
  %6856 = vmatpush1.bf16.msra.mxu0 %v6835
  %6857 = vmatprep.subr.bf16.mxu0 0
  %6858 = vmatpush1.bf16.msra.mxu0 %v6836
  %6859 = vmatprep.subr.bf16.mxu0 0
  %6860 = vmatpush1.bf16.msra.mxu0 %v6837
  %6861 = vmatprep.subr.bf16.mxu0 0
  %6862 = vmatpush1.bf16.msra.mxu0 %v6838
  %6863 = vmatprep.subr.bf16.mxu0 0
  %6864 = vmatpush1.bf16.msra.mxu0 0
  %6865 = vmatprep.subr.bf16.mxu0 0
  %6866 = vmatpush1.bf16.msra.mxu0 0
  %6867 = vmatprep.subr.bf16.mxu0 0
  %6868 = vmatpush1.bf16.msra.mxu0 0
  %6869 = vmatprep.subr.bf16.mxu0 0
  %6870 = vmatpush1.bf16.msra.mxu0 0
  %6871 = vmatprep.subr.bf16.mxu0 0
  %6872 = vmatpush1.bf16.msra.mxu0 0
  %6873 = vmatprep.subr.bf16.mxu0 0
  %6874 = vmatpush1.bf16.msra.mxu0 0
  %6875 = vmatprep.subr.bf16.mxu0 0
  %6876 = vmatpush1.bf16.msra.mxu0 0
  %6877 = vmatprep.subr.bf16.mxu0 0
  %6878 = vmatpush1.bf16.msra.mxu0 0
  %6879 = vmatprep.mubr.bf16.mxu0 0
  %6880 = vmatmul.mubr.bf16.gmra.mrb[0].mxu0 %v6797
  %v6881 = vpop.f32.mrb[0].mxu0
  %v6882 = vadd.f32 %v6766, %v6881
  %v6883 = vpop.f32.mrb[0].mxu0
  %v6884 = vpop.f32.mrb[0].mxu0
  %v6885 = vpop.f32.mrb[0].mxu0
  %6886 = vdwg.mxu0
  %v6887 = vld [vmem:[%s10] sm:$0x1]
  %v6889 = vlaneseq
  %v6890 = vshrl.u32 %v6889, 7
  %v6891 = vsub.s32 0, %v6890
  %v6892 = vrot.slane %v6887, %v6891
  %v6894 = vadd.f32 %v6882, %v6892
  %6895 = vst [vmem:[%s11] sm:$0xff] %v6894
  // Predicated region
  $region46: #{ehr_admissions_forward.1} parent=0 // pred_check
    _
  $region47: #{ehr_admissions_forward.1} parent=0 // pred_check_branch
    %6897 = sbr.rel (0) target = $region49
  $region48: #{ehr_admissions_forward.1} parent=0 // pred_region
    _
  $region49: #{ehr_admissions_forward.1} parent=0 // pred_fallthru
    _
  // Predicated region
  $region50: #{ehr_admissions_forward.1} parent=0 // pred_check
    _
  $region51: #{ehr_admissions_forward.1} parent=0 // pred_check_branch
    %6899 = sbr.rel (0) target = $region53
  $region52: #{ehr_admissions_forward.1} parent=0 // pred_region
    _
  $region53: #{ehr_admissions_forward.1} parent=0 // pred_fallthru
    _

</llo_original>
